<compile_context>
chip_gen: v5e
topology: v5e:2x2
jax: 0.10.0
libtpu: 0.0.40
codegen_flags: <defaults>
</compile_context>

<pallas_src>
import jax
import jax.numpy as jnp
from jax import lax
from jax.experimental import pallas as pl
from jax.experimental.pallas import tpu as pltpu

FC_LANES = 128  # lane-dense padded width of the final logits


def lstm_classifier_kernel(x_ref,      # (T*Bp, Ip)  bf16  time-major, batch/feature padded
                           wih0_ref,   # (Ip, 4H)    bf16  layer 0: W_ih^T (zero-padded rows)
                           b0_ref,     # (1, 4H)     f32   layer 0: b_ih + b_hh
                           wrec_ref,   # (2H, 8H)    bf16  [[Whh0^T, Wih1^T],[0, Whh1^T]]
                           b1_ref,     # (1, 4H)     f32   layer 1: b_ih + b_hh
                           wfc_ref,    # (H, 128)    bf16  fc.weight^T zero-padded
                           bfc_ref,    # (1, 128)    f32   fc.bias zero-padded
                           out_ref,    # (Bp, 128)   f32   padded logits
                           xg0_ref):   # (T*Bp, 4H)  f32   VMEM scratch
    TB = x_ref.shape[0]
    Bp = out_ref.shape[0]
    T = TB // Bp
    H = wrec_ref.shape[0] // 2
    G = 4 * H

    # --- hoisted layer-0 input projection: one well-shaped MXU matmul --------
    xg0_ref[...] = (jnp.dot(x_ref[...], wih0_ref[...],
                            preferred_element_type=jnp.float32)
                    + b0_ref[...])

    wrec = wrec_ref[...]                                   # fused recurrent RHS
    # hoisted bias broadcast (JAX does not CSE broadcast_in_dim inside loops)
    b1b = jnp.broadcast_to(b1_ref[...], (Bp, G))

    def gates_to_hc(gates, c):
        # PyTorch gate order: i, f, g, o  (128-lane aligned slices, H = 128)
        i = jax.nn.sigmoid(gates[:, 0 * H:1 * H])
        f = jax.nn.sigmoid(gates[:, 1 * H:2 * H])
        g = jnp.tanh(gates[:, 2 * H:3 * H])
        o = jax.nn.sigmoid(gates[:, 3 * H:4 * H])
        c_new = f * c + i * g
        h_new = o * jnp.tanh(c_new)
        return h_new, c_new

    zf = jnp.zeros((Bp, H), jnp.float32)
    zb = jnp.zeros((Bp, H), jnp.bfloat16)

    # --- prologue: layer-0 step 0 (h0(-1) = 0 -> no recurrent matmul) --------
    h0_0, c0_0 = gates_to_hc(xg0_ref[pl.ds(0, Bp), :], zf)
    # fused LHS carry: [h0(t-1) | h1(t-2)] in bf16
    h01 = jnp.concatenate([h0_0.astype(jnp.bfloat16), zb], axis=-1)

    # --- skewed steady state: layer-0 step t + layer-1 step t-1 --------------
    # TODO(synk): nn.LSTM inter-layer dropout is train-only; inference
    # semantics (identity) are implemented here.
    def step(t, carry):
        h01, c0, c1 = carry
        row = pl.multiple_of(t * Bp, Bp)
        # single fused recurrent matmul feeding both (independent) gate chains
        g = jnp.dot(h01, wrec, preferred_element_type=jnp.float32)   # (Bp, 8H)
        gates0 = xg0_ref[pl.ds(row, Bp), :] + g[:, :G]                # layer 0, step t
        gates1 = b1b + g[:, G:]                                       # layer 1, step t-1
        h0n, c0n = gates_to_hc(gates0, c0)
        h1n, c1n = gates_to_hc(gates1, c1)
        h01n = jnp.concatenate([h0n.astype(jnp.bfloat16),
                                h1n.astype(jnp.bfloat16)], axis=-1)
        return (h01n, c0n, c1n)

    h01, c0, c1 = lax.fori_loop(1, T, step, (h01, c0_0, zf), unroll=True)

    # --- drain: layer-1 step T-1 ---------------------------------------------
    g1 = jnp.dot(h01, wrec[:, G:], preferred_element_type=jnp.float32)
    h1f, _ = gates_to_hc(b1b + g1, c1)

    # fc(hn[-1]) into a lane-dense (Bp, 128) output
    out_ref[...] = (jnp.dot(h1f.astype(jnp.bfloat16), wfc_ref[...],
                            preferred_element_type=jnp.float32)
                    + bfc_ref[...])


def lstm_classifier_pallas(x_btI, params):
    """x_btI: (B, T, I) float32 (PyTorch batch_first layout). Returns (B, 2) f32."""
    B, T, I = x_btI.shape
    H = params["whh0_t"].shape[0]
    Bp = max(16, ((B + 15) // 16) * 16)      # full bf16 sublane pack
    Ip = ((I + 127) // 128) * 128            # lane-aligned feature dim

    # time-major, batch- and feature-padded, flattened to (T*Bp, Ip), bf16 operands
    x_tbi = jnp.transpose(x_btI, (1, 0, 2))
    x_tbi = jnp.pad(x_tbi, ((0, 0), (0, Bp - B), (0, Ip - I)))
    x2d = x_tbi.reshape(T * Bp, Ip).astype(jnp.bfloat16)

    wih0 = jnp.pad(params["wih0_t"], ((0, Ip - I), (0, 0))).astype(jnp.bfloat16)
    b0 = params["b0"]
    # fused recurrent RHS: [[Whh0^T, Wih1^T], [0, Whh1^T]]  -> (2H, 8H)
    wrec = jnp.concatenate(
        [jnp.concatenate([params["whh0_t"],
                          jnp.zeros((H, 4 * H), jnp.float32)], axis=0),
         jnp.concatenate([params["wih1_t"], params["whh1_t"]], axis=0)],
        axis=1).astype(jnp.bfloat16)
    b1 = params["b1"]
    wfc = jnp.pad(params["wfc_t"],
                  ((0, 0), (0, FC_LANES - params["wfc_t"].shape[1]))
                  ).astype(jnp.bfloat16)                          # (H, 128)
    bfc = jnp.pad(params["bfc"],
                  ((0, 0), (0, FC_LANES - params["bfc"].shape[1])))  # (1, 128)

    vmem = pl.BlockSpec(memory_space=pltpu.MemorySpace.VMEM)
    out = pl.pallas_call(
        lstm_classifier_kernel,
        out_shape=jax.ShapeDtypeStruct((Bp, FC_LANES), jnp.float32),
        in_specs=[vmem] * 7,
        out_specs=vmem,
        scratch_shapes=[pltpu.VMEM((T * Bp, 4 * H), jnp.float32)],
        compiler_params=pltpu.CompilerParams(vmem_limit_bytes=32 * 1024 * 1024),
    )(x2d, wih0, b0, wrec, b1, wfc, bfc)
    return out[:B, :2]


def init_params(key, input_size, hidden_size):
    """Deterministic init mimicking PyTorch's U(-1/sqrt(H), 1/sqrt(H))."""
    H = hidden_size
    bound = 1.0 / jnp.sqrt(jnp.float32(H))
    ks = jax.random.split(key, 10)

    def u(k, shape):
        return jax.random.uniform(k, shape, jnp.float32, -bound, bound)

    wih0 = u(ks[0], (4 * H, input_size))
    whh0 = u(ks[1], (4 * H, H))
    bih0 = u(ks[2], (4 * H,))
    bhh0 = u(ks[3], (4 * H,))
    wih1 = u(ks[4], (4 * H, H))
    whh1 = u(ks[5], (4 * H, H))
    bih1 = u(ks[6], (4 * H,))
    bhh1 = u(ks[7], (4 * H,))
    wfc = u(ks[8], (2, H))
    bfc = u(ks[9], (2,))

    return {
        "wih0_t": wih0.T, "whh0_t": whh0.T, "b0": (bih0 + bhh0)[None, :],
        "wih1_t": wih1.T, "whh1_t": whh1.T, "b1": (bih1 + bhh1)[None, :],
        "wfc_t": wfc.T, "bfc": bfc[None, :],
    }


def lstm_classifier_ref(x_btI, params):
    """Pure-JAX f32 reference of the same math (for a sanity check)."""
    B, T, _ = x_btI.shape
    H = params["whh0_t"].shape[0]

    def cell(x_t, h, c, wih, whh, b):
        gates = x_t @ wih + h @ whh + b
        i = jax.nn.sigmoid(gates[:, 0 * H:1 * H])
        f = jax.nn.sigmoid(gates[:, 1 * H:2 * H])
        g = jnp.tanh(gates[:, 2 * H:3 * H])
        o = jax.nn.sigmoid(gates[:, 3 * H:4 * H])
        c_new = f * c + i * g
        return o * jnp.tanh(c_new), c_new

    def step(carry, x_t):
        h0, c0, h1, c1 = carry
        h0, c0 = cell(x_t, h0, c0, params["wih0_t"], params["whh0_t"], params["b0"])
        h1, c1 = cell(h0, h1, c1, params["wih1_t"], params["whh1_t"], params["b1"])
        return (h0, c0, h1, c1), None

    z = jnp.zeros((B, H), jnp.float32)
    (h0, c0, h1, c1), _ = lax.scan(step, (z, z, z, z),
                                   jnp.transpose(x_btI, (1, 0, 2)))
    return h1 @ params["wfc_t"] + params["bfc"]


if __name__ == "__main__":
    # Module defaults: input_size=50, hidden_size=128, num_layers=2; small B/T.
    B, T, I, H = 2, 8, 50, 128
    key = jax.random.PRNGKey(0)
    k_x, k_p = jax.random.split(key)
    x = jax.random.normal(k_x, (B, T, I), jnp.float32)
    params = init_params(k_p, input_size=I, hidden_size=H)

    logits = jax.block_until_ready(lstm_classifier_pallas(x, params))
    ref = lstm_classifier_ref(x, params)

    assert logits.shape == (B, 2)
    # bf16 MXU operands (f32 accumulation/state) -> slightly looser tolerance.
    assert jnp.allclose(logits, ref, atol=5e-2, rtol=5e-2), (logits, ref)
    print("KERNEL_OK")
</pallas_src>

<mosaic_0001>
module attributes {stable_mosaic.version = 11 : i64} {
  func.func @lstm_classifier_kernel(%arg0: memref<128x128xbf16, #tpu.memory_space<vmem>>, %arg1: memref<128x512xbf16, #tpu.memory_space<vmem>>, %arg2: memref<1x512xf32, #tpu.memory_space<vmem>>, %arg3: memref<256x1024xbf16, #tpu.memory_space<vmem>>, %arg4: memref<1x512xf32, #tpu.memory_space<vmem>>, %arg5: memref<128x128xbf16, #tpu.memory_space<vmem>>, %arg6: memref<1x128xf32, #tpu.memory_space<vmem>>, %arg7: memref<16x128xf32, #tpu.memory_space<vmem>>, %arg8: memref<128x512xf32, #tpu.memory_space<vmem>>) attributes {dimension_semantics = [], scalar_prefetch = 0 : i64, scratch_operands = 1 : i64, tpu.core_type = #tpu.core_type<tc>} {
    %c0 = arith.constant 0 : index
    %c0_0 = arith.constant 0 : index
    %0 = vector.load %arg0[%c0, %c0_0] : memref<128x128xbf16, #tpu.memory_space<vmem>>, vector<128x128xbf16>
    %c0_1 = arith.constant 0 : index
    %c0_2 = arith.constant 0 : index
    %1 = vector.load %arg1[%c0_1, %c0_2] : memref<128x512xbf16, #tpu.memory_space<vmem>>, vector<128x512xbf16>
    %cst = arith.constant dense<0.000000e+00> : vector<128x512xf32>
    %2 = tpu.matmul %0, %1, %cst {dimension_numbers = #tpu.dot_dimension_numbers<[1], [0], [0], [1], [0, 0, 1, 1], [], []>} : vector<128x128xbf16>, vector<128x512xbf16>, vector<128x512xf32> -> vector<128x512xf32>
    %c0_3 = arith.constant 0 : index
    %c0_4 = arith.constant 0 : index
    %3 = vector.load %arg2[%c0_3, %c0_4] : memref<1x512xf32, #tpu.memory_space<vmem>>, vector<1x512xf32>
    %4 = vector.broadcast %3 : vector<1x512xf32> to vector<128x512xf32>
    %5 = arith.addf %2, %4 : vector<128x512xf32>
    %c0_5 = arith.constant 0 : index
    %c0_6 = arith.constant 0 : index
    %6 = vector.load %arg8[%c0_5, %c0_6] : memref<128x512xf32, #tpu.memory_space<vmem>>, vector<128x512xf32>
    tpu.vector_store %arg8[%c0_5, %c0_6], %5 {strides = array<i32>} : memref<128x512xf32, #tpu.memory_space<vmem>>, vector<128x512xf32>,
    %c0_7 = arith.constant 0 : index
    %c0_8 = arith.constant 0 : index
    %7 = vector.load %arg3[%c0_7, %c0_8] : memref<256x1024xbf16, #tpu.memory_space<vmem>>, vector<256x1024xbf16>
    %c0_9 = arith.constant 0 : index
    %c0_10 = arith.constant 0 : index
    %8 = vector.load %arg4[%c0_9, %c0_10] : memref<1x512xf32, #tpu.memory_space<vmem>>, vector<1x512xf32>
    %9 = vector.shape_cast %8 : vector<1x512xf32> to vector<1x512xf32>
    %10 = vector.broadcast %9 : vector<1x512xf32> to vector<16x512xf32>
    %cst_11 = arith.constant 0.000000e+00 : f32
    %11 = vector.broadcast %cst_11 : f32 to vector<16x128xf32>
    %cst_12 = arith.constant 0.000000e+00 : bf16
    %12 = vector.broadcast %cst_12 : bf16 to vector<16x128xbf16>
    %c0_13 = arith.constant 0 : index
    %c0_14 = arith.constant 0 : index
    %13 = vector.load %arg8[%c0_13, %c0_14] : memref<128x512xf32, #tpu.memory_space<vmem>>, vector<16x512xf32>
    %14 = vector.extract_strided_slice %13 {offsets = [0, 0], sizes = [16, 128], strides = [1, 1]} : vector<16x512xf32> to vector<16x128xf32>
    %15 = arith.negf %14 : vector<16x128xf32>
    %16 = math.exp %15 : vector<16x128xf32>
    %cst_15 = arith.constant 1.000000e+00 : f32
    %17 = vector.broadcast %cst_15 : f32 to vector<16x128xf32>
    %18 = arith.addf %17, %16 : vector<16x128xf32>
    %19 = arith.divf %17, %18 : vector<16x128xf32>
    %20 = vector.extract_strided_slice %13 {offsets = [0, 128], sizes = [16, 128], strides = [1, 1]} : vector<16x512xf32> to vector<16x128xf32>
    %21 = arith.negf %20 : vector<16x128xf32>
    %22 = math.exp %21 : vector<16x128xf32>
    %cst_16 = arith.constant 1.000000e+00 : f32
    %23 = vector.broadcast %cst_16 : f32 to vector<16x128xf32>
    %24 = arith.addf %23, %22 : vector<16x128xf32>
    %25 = arith.divf %23, %24 : vector<16x128xf32>
    %26 = vector.extract_strided_slice %13 {offsets = [0, 256], sizes = [16, 128], strides = [1, 1]} : vector<16x512xf32> to vector<16x128xf32>
    %27 = math.tanh %26 : vector<16x128xf32>
    %28 = vector.extract_strided_slice %13 {offsets = [0, 384], sizes = [16, 128], strides = [1, 1]} : vector<16x512xf32> to vector<16x128xf32>
    %29 = arith.negf %28 : vector<16x128xf32>
    %30 = math.exp %29 : vector<16x128xf32>
    %cst_17 = arith.constant 1.000000e+00 : f32
    %31 = vector.broadcast %cst_17 : f32 to vector<16x128xf32>
    %32 = arith.addf %31, %30 : vector<16x128xf32>
    %33 = arith.divf %31, %32 : vector<16x128xf32>
    %34 = arith.mulf %25, %11 : vector<16x128xf32>
    %35 = arith.mulf %19, %27 : vector<16x128xf32>
    %36 = arith.addf %34, %35 : vector<16x128xf32>
    %37 = math.tanh %36 : vector<16x128xf32>
    %38 = arith.mulf %33, %37 : vector<16x128xf32>
    %39 = arith.truncf %38 : vector<16x128xf32> to vector<16x128xbf16>
    %40 = tpu.concatenate %39, %12 in 1 : vector<16x128xbf16>, vector<16x128xbf16> -> vector<16x256xbf16>
    %c1_i32 = arith.constant 1 : i32
    %c16_i32 = arith.constant 16 : i32
    %41 = arith.muli %c1_i32, %c16_i32 : i32
    %42 = tpu.assume_multiple %41, 16 : i32
    %cst_18 = arith.constant dense<0.000000e+00> : vector<16x1024xf32>
    %43 = tpu.matmul %40, %7, %cst_18 {dimension_numbers = #tpu.dot_dimension_numbers<[1], [0], [0], [1], [0, 0, 1, 1], [], []>} : vector<16x256xbf16>, vector<256x1024xbf16>, vector<16x1024xf32> -> vector<16x1024xf32>
    %44 = arith.index_cast %42 : i32 to index
    %c0_19 = arith.constant 0 : index
    %45 = vector.load %arg8[%44, %c0_19] : memref<128x512xf32, #tpu.memory_space<vmem>>, vector<16x512xf32>
    %46 = vector.extract_strided_slice %43 {offsets = [0, 0], sizes = [16, 512], strides = [1, 1]} : vector<16x1024xf32> to vector<16x512xf32>
    %47 = arith.addf %45, %46 : vector<16x512xf32>
    %48 = vector.extract_strided_slice %43 {offsets = [0, 512], sizes = [16, 512], strides = [1, 1]} : vector<16x1024xf32> to vector<16x512xf32>
    %49 = arith.addf %10, %48 : vector<16x512xf32>
    %50 = vector.extract_strided_slice %47 {offsets = [0, 0], sizes = [16, 128], strides = [1, 1]} : vector<16x512xf32> to vector<16x128xf32>
    %51 = arith.negf %50 : vector<16x128xf32>
    %52 = math.exp %51 : vector<16x128xf32>
    %cst_20 = arith.constant 1.000000e+00 : f32
    %53 = vector.broadcast %cst_20 : f32 to vector<16x128xf32>
    %54 = arith.addf %53, %52 : vector<16x128xf32>
    %55 = arith.divf %53, %54 : vector<16x128xf32>
    %56 = vector.extract_strided_slice %47 {offsets = [0, 128], sizes = [16, 128], strides = [1, 1]} : vector<16x512xf32> to vector<16x128xf32>
    %57 = arith.negf %56 : vector<16x128xf32>
    %58 = math.exp %57 : vector<16x128xf32>
    %cst_21 = arith.constant 1.000000e+00 : f32
    %59 = vector.broadcast %cst_21 : f32 to vector<16x128xf32>
    %60 = arith.addf %59, %58 : vector<16x128xf32>
    %61 = arith.divf %59, %60 : vector<16x128xf32>
    %62 = vector.extract_strided_slice %47 {offsets = [0, 256], sizes = [16, 128], strides = [1, 1]} : vector<16x512xf32> to vector<16x128xf32>
    %63 = math.tanh %62 : vector<16x128xf32>
    %64 = vector.extract_strided_slice %47 {offsets = [0, 384], sizes = [16, 128], strides = [1, 1]} : vector<16x512xf32> to vector<16x128xf32>
    %65 = arith.negf %64 : vector<16x128xf32>
    %66 = math.exp %65 : vector<16x128xf32>
    %cst_22 = arith.constant 1.000000e+00 : f32
    %67 = vector.broadcast %cst_22 : f32 to vector<16x128xf32>
    %68 = arith.addf %67, %66 : vector<16x128xf32>
    %69 = arith.divf %67, %68 : vector<16x128xf32>
    %70 = arith.mulf %61, %36 : vector<16x128xf32>
    %71 = arith.mulf %55, %63 : vector<16x128xf32>
    %72 = arith.addf %70, %71 : vector<16x128xf32>
    %73 = math.tanh %72 : vector<16x128xf32>
    %74 = arith.mulf %69, %73 : vector<16x128xf32>
    %75 = vector.extract_strided_slice %49 {offsets = [0, 0], sizes = [16, 128], strides = [1, 1]} : vector<16x512xf32> to vector<16x128xf32>
    %76 = arith.negf %75 : vector<16x128xf32>
    %77 = math.exp %76 : vector<16x128xf32>
    %cst_23 = arith.constant 1.000000e+00 : f32
    %78 = vector.broadcast %cst_23 : f32 to vector<16x128xf32>
    %79 = arith.addf %78, %77 : vector<16x128xf32>
    %80 = arith.divf %78, %79 : vector<16x128xf32>
    %81 = vector.extract_strided_slice %49 {offsets = [0, 128], sizes = [16, 128], strides = [1, 1]} : vector<16x512xf32> to vector<16x128xf32>
    %82 = arith.negf %81 : vector<16x128xf32>
    %83 = math.exp %82 : vector<16x128xf32>
    %cst_24 = arith.constant 1.000000e+00 : f32
    %84 = vector.broadcast %cst_24 : f32 to vector<16x128xf32>
    %85 = arith.addf %84, %83 : vector<16x128xf32>
    %86 = arith.divf %84, %85 : vector<16x128xf32>
    %87 = vector.extract_strided_slice %49 {offsets = [0, 256], sizes = [16, 128], strides = [1, 1]} : vector<16x512xf32> to vector<16x128xf32>
    %88 = math.tanh %87 : vector<16x128xf32>
    %89 = vector.extract_strided_slice %49 {offsets = [0, 384], sizes = [16, 128], strides = [1, 1]} : vector<16x512xf32> to vector<16x128xf32>
    %90 = arith.negf %89 : vector<16x128xf32>
    %91 = math.exp %90 : vector<16x128xf32>
    %cst_25 = arith.constant 1.000000e+00 : f32
    %92 = vector.broadcast %cst_25 : f32 to vector<16x128xf32>
    %93 = arith.addf %92, %91 : vector<16x128xf32>
    %94 = arith.divf %92, %93 : vector<16x128xf32>
    %95 = arith.mulf %86, %11 : vector<16x128xf32>
    %96 = arith.mulf %80, %88 : vector<16x128xf32>
    %97 = arith.addf %95, %96 : vector<16x128xf32>
    %98 = math.tanh %97 : vector<16x128xf32>
    %99 = arith.mulf %94, %98 : vector<16x128xf32>
    %100 = arith.truncf %74 : vector<16x128xf32> to vector<16x128xbf16>
    %101 = arith.truncf %99 : vector<16x128xf32> to vector<16x128xbf16>
    %102 = tpu.concatenate %100, %101 in 1 : vector<16x128xbf16>, vector<16x128xbf16> -> vector<16x256xbf16>
    %c2_i32 = arith.constant 2 : i32
    %c16_i32_26 = arith.constant 16 : i32
    %103 = arith.muli %c2_i32, %c16_i32_26 : i32
    %104 = tpu.assume_multiple %103, 16 : i32
    %cst_27 = arith.constant dense<0.000000e+00> : vector<16x1024xf32>
    %105 = tpu.matmul %102, %7, %cst_27 {dimension_numbers = #tpu.dot_dimension_numbers<[1], [0], [0], [1], [0, 0, 1, 1], [], []>} : vector<16x256xbf16>, vector<256x1024xbf16>, vector<16x1024xf32> -> vector<16x1024xf32>
    %106 = arith.index_cast %104 : i32 to index
    %c0_28 = arith.constant 0 : index
    %107 = vector.load %arg8[%106, %c0_28] : memref<128x512xf32, #tpu.memory_space<vmem>>, vector<16x512xf32>
    %108 = vector.extract_strided_slice %105 {offsets = [0, 0], sizes = [16, 512], strides = [1, 1]} : vector<16x1024xf32> to vector<16x512xf32>
    %109 = arith.addf %107, %108 : vector<16x512xf32>
    %110 = vector.extract_strided_slice %105 {offsets = [0, 512], sizes = [16, 512], strides = [1, 1]} : vector<16x1024xf32> to vector<16x512xf32>
    %111 = arith.addf %10, %110 : vector<16x512xf32>
    %112 = vector.extract_strided_slice %109 {offsets = [0, 0], sizes = [16, 128], strides = [1, 1]} : vector<16x512xf32> to vector<16x128xf32>
    %113 = arith.negf %112 : vector<16x128xf32>
    %114 = math.exp %113 : vector<16x128xf32>
    %cst_29 = arith.constant 1.000000e+00 : f32
    %115 = vector.broadcast %cst_29 : f32 to vector<16x128xf32>
    %116 = arith.addf %115, %114 : vector<16x128xf32>
    %117 = arith.divf %115, %116 : vector<16x128xf32>
    %118 = vector.extract_strided_slice %109 {offsets = [0, 128], sizes = [16, 128], strides = [1, 1]} : vector<16x512xf32> to vector<16x128xf32>
    %119 = arith.negf %118 : vector<16x128xf32>
    %120 = math.exp %119 : vector<16x128xf32>
    %cst_30 = arith.constant 1.000000e+00 : f32
    %121 = vector.broadcast %cst_30 : f32 to vector<16x128xf32>
    %122 = arith.addf %121, %120 : vector<16x128xf32>
    %123 = arith.divf %121, %122 : vector<16x128xf32>
    %124 = vector.extract_strided_slice %109 {offsets = [0, 256], sizes = [16, 128], strides = [1, 1]} : vector<16x512xf32> to vector<16x128xf32>
    %125 = math.tanh %124 : vector<16x128xf32>
    %126 = vector.extract_strided_slice %109 {offsets = [0, 384], sizes = [16, 128], strides = [1, 1]} : vector<16x512xf32> to vector<16x128xf32>
    %127 = arith.negf %126 : vector<16x128xf32>
    %128 = math.exp %127 : vector<16x128xf32>
    %cst_31 = arith.constant 1.000000e+00 : f32
    %129 = vector.broadcast %cst_31 : f32 to vector<16x128xf32>
    %130 = arith.addf %129, %128 : vector<16x128xf32>
    %131 = arith.divf %129, %130 : vector<16x128xf32>
    %132 = arith.mulf %123, %72 : vector<16x128xf32>
    %133 = arith.mulf %117, %125 : vector<16x128xf32>
    %134 = arith.addf %132, %133 : vector<16x128xf32>
    %135 = math.tanh %134 : vector<16x128xf32>
    %136 = arith.mulf %131, %135 : vector<16x128xf32>
    %137 = vector.extract_strided_slice %111 {offsets = [0, 0], sizes = [16, 128], strides = [1, 1]} : vector<16x512xf32> to vector<16x128xf32>
    %138 = arith.negf %137 : vector<16x128xf32>
    %139 = math.exp %138 : vector<16x128xf32>
    %cst_32 = arith.constant 1.000000e+00 : f32
    %140 = vector.broadcast %cst_32 : f32 to vector<16x128xf32>
    %141 = arith.addf %140, %139 : vector<16x128xf32>
    %142 = arith.divf %140, %141 : vector<16x128xf32>
    %143 = vector.extract_strided_slice %111 {offsets = [0, 128], sizes = [16, 128], strides = [1, 1]} : vector<16x512xf32> to vector<16x128xf32>
    %144 = arith.negf %143 : vector<16x128xf32>
    %145 = math.exp %144 : vector<16x128xf32>
    %cst_33 = arith.constant 1.000000e+00 : f32
    %146 = vector.broadcast %cst_33 : f32 to vector<16x128xf32>
    %147 = arith.addf %146, %145 : vector<16x128xf32>
    %148 = arith.divf %146, %147 : vector<16x128xf32>
    %149 = vector.extract_strided_slice %111 {offsets = [0, 256], sizes = [16, 128], strides = [1, 1]} : vector<16x512xf32> to vector<16x128xf32>
    %150 = math.tanh %149 : vector<16x128xf32>
    %151 = vector.extract_strided_slice %111 {offsets = [0, 384], sizes = [16, 128], strides = [1, 1]} : vector<16x512xf32> to vector<16x128xf32>
    %152 = arith.negf %151 : vector<16x128xf32>
    %153 = math.exp %152 : vector<16x128xf32>
    %cst_34 = arith.constant 1.000000e+00 : f32
    %154 = vector.broadcast %cst_34 : f32 to vector<16x128xf32>
    %155 = arith.addf %154, %153 : vector<16x128xf32>
    %156 = arith.divf %154, %155 : vector<16x128xf32>
    %157 = arith.mulf %148, %97 : vector<16x128xf32>
    %158 = arith.mulf %142, %150 : vector<16x128xf32>
    %159 = arith.addf %157, %158 : vector<16x128xf32>
    %160 = math.tanh %159 : vector<16x128xf32>
    %161 = arith.mulf %156, %160 : vector<16x128xf32>
    %162 = arith.truncf %136 : vector<16x128xf32> to vector<16x128xbf16>
    %163 = arith.truncf %161 : vector<16x128xf32> to vector<16x128xbf16>
    %164 = tpu.concatenate %162, %163 in 1 : vector<16x128xbf16>, vector<16x128xbf16> -> vector<16x256xbf16>
    %c3_i32 = arith.constant 3 : i32
    %c16_i32_35 = arith.constant 16 : i32
    %165 = arith.muli %c3_i32, %c16_i32_35 : i32
    %166 = tpu.assume_multiple %165, 16 : i32
    %cst_36 = arith.constant dense<0.000000e+00> : vector<16x1024xf32>
    %167 = tpu.matmul %164, %7, %cst_36 {dimension_numbers = #tpu.dot_dimension_numbers<[1], [0], [0], [1], [0, 0, 1, 1], [], []>} : vector<16x256xbf16>, vector<256x1024xbf16>, vector<16x1024xf32> -> vector<16x1024xf32>
    %168 = arith.index_cast %166 : i32 to index
    %c0_37 = arith.constant 0 : index
    %169 = vector.load %arg8[%168, %c0_37] : memref<128x512xf32, #tpu.memory_space<vmem>>, vector<16x512xf32>
    %170 = vector.extract_strided_slice %167 {offsets = [0, 0], sizes = [16, 512], strides = [1, 1]} : vector<16x1024xf32> to vector<16x512xf32>
    %171 = arith.addf %169, %170 : vector<16x512xf32>
    %172 = vector.extract_strided_slice %167 {offsets = [0, 512], sizes = [16, 512], strides = [1, 1]} : vector<16x1024xf32> to vector<16x512xf32>
    %173 = arith.addf %10, %172 : vector<16x512xf32>
    %174 = vector.extract_strided_slice %171 {offsets = [0, 0], sizes = [16, 128], strides = [1, 1]} : vector<16x512xf32> to vector<16x128xf32>
    %175 = arith.negf %174 : vector<16x128xf32>
    %176 = math.exp %175 : vector<16x128xf32>
    %cst_38 = arith.constant 1.000000e+00 : f32
    %177 = vector.broadcast %cst_38 : f32 to vector<16x128xf32>
    %178 = arith.addf %177, %176 : vector<16x128xf32>
    %179 = arith.divf %177, %178 : vector<16x128xf32>
    %180 = vector.extract_strided_slice %171 {offsets = [0, 128], sizes = [16, 128], strides = [1, 1]} : vector<16x512xf32> to vector<16x128xf32>
    %181 = arith.negf %180 : vector<16x128xf32>
    %182 = math.exp %181 : vector<16x128xf32>
    %cst_39 = arith.constant 1.000000e+00 : f32
    %183 = vector.broadcast %cst_39 : f32 to vector<16x128xf32>
    %184 = arith.addf %183, %182 : vector<16x128xf32>
    %185 = arith.divf %183, %184 : vector<16x128xf32>
    %186 = vector.extract_strided_slice %171 {offsets = [0, 256], sizes = [16, 128], strides = [1, 1]} : vector<16x512xf32> to vector<16x128xf32>
    %187 = math.tanh %186 : vector<16x128xf32>
    %188 = vector.extract_strided_slice %171 {offsets = [0, 384], sizes = [16, 128], strides = [1, 1]} : vector<16x512xf32> to vector<16x128xf32>
    %189 = arith.negf %188 : vector<16x128xf32>
    %190 = math.exp %189 : vector<16x128xf32>
    %cst_40 = arith.constant 1.000000e+00 : f32
    %191 = vector.broadcast %cst_40 : f32 to vector<16x128xf32>
    %192 = arith.addf %191, %190 : vector<16x128xf32>
    %193 = arith.divf %191, %192 : vector<16x128xf32>
    %194 = arith.mulf %185, %134 : vector<16x128xf32>
    %195 = arith.mulf %179, %187 : vector<16x128xf32>
    %196 = arith.addf %194, %195 : vector<16x128xf32>
    %197 = math.tanh %196 : vector<16x128xf32>
    %198 = arith.mulf %193, %197 : vector<16x128xf32>
    %199 = vector.extract_strided_slice %173 {offsets = [0, 0], sizes = [16, 128], strides = [1, 1]} : vector<16x512xf32> to vector<16x128xf32>
    %200 = arith.negf %199 : vector<16x128xf32>
    %201 = math.exp %200 : vector<16x128xf32>
    %cst_41 = arith.constant 1.000000e+00 : f32
    %202 = vector.broadcast %cst_41 : f32 to vector<16x128xf32>
    %203 = arith.addf %202, %201 : vector<16x128xf32>
    %204 = arith.divf %202, %203 : vector<16x128xf32>
    %205 = vector.extract_strided_slice %173 {offsets = [0, 128], sizes = [16, 128], strides = [1, 1]} : vector<16x512xf32> to vector<16x128xf32>
    %206 = arith.negf %205 : vector<16x128xf32>
    %207 = math.exp %206 : vector<16x128xf32>
    %cst_42 = arith.constant 1.000000e+00 : f32
    %208 = vector.broadcast %cst_42 : f32 to vector<16x128xf32>
    %209 = arith.addf %208, %207 : vector<16x128xf32>
    %210 = arith.divf %208, %209 : vector<16x128xf32>
    %211 = vector.extract_strided_slice %173 {offsets = [0, 256], sizes = [16, 128], strides = [1, 1]} : vector<16x512xf32> to vector<16x128xf32>
    %212 = math.tanh %211 : vector<16x128xf32>
    %213 = vector.extract_strided_slice %173 {offsets = [0, 384], sizes = [16, 128], strides = [1, 1]} : vector<16x512xf32> to vector<16x128xf32>
    %214 = arith.negf %213 : vector<16x128xf32>
    %215 = math.exp %214 : vector<16x128xf32>
    %cst_43 = arith.constant 1.000000e+00 : f32
    %216 = vector.broadcast %cst_43 : f32 to vector<16x128xf32>
    %217 = arith.addf %216, %215 : vector<16x128xf32>
    %218 = arith.divf %216, %217 : vector<16x128xf32>
    %219 = arith.mulf %210, %159 : vector<16x128xf32>
    %220 = arith.mulf %204, %212 : vector<16x128xf32>
    %221 = arith.addf %219, %220 : vector<16x128xf32>
    %222 = math.tanh %221 : vector<16x128xf32>
    %223 = arith.mulf %218, %222 : vector<16x128xf32>
    %224 = arith.truncf %198 : vector<16x128xf32> to vector<16x128xbf16>
    %225 = arith.truncf %223 : vector<16x128xf32> to vector<16x128xbf16>
    %226 = tpu.concatenate %224, %225 in 1 : vector<16x128xbf16>, vector<16x128xbf16> -> vector<16x256xbf16>
    %c4_i32 = arith.constant 4 : i32
    %c16_i32_44 = arith.constant 16 : i32
    %227 = arith.muli %c4_i32, %c16_i32_44 : i32
    %228 = tpu.assume_multiple %227, 16 : i32
    %cst_45 = arith.constant dense<0.000000e+00> : vector<16x1024xf32>
    %229 = tpu.matmul %226, %7, %cst_45 {dimension_numbers = #tpu.dot_dimension_numbers<[1], [0], [0], [1], [0, 0, 1, 1], [], []>} : vector<16x256xbf16>, vector<256x1024xbf16>, vector<16x1024xf32> -> vector<16x1024xf32>
    %230 = arith.index_cast %228 : i32 to index
    %c0_46 = arith.constant 0 : index
    %231 = vector.load %arg8[%230, %c0_46] : memref<128x512xf32, #tpu.memory_space<vmem>>, vector<16x512xf32>
    %232 = vector.extract_strided_slice %229 {offsets = [0, 0], sizes = [16, 512], strides = [1, 1]} : vector<16x1024xf32> to vector<16x512xf32>
    %233 = arith.addf %231, %232 : vector<16x512xf32>
    %234 = vector.extract_strided_slice %229 {offsets = [0, 512], sizes = [16, 512], strides = [1, 1]} : vector<16x1024xf32> to vector<16x512xf32>
    %235 = arith.addf %10, %234 : vector<16x512xf32>
    %236 = vector.extract_strided_slice %233 {offsets = [0, 0], sizes = [16, 128], strides = [1, 1]} : vector<16x512xf32> to vector<16x128xf32>
    %237 = arith.negf %236 : vector<16x128xf32>
    %238 = math.exp %237 : vector<16x128xf32>
    %cst_47 = arith.constant 1.000000e+00 : f32
    %239 = vector.broadcast %cst_47 : f32 to vector<16x128xf32>
    %240 = arith.addf %239, %238 : vector<16x128xf32>
    %241 = arith.divf %239, %240 : vector<16x128xf32>
    %242 = vector.extract_strided_slice %233 {offsets = [0, 128], sizes = [16, 128], strides = [1, 1]} : vector<16x512xf32> to vector<16x128xf32>
    %243 = arith.negf %242 : vector<16x128xf32>
    %244 = math.exp %243 : vector<16x128xf32>
    %cst_48 = arith.constant 1.000000e+00 : f32
    %245 = vector.broadcast %cst_48 : f32 to vector<16x128xf32>
    %246 = arith.addf %245, %244 : vector<16x128xf32>
    %247 = arith.divf %245, %246 : vector<16x128xf32>
    %248 = vector.extract_strided_slice %233 {offsets = [0, 256], sizes = [16, 128], strides = [1, 1]} : vector<16x512xf32> to vector<16x128xf32>
    %249 = math.tanh %248 : vector<16x128xf32>
    %250 = vector.extract_strided_slice %233 {offsets = [0, 384], sizes = [16, 128], strides = [1, 1]} : vector<16x512xf32> to vector<16x128xf32>
    %251 = arith.negf %250 : vector<16x128xf32>
    %252 = math.exp %251 : vector<16x128xf32>
    %cst_49 = arith.constant 1.000000e+00 : f32
    %253 = vector.broadcast %cst_49 : f32 to vector<16x128xf32>
    %254 = arith.addf %253, %252 : vector<16x128xf32>
    %255 = arith.divf %253, %254 : vector<16x128xf32>
    %256 = arith.mulf %247, %196 : vector<16x128xf32>
    %257 = arith.mulf %241, %249 : vector<16x128xf32>
    %258 = arith.addf %256, %257 : vector<16x128xf32>
    %259 = math.tanh %258 : vector<16x128xf32>
    %260 = arith.mulf %255, %259 : vector<16x128xf32>
    %261 = vector.extract_strided_slice %235 {offsets = [0, 0], sizes = [16, 128], strides = [1, 1]} : vector<16x512xf32> to vector<16x128xf32>
    %262 = arith.negf %261 : vector<16x128xf32>
    %263 = math.exp %262 : vector<16x128xf32>
    %cst_50 = arith.constant 1.000000e+00 : f32
    %264 = vector.broadcast %cst_50 : f32 to vector<16x128xf32>
    %265 = arith.addf %264, %263 : vector<16x128xf32>
    %266 = arith.divf %264, %265 : vector<16x128xf32>
    %267 = vector.extract_strided_slice %235 {offsets = [0, 128], sizes = [16, 128], strides = [1, 1]} : vector<16x512xf32> to vector<16x128xf32>
    %268 = arith.negf %267 : vector<16x128xf32>
    %269 = math.exp %268 : vector<16x128xf32>
    %cst_51 = arith.constant 1.000000e+00 : f32
    %270 = vector.broadcast %cst_51 : f32 to vector<16x128xf32>
    %271 = arith.addf %270, %269 : vector<16x128xf32>
    %272 = arith.divf %270, %271 : vector<16x128xf32>
    %273 = vector.extract_strided_slice %235 {offsets = [0, 256], sizes = [16, 128], strides = [1, 1]} : vector<16x512xf32> to vector<16x128xf32>
    %274 = math.tanh %273 : vector<16x128xf32>
    %275 = vector.extract_strided_slice %235 {offsets = [0, 384], sizes = [16, 128], strides = [1, 1]} : vector<16x512xf32> to vector<16x128xf32>
    %276 = arith.negf %275 : vector<16x128xf32>
    %277 = math.exp %276 : vector<16x128xf32>
    %cst_52 = arith.constant 1.000000e+00 : f32
    %278 = vector.broadcast %cst_52 : f32 to vector<16x128xf32>
    %279 = arith.addf %278, %277 : vector<16x128xf32>
    %280 = arith.divf %278, %279 : vector<16x128xf32>
    %281 = arith.mulf %272, %221 : vector<16x128xf32>
    %282 = arith.mulf %266, %274 : vector<16x128xf32>
    %283 = arith.addf %281, %282 : vector<16x128xf32>
    %284 = math.tanh %283 : vector<16x128xf32>
    %285 = arith.mulf %280, %284 : vector<16x128xf32>
    %286 = arith.truncf %260 : vector<16x128xf32> to vector<16x128xbf16>
    %287 = arith.truncf %285 : vector<16x128xf32> to vector<16x128xbf16>
    %288 = tpu.concatenate %286, %287 in 1 : vector<16x128xbf16>, vector<16x128xbf16> -> vector<16x256xbf16>
    %c5_i32 = arith.constant 5 : i32
    %c16_i32_53 = arith.constant 16 : i32
    %289 = arith.muli %c5_i32, %c16_i32_53 : i32
    %290 = tpu.assume_multiple %289, 16 : i32
    %cst_54 = arith.constant dense<0.000000e+00> : vector<16x1024xf32>
    %291 = tpu.matmul %288, %7, %cst_54 {dimension_numbers = #tpu.dot_dimension_numbers<[1], [0], [0], [1], [0, 0, 1, 1], [], []>} : vector<16x256xbf16>, vector<256x1024xbf16>, vector<16x1024xf32> -> vector<16x1024xf32>
    %292 = arith.index_cast %290 : i32 to index
    %c0_55 = arith.constant 0 : index
    %293 = vector.load %arg8[%292, %c0_55] : memref<128x512xf32, #tpu.memory_space<vmem>>, vector<16x512xf32>
    %294 = vector.extract_strided_slice %291 {offsets = [0, 0], sizes = [16, 512], strides = [1, 1]} : vector<16x1024xf32> to vector<16x512xf32>
    %295 = arith.addf %293, %294 : vector<16x512xf32>
    %296 = vector.extract_strided_slice %291 {offsets = [0, 512], sizes = [16, 512], strides = [1, 1]} : vector<16x1024xf32> to vector<16x512xf32>
    %297 = arith.addf %10, %296 : vector<16x512xf32>
    %298 = vector.extract_strided_slice %295 {offsets = [0, 0], sizes = [16, 128], strides = [1, 1]} : vector<16x512xf32> to vector<16x128xf32>
    %299 = arith.negf %298 : vector<16x128xf32>
    %300 = math.exp %299 : vector<16x128xf32>
    %cst_56 = arith.constant 1.000000e+00 : f32
    %301 = vector.broadcast %cst_56 : f32 to vector<16x128xf32>
    %302 = arith.addf %301, %300 : vector<16x128xf32>
    %303 = arith.divf %301, %302 : vector<16x128xf32>
    %304 = vector.extract_strided_slice %295 {offsets = [0, 128], sizes = [16, 128], strides = [1, 1]} : vector<16x512xf32> to vector<16x128xf32>
    %305 = arith.negf %304 : vector<16x128xf32>
    %306 = math.exp %305 : vector<16x128xf32>
    %cst_57 = arith.constant 1.000000e+00 : f32
    %307 = vector.broadcast %cst_57 : f32 to vector<16x128xf32>
    %308 = arith.addf %307, %306 : vector<16x128xf32>
    %309 = arith.divf %307, %308 : vector<16x128xf32>
    %310 = vector.extract_strided_slice %295 {offsets = [0, 256], sizes = [16, 128], strides = [1, 1]} : vector<16x512xf32> to vector<16x128xf32>
    %311 = math.tanh %310 : vector<16x128xf32>
    %312 = vector.extract_strided_slice %295 {offsets = [0, 384], sizes = [16, 128], strides = [1, 1]} : vector<16x512xf32> to vector<16x128xf32>
    %313 = arith.negf %312 : vector<16x128xf32>
    %314 = math.exp %313 : vector<16x128xf32>
    %cst_58 = arith.constant 1.000000e+00 : f32
    %315 = vector.broadcast %cst_58 : f32 to vector<16x128xf32>
    %316 = arith.addf %315, %314 : vector<16x128xf32>
    %317 = arith.divf %315, %316 : vector<16x128xf32>
    %318 = arith.mulf %309, %258 : vector<16x128xf32>
    %319 = arith.mulf %303, %311 : vector<16x128xf32>
    %320 = arith.addf %318, %319 : vector<16x128xf32>
    %321 = math.tanh %320 : vector<16x128xf32>
    %322 = arith.mulf %317, %321 : vector<16x128xf32>
    %323 = vector.extract_strided_slice %297 {offsets = [0, 0], sizes = [16, 128], strides = [1, 1]} : vector<16x512xf32> to vector<16x128xf32>
    %324 = arith.negf %323 : vector<16x128xf32>
    %325 = math.exp %324 : vector<16x128xf32>
    %cst_59 = arith.constant 1.000000e+00 : f32
    %326 = vector.broadcast %cst_59 : f32 to vector<16x128xf32>
    %327 = arith.addf %326, %325 : vector<16x128xf32>
    %328 = arith.divf %326, %327 : vector<16x128xf32>
    %329 = vector.extract_strided_slice %297 {offsets = [0, 128], sizes = [16, 128], strides = [1, 1]} : vector<16x512xf32> to vector<16x128xf32>
    %330 = arith.negf %329 : vector<16x128xf32>
    %331 = math.exp %330 : vector<16x128xf32>
    %cst_60 = arith.constant 1.000000e+00 : f32
    %332 = vector.broadcast %cst_60 : f32 to vector<16x128xf32>
    %333 = arith.addf %332, %331 : vector<16x128xf32>
    %334 = arith.divf %332, %333 : vector<16x128xf32>
    %335 = vector.extract_strided_slice %297 {offsets = [0, 256], sizes = [16, 128], strides = [1, 1]} : vector<16x512xf32> to vector<16x128xf32>
    %336 = math.tanh %335 : vector<16x128xf32>
    %337 = vector.extract_strided_slice %297 {offsets = [0, 384], sizes = [16, 128], strides = [1, 1]} : vector<16x512xf32> to vector<16x128xf32>
    %338 = arith.negf %337 : vector<16x128xf32>
    %339 = math.exp %338 : vector<16x128xf32>
    %cst_61 = arith.constant 1.000000e+00 : f32
    %340 = vector.broadcast %cst_61 : f32 to vector<16x128xf32>
    %341 = arith.addf %340, %339 : vector<16x128xf32>
    %342 = arith.divf %340, %341 : vector<16x128xf32>
    %343 = arith.mulf %334, %283 : vector<16x128xf32>
    %344 = arith.mulf %328, %336 : vector<16x128xf32>
    %345 = arith.addf %343, %344 : vector<16x128xf32>
    %346 = math.tanh %345 : vector<16x128xf32>
    %347 = arith.mulf %342, %346 : vector<16x128xf32>
    %348 = arith.truncf %322 : vector<16x128xf32> to vector<16x128xbf16>
    %349 = arith.truncf %347 : vector<16x128xf32> to vector<16x128xbf16>
    %350 = tpu.concatenate %348, %349 in 1 : vector<16x128xbf16>, vector<16x128xbf16> -> vector<16x256xbf16>
    %c6_i32 = arith.constant 6 : i32
    %c16_i32_62 = arith.constant 16 : i32
    %351 = arith.muli %c6_i32, %c16_i32_62 : i32
    %352 = tpu.assume_multiple %351, 16 : i32
    %cst_63 = arith.constant dense<0.000000e+00> : vector<16x1024xf32>
    %353 = tpu.matmul %350, %7, %cst_63 {dimension_numbers = #tpu.dot_dimension_numbers<[1], [0], [0], [1], [0, 0, 1, 1], [], []>} : vector<16x256xbf16>, vector<256x1024xbf16>, vector<16x1024xf32> -> vector<16x1024xf32>
    %354 = arith.index_cast %352 : i32 to index
    %c0_64 = arith.constant 0 : index
    %355 = vector.load %arg8[%354, %c0_64] : memref<128x512xf32, #tpu.memory_space<vmem>>, vector<16x512xf32>
    %356 = vector.extract_strided_slice %353 {offsets = [0, 0], sizes = [16, 512], strides = [1, 1]} : vector<16x1024xf32> to vector<16x512xf32>
    %357 = arith.addf %355, %356 : vector<16x512xf32>
    %358 = vector.extract_strided_slice %353 {offsets = [0, 512], sizes = [16, 512], strides = [1, 1]} : vector<16x1024xf32> to vector<16x512xf32>
    %359 = arith.addf %10, %358 : vector<16x512xf32>
    %360 = vector.extract_strided_slice %357 {offsets = [0, 0], sizes = [16, 128], strides = [1, 1]} : vector<16x512xf32> to vector<16x128xf32>
    %361 = arith.negf %360 : vector<16x128xf32>
    %362 = math.exp %361 : vector<16x128xf32>
    %cst_65 = arith.constant 1.000000e+00 : f32
    %363 = vector.broadcast %cst_65 : f32 to vector<16x128xf32>
    %364 = arith.addf %363, %362 : vector<16x128xf32>
    %365 = arith.divf %363, %364 : vector<16x128xf32>
    %366 = vector.extract_strided_slice %357 {offsets = [0, 128], sizes = [16, 128], strides = [1, 1]} : vector<16x512xf32> to vector<16x128xf32>
    %367 = arith.negf %366 : vector<16x128xf32>
    %368 = math.exp %367 : vector<16x128xf32>
    %cst_66 = arith.constant 1.000000e+00 : f32
    %369 = vector.broadcast %cst_66 : f32 to vector<16x128xf32>
    %370 = arith.addf %369, %368 : vector<16x128xf32>
    %371 = arith.divf %369, %370 : vector<16x128xf32>
    %372 = vector.extract_strided_slice %357 {offsets = [0, 256], sizes = [16, 128], strides = [1, 1]} : vector<16x512xf32> to vector<16x128xf32>
    %373 = math.tanh %372 : vector<16x128xf32>
    %374 = vector.extract_strided_slice %357 {offsets = [0, 384], sizes = [16, 128], strides = [1, 1]} : vector<16x512xf32> to vector<16x128xf32>
    %375 = arith.negf %374 : vector<16x128xf32>
    %376 = math.exp %375 : vector<16x128xf32>
    %cst_67 = arith.constant 1.000000e+00 : f32
    %377 = vector.broadcast %cst_67 : f32 to vector<16x128xf32>
    %378 = arith.addf %377, %376 : vector<16x128xf32>
    %379 = arith.divf %377, %378 : vector<16x128xf32>
    %380 = arith.mulf %371, %320 : vector<16x128xf32>
    %381 = arith.mulf %365, %373 : vector<16x128xf32>
    %382 = arith.addf %380, %381 : vector<16x128xf32>
    %383 = math.tanh %382 : vector<16x128xf32>
    %384 = arith.mulf %379, %383 : vector<16x128xf32>
    %385 = vector.extract_strided_slice %359 {offsets = [0, 0], sizes = [16, 128], strides = [1, 1]} : vector<16x512xf32> to vector<16x128xf32>
    %386 = arith.negf %385 : vector<16x128xf32>
    %387 = math.exp %386 : vector<16x128xf32>
    %cst_68 = arith.constant 1.000000e+00 : f32
    %388 = vector.broadcast %cst_68 : f32 to vector<16x128xf32>
    %389 = arith.addf %388, %387 : vector<16x128xf32>
    %390 = arith.divf %388, %389 : vector<16x128xf32>
    %391 = vector.extract_strided_slice %359 {offsets = [0, 128], sizes = [16, 128], strides = [1, 1]} : vector<16x512xf32> to vector<16x128xf32>
    %392 = arith.negf %391 : vector<16x128xf32>
    %393 = math.exp %392 : vector<16x128xf32>
    %cst_69 = arith.constant 1.000000e+00 : f32
    %394 = vector.broadcast %cst_69 : f32 to vector<16x128xf32>
    %395 = arith.addf %394, %393 : vector<16x128xf32>
    %396 = arith.divf %394, %395 : vector<16x128xf32>
    %397 = vector.extract_strided_slice %359 {offsets = [0, 256], sizes = [16, 128], strides = [1, 1]} : vector<16x512xf32> to vector<16x128xf32>
    %398 = math.tanh %397 : vector<16x128xf32>
    %399 = vector.extract_strided_slice %359 {offsets = [0, 384], sizes = [16, 128], strides = [1, 1]} : vector<16x512xf32> to vector<16x128xf32>
    %400 = arith.negf %399 : vector<16x128xf32>
    %401 = math.exp %400 : vector<16x128xf32>
    %cst_70 = arith.constant 1.000000e+00 : f32
    %402 = vector.broadcast %cst_70 : f32 to vector<16x128xf32>
    %403 = arith.addf %402, %401 : vector<16x128xf32>
    %404 = arith.divf %402, %403 : vector<16x128xf32>
    %405 = arith.mulf %396, %345 : vector<16x128xf32>
    %406 = arith.mulf %390, %398 : vector<16x128xf32>
    %407 = arith.addf %405, %406 : vector<16x128xf32>
    %408 = math.tanh %407 : vector<16x128xf32>
    %409 = arith.mulf %404, %408 : vector<16x128xf32>
    %410 = arith.truncf %384 : vector<16x128xf32> to vector<16x128xbf16>
    %411 = arith.truncf %409 : vector<16x128xf32> to vector<16x128xbf16>
    %412 = tpu.concatenate %410, %411 in 1 : vector<16x128xbf16>, vector<16x128xbf16> -> vector<16x256xbf16>
    %c7_i32 = arith.constant 7 : i32
    %c16_i32_71 = arith.constant 16 : i32
    %413 = arith.muli %c7_i32, %c16_i32_71 : i32
    %414 = tpu.assume_multiple %413, 16 : i32
    %cst_72 = arith.constant dense<0.000000e+00> : vector<16x1024xf32>
    %415 = tpu.matmul %412, %7, %cst_72 {dimension_numbers = #tpu.dot_dimension_numbers<[1], [0], [0], [1], [0, 0, 1, 1], [], []>} : vector<16x256xbf16>, vector<256x1024xbf16>, vector<16x1024xf32> -> vector<16x1024xf32>
    %416 = arith.index_cast %414 : i32 to index
    %c0_73 = arith.constant 0 : index
    %417 = vector.load %arg8[%416, %c0_73] : memref<128x512xf32, #tpu.memory_space<vmem>>, vector<16x512xf32>
    %418 = vector.extract_strided_slice %415 {offsets = [0, 0], sizes = [16, 512], strides = [1, 1]} : vector<16x1024xf32> to vector<16x512xf32>
    %419 = arith.addf %417, %418 : vector<16x512xf32>
    %420 = vector.extract_strided_slice %415 {offsets = [0, 512], sizes = [16, 512], strides = [1, 1]} : vector<16x1024xf32> to vector<16x512xf32>
    %421 = arith.addf %10, %420 : vector<16x512xf32>
    %422 = vector.extract_strided_slice %419 {offsets = [0, 0], sizes = [16, 128], strides = [1, 1]} : vector<16x512xf32> to vector<16x128xf32>
    %423 = arith.negf %422 : vector<16x128xf32>
    %424 = math.exp %423 : vector<16x128xf32>
    %cst_74 = arith.constant 1.000000e+00 : f32
    %425 = vector.broadcast %cst_74 : f32 to vector<16x128xf32>
    %426 = arith.addf %425, %424 : vector<16x128xf32>
    %427 = arith.divf %425, %426 : vector<16x128xf32>
    %428 = vector.extract_strided_slice %419 {offsets = [0, 128], sizes = [16, 128], strides = [1, 1]} : vector<16x512xf32> to vector<16x128xf32>
    %429 = arith.negf %428 : vector<16x128xf32>
    %430 = math.exp %429 : vector<16x128xf32>
    %cst_75 = arith.constant 1.000000e+00 : f32
    %431 = vector.broadcast %cst_75 : f32 to vector<16x128xf32>
    %432 = arith.addf %431, %430 : vector<16x128xf32>
    %433 = arith.divf %431, %432 : vector<16x128xf32>
    %434 = vector.extract_strided_slice %419 {offsets = [0, 256], sizes = [16, 128], strides = [1, 1]} : vector<16x512xf32> to vector<16x128xf32>
    %435 = math.tanh %434 : vector<16x128xf32>
    %436 = vector.extract_strided_slice %419 {offsets = [0, 384], sizes = [16, 128], strides = [1, 1]} : vector<16x512xf32> to vector<16x128xf32>
    %437 = arith.negf %436 : vector<16x128xf32>
    %438 = math.exp %437 : vector<16x128xf32>
    %cst_76 = arith.constant 1.000000e+00 : f32
    %439 = vector.broadcast %cst_76 : f32 to vector<16x128xf32>
    %440 = arith.addf %439, %438 : vector<16x128xf32>
    %441 = arith.divf %439, %440 : vector<16x128xf32>
    %442 = arith.mulf %433, %382 : vector<16x128xf32>
    %443 = arith.mulf %427, %435 : vector<16x128xf32>
    %444 = arith.addf %442, %443 : vector<16x128xf32>
    %445 = math.tanh %444 : vector<16x128xf32>
    %446 = arith.mulf %441, %445 : vector<16x128xf32>
    %447 = vector.extract_strided_slice %421 {offsets = [0, 0], sizes = [16, 128], strides = [1, 1]} : vector<16x512xf32> to vector<16x128xf32>
    %448 = arith.negf %447 : vector<16x128xf32>
    %449 = math.exp %448 : vector<16x128xf32>
    %cst_77 = arith.constant 1.000000e+00 : f32
    %450 = vector.broadcast %cst_77 : f32 to vector<16x128xf32>
    %451 = arith.addf %450, %449 : vector<16x128xf32>
    %452 = arith.divf %450, %451 : vector<16x128xf32>
    %453 = vector.extract_strided_slice %421 {offsets = [0, 128], sizes = [16, 128], strides = [1, 1]} : vector<16x512xf32> to vector<16x128xf32>
    %454 = arith.negf %453 : vector<16x128xf32>
    %455 = math.exp %454 : vector<16x128xf32>
    %cst_78 = arith.constant 1.000000e+00 : f32
    %456 = vector.broadcast %cst_78 : f32 to vector<16x128xf32>
    %457 = arith.addf %456, %455 : vector<16x128xf32>
    %458 = arith.divf %456, %457 : vector<16x128xf32>
    %459 = vector.extract_strided_slice %421 {offsets = [0, 256], sizes = [16, 128], strides = [1, 1]} : vector<16x512xf32> to vector<16x128xf32>
    %460 = math.tanh %459 : vector<16x128xf32>
    %461 = vector.extract_strided_slice %421 {offsets = [0, 384], sizes = [16, 128], strides = [1, 1]} : vector<16x512xf32> to vector<16x128xf32>
    %462 = arith.negf %461 : vector<16x128xf32>
    %463 = math.exp %462 : vector<16x128xf32>
    %cst_79 = arith.constant 1.000000e+00 : f32
    %464 = vector.broadcast %cst_79 : f32 to vector<16x128xf32>
    %465 = arith.addf %464, %463 : vector<16x128xf32>
    %466 = arith.divf %464, %465 : vector<16x128xf32>
    %467 = arith.mulf %458, %407 : vector<16x128xf32>
    %468 = arith.mulf %452, %460 : vector<16x128xf32>
    %469 = arith.addf %467, %468 : vector<16x128xf32>
    %470 = math.tanh %469 : vector<16x128xf32>
    %471 = arith.mulf %466, %470 : vector<16x128xf32>
    %472 = arith.truncf %446 : vector<16x128xf32> to vector<16x128xbf16>
    %473 = arith.truncf %471 : vector<16x128xf32> to vector<16x128xbf16>
    %474 = tpu.concatenate %472, %473 in 1 : vector<16x128xbf16>, vector<16x128xbf16> -> vector<16x256xbf16>
    %c7_i32_80 = arith.constant 7 : i32
    %475 = vector.extract_strided_slice %7 {offsets = [0, 512], sizes = [256, 512], strides = [1, 1]} : vector<256x1024xbf16> to vector<256x512xbf16>
    %cst_81 = arith.constant dense<0.000000e+00> : vector<16x512xf32>
    %476 = tpu.matmul %474, %475, %cst_81 {dimension_numbers = #tpu.dot_dimension_numbers<[1], [0], [0], [1], [0, 0, 1, 1], [], []>} : vector<16x256xbf16>, vector<256x512xbf16>, vector<16x512xf32> -> vector<16x512xf32>
    %477 = arith.addf %10, %476 : vector<16x512xf32>
    %478 = vector.extract_strided_slice %477 {offsets = [0, 0], sizes = [16, 128], strides = [1, 1]} : vector<16x512xf32> to vector<16x128xf32>
    %479 = arith.negf %478 : vector<16x128xf32>
    %480 = math.exp %479 : vector<16x128xf32>
    %cst_82 = arith.constant 1.000000e+00 : f32
    %481 = vector.broadcast %cst_82 : f32 to vector<16x128xf32>
    %482 = arith.addf %481, %480 : vector<16x128xf32>
    %483 = arith.divf %481, %482 : vector<16x128xf32>
    %484 = vector.extract_strided_slice %477 {offsets = [0, 128], sizes = [16, 128], strides = [1, 1]} : vector<16x512xf32> to vector<16x128xf32>
    %485 = arith.negf %484 : vector<16x128xf32>
    %486 = math.exp %485 : vector<16x128xf32>
    %cst_83 = arith.constant 1.000000e+00 : f32
    %487 = vector.broadcast %cst_83 : f32 to vector<16x128xf32>
    %488 = arith.addf %487, %486 : vector<16x128xf32>
    %489 = arith.divf %487, %488 : vector<16x128xf32>
    %490 = vector.extract_strided_slice %477 {offsets = [0, 256], sizes = [16, 128], strides = [1, 1]} : vector<16x512xf32> to vector<16x128xf32>
    %491 = math.tanh %490 : vector<16x128xf32>
    %492 = vector.extract_strided_slice %477 {offsets = [0, 384], sizes = [16, 128], strides = [1, 1]} : vector<16x512xf32> to vector<16x128xf32>
    %493 = arith.negf %492 : vector<16x128xf32>
    %494 = math.exp %493 : vector<16x128xf32>
    %cst_84 = arith.constant 1.000000e+00 : f32
    %495 = vector.broadcast %cst_84 : f32 to vector<16x128xf32>
    %496 = arith.addf %495, %494 : vector<16x128xf32>
    %497 = arith.divf %495, %496 : vector<16x128xf32>
    %498 = arith.mulf %489, %469 : vector<16x128xf32>
    %499 = arith.mulf %483, %491 : vector<16x128xf32>
    %500 = arith.addf %498, %499 : vector<16x128xf32>
    %501 = math.tanh %500 : vector<16x128xf32>
    %502 = arith.mulf %497, %501 : vector<16x128xf32>
    %503 = arith.truncf %502 : vector<16x128xf32> to vector<16x128xbf16>
    %c0_85 = arith.constant 0 : index
    %c0_86 = arith.constant 0 : index
    %504 = vector.load %arg5[%c0_85, %c0_86] : memref<128x128xbf16, #tpu.memory_space<vmem>>, vector<128x128xbf16>
    %cst_87 = arith.constant dense<0.000000e+00> : vector<16x128xf32>
    %505 = tpu.matmul %503, %504, %cst_87 {dimension_numbers = #tpu.dot_dimension_numbers<[1], [0], [0], [1], [0, 0, 1, 1], [], []>} : vector<16x128xbf16>, vector<128x128xbf16>, vector<16x128xf32> -> vector<16x128xf32>
    %c0_88 = arith.constant 0 : index
    %c0_89 = arith.constant 0 : index
    %506 = vector.load %arg6[%c0_88, %c0_89] : memref<1x128xf32, #tpu.memory_space<vmem>>, vector<1x128xf32>
    %507 = vector.broadcast %506 : vector<1x128xf32> to vector<16x128xf32>
    %508 = arith.addf %505, %507 : vector<16x128xf32>
    %c0_90 = arith.constant 0 : index
    %c0_91 = arith.constant 0 : index
    %509 = vector.load %arg7[%c0_90, %c0_91] : memref<16x128xf32, #tpu.memory_space<vmem>>, vector<16x128xf32>
    tpu.vector_store %arg7[%c0_90, %c0_91], %508 {strides = array<i32>} : memref<16x128xf32, #tpu.memory_space<vmem>>, vector<16x128xf32>,
    return
  }
}

</mosaic_0001>

<llo_original>
// kernel: tpu_custom_call.1
$region0: #{tpu_custom_call.1}
  #allocation0 [shape = 'u32[]', space=smem, size = 0x4, offset = 0x4, fixed_abs, tag = 'smem constant byte address 0x4 - core index']
  #allocation1 [shape = 'u32[72,128]{1,0:T(1,128)}', space=vmem, size = 0x9000, scoped, tag = 'internal scratch']
  #allocation2 [shape = 'f32[128,512]{1,0:T(8,128)}', space=vmem, size = 0x40000, scoped, tag = 'scratch operand']
  %s0 = inlined_call_operand.hbm [shape: bf16[128,128], index: 0, kind: input, shape index: {}]
  %s1 = inlined_call_operand.hbm [shape: bf16[128,512], index: 1, kind: input, shape index: {}]
  %s2 = inlined_call_operand.hbm [shape: f32[1,512], index: 2, kind: input, shape index: {}]
  %s3 = inlined_call_operand.hbm [shape: bf16[256,1024], index: 3, kind: input, shape index: {}]
  %s4 = inlined_call_operand.hbm [shape: f32[1,512], index: 4, kind: input, shape index: {}]
  %s5 = inlined_call_operand.hbm [shape: bf16[128,128], index: 5, kind: input, shape index: {}]
  %s6 = inlined_call_operand.vmem [shape: f32[1,128], index: 6, kind: input, shape index: {}]
  %s7 = inlined_call_operand.hbm [shape: f32[16,128], index: 7, kind: output, shape index: {}]
  %s8 = sld [smem:[#allocation0]]
  $region62: #{tpu_custom_call.1} parent=0
    _
  %s10 = ssub.s32 1, %s8
  %s11 = scalar_select 0, %s10, %s8
  $region1: #{tpu_custom_call.1} parent=0
    #allocation3 [shape = 'u8[32768]{0}', space=vmem, size = 0x8000, scoped, tag = 'input window, operand 0, single buffered']
    #allocation4 [shape = 's32[1]{0}', space=sflag, size = 0x4, scoped, tag = 'scoped memory for tpu_custom_call.1']
    #allocation5 [shape = 's32[1]{0}', space=sflag, size = 0x4, scoped, tag = 'scoped memory for tpu_custom_call.1']
    #allocation6 [shape = 'u8[131072]{0}', space=vmem, size = 0x20000, scoped, tag = 'input window, operand 1, single buffered']
    #allocation7 [shape = 's32[1]{0}', space=sflag, size = 0x4, scoped, tag = 'scoped memory for tpu_custom_call.1']
    #allocation8 [shape = 'u8[2048]{0}', space=vmem, size = 0x800, scoped, tag = 'input window, operand 2, single buffered']
    #allocation9 [shape = 'u8[524288]{0}', space=vmem, size = 0x80000, scoped, tag = 'input window, operand 3, single buffered']
    #allocation10 [shape = 's32[1]{0}', space=sflag, size = 0x4, scoped, tag = 'scoped memory for tpu_custom_call.1']
    #allocation11 [shape = 'u8[2048]{0}', space=vmem, size = 0x800, scoped, tag = 'input window, operand 4, single buffered']
    #allocation12 [shape = 'u8[32768]{0}', space=vmem, size = 0x8000, scoped, tag = 'input window, operand 5, single buffered']
    #allocation13 [shape = 's32[1]{0}', space=sflag, size = 0x4, scoped, tag = 'scoped memory for tpu_custom_call.1']
    #allocation14 [shape = 'u8[8192]{0}', space=vmem, size = 0x2000, scoped, tag = 'output window, operand 0, single buffered']
    %12 = vsyncpa [#allocation4], 0
    %13 = vsyncpa [#allocation7], 0
    %14 = vsyncpa [#allocation10], 0
    %15 = vsyncpa [#allocation13], 0
    %16 = vsyncpa [#allocation5], 0
    // Predicated region
    $region2: #{tpu_custom_call.1} parent=1 // pred_check
      _
    $region3: #{tpu_custom_call.1} parent=1 // pred_check_branch
      %18 = sbr.rel (0) target = $region5
    $region4: #{tpu_custom_call.1} parent=1 // pred_region
      %20 = vsyncadd [#allocation4], 0
      %s21 = sshll.u32 %s0, 4
      %s22 = int_to_ptr.hbm [resolvable:$true] %s21
      %s23 = sshll.u32 [#allocation3], 4
      %s24 = int_to_ptr.vmem [resolvable:$true] %s23
      %29 = dma.hbm_to_vmem [thread:$0]  %s22, 1024, %s24, [#allocation4], 64, 64, 4
    $region5: #{tpu_custom_call.1} parent=1 // pred_fallthru
      _
    // Predicated region
    $region6: #{tpu_custom_call.1} parent=1 // pred_check
      _
    $region7: #{tpu_custom_call.1} parent=1 // pred_check_branch
      %31 = sbr.rel (0) target = $region9
    $region8: #{tpu_custom_call.1} parent=1 // pred_region
      %33 = vsyncadd [#allocation7], 0
      %s34 = sshll.u32 %s1, 4
      %s35 = int_to_ptr.hbm [resolvable:$true] %s34
      %s36 = sshll.u32 [#allocation6], 4
      %s37 = int_to_ptr.vmem [resolvable:$true] %s36
      %42 = dma.hbm_to_vmem [thread:$0]  %s35, 4096, %s37, [#allocation7], 256, 256, 16
    $region9: #{tpu_custom_call.1} parent=1 // pred_fallthru
      _
    // Predicated region
    $region10: #{tpu_custom_call.1} parent=1 // pred_check
      _
    $region11: #{tpu_custom_call.1} parent=1 // pred_check_branch
      %44 = sbr.rel (0) target = $region13
    $region12: #{tpu_custom_call.1} parent=1 // pred_region
      %46 = vsyncadd [#allocation7], 0
      %s48 = sshll.u32 %s2, 4
      %s49 = int_to_ptr.hbm [resolvable:$true] %s48
      %s50 = sshll.u32 [#allocation8], 4
      %s51 = int_to_ptr.vmem [resolvable:$true] %s50
      %53 = dma.hbm_to_vmem [thread:$0]  %s49, 64, %s51, [#allocation7]
    $region13: #{tpu_custom_call.1} parent=1 // pred_fallthru
      _
    // Predicated region
    $region14: #{tpu_custom_call.1} parent=1 // pred_check
      _
    $region15: #{tpu_custom_call.1} parent=1 // pred_check_branch
      %55 = sbr.rel (0) target = $region17
    $region16: #{tpu_custom_call.1} parent=1 // pred_region
      %57 = vsyncadd [#allocation10], 0
      %s58 = sshll.u32 %s3, 4
      %s59 = int_to_ptr.hbm [resolvable:$true] %s58
      %s60 = sshll.u32 [#allocation9], 4
      %s61 = int_to_ptr.vmem [resolvable:$true] %s60
      %66 = dma.hbm_to_vmem [thread:$0]  %s59, 16384, %s61, [#allocation10], 512, 512, 32
    $region17: #{tpu_custom_call.1} parent=1 // pred_fallthru
      _
    // Predicated region
    $region18: #{tpu_custom_call.1} parent=1 // pred_check
      _
    $region19: #{tpu_custom_call.1} parent=1 // pred_check_branch
      %68 = sbr.rel (0) target = $region21
    $region20: #{tpu_custom_call.1} parent=1 // pred_region
      %70 = vsyncadd [#allocation10], 0
      %s72 = sshll.u32 %s4, 4
      %s73 = int_to_ptr.hbm [resolvable:$true] %s72
      %s74 = sshll.u32 [#allocation11], 4
      %s75 = int_to_ptr.vmem [resolvable:$true] %s74
      %77 = dma.hbm_to_vmem [thread:$0]  %s73, 64, %s75, [#allocation10]
    $region21: #{tpu_custom_call.1} parent=1 // pred_fallthru
      _
    // Predicated region
    $region22: #{tpu_custom_call.1} parent=1 // pred_check
      _
    $region23: #{tpu_custom_call.1} parent=1 // pred_check_branch
      %79 = sbr.rel (0) target = $region25
    $region24: #{tpu_custom_call.1} parent=1 // pred_region
      %81 = vsyncadd [#allocation13], 0
      %s82 = sshll.u32 %s5, 4
      %s83 = int_to_ptr.hbm [resolvable:$true] %s82
      %s84 = sshll.u32 [#allocation12], 4
      %s85 = int_to_ptr.vmem [resolvable:$true] %s84
      %90 = dma.hbm_to_vmem [thread:$0]  %s83, 1024, %s85, [#allocation13], 64, 64, 4
    $region25: #{tpu_custom_call.1} parent=1 // pred_fallthru
      _
    // Predicated region
    $region26: #{tpu_custom_call.1} parent=1 // pred_check
      _
    $region27: #{tpu_custom_call.1} parent=1 // pred_check_branch
      %92 = sbr.rel (0) target = $region29
    $region28: #{tpu_custom_call.1} parent=1 // pred_region
      _
    $region29: #{tpu_custom_call.1} parent=1 // pred_fallthru
      _
    // Predicated region
    $region30: #{tpu_custom_call.1} parent=1 // pred_check
      _
    $region31: #{tpu_custom_call.1} parent=1 // pred_check_branch
      %94 = sbr.rel (0) target = $region33
    $region32: #{tpu_custom_call.1} parent=1 // pred_region
      %96 = dma.done [#allocation4], 1024
    $region33: #{tpu_custom_call.1} parent=1 // pred_fallthru
      _
    // Predicated region
    $region34: #{tpu_custom_call.1} parent=1 // pred_check
      _
    $region35: #{tpu_custom_call.1} parent=1 // pred_check_branch
      %98 = sbr.rel (0) target = $region37
    $region36: #{tpu_custom_call.1} parent=1 // pred_region
      %100 = dma.done [#allocation7], 4096
    $region37: #{tpu_custom_call.1} parent=1 // pred_fallthru
      _
    // Predicated region
    $region38: #{tpu_custom_call.1} parent=1 // pred_check
      _
    $region39: #{tpu_custom_call.1} parent=1 // pred_check_branch
      %102 = sbr.rel (0) target = $region41
    $region40: #{tpu_custom_call.1} parent=1 // pred_region
      %104 = dma.done [#allocation7], 64
    $region41: #{tpu_custom_call.1} parent=1 // pred_fallthru
      _
    // Predicated region
    $region42: #{tpu_custom_call.1} parent=1 // pred_check
      _
    $region43: #{tpu_custom_call.1} parent=1 // pred_check_branch
      %106 = sbr.rel (0) target = $region45
    $region44: #{tpu_custom_call.1} parent=1 // pred_region
      %108 = dma.done [#allocation10], 16384
    $region45: #{tpu_custom_call.1} parent=1 // pred_fallthru
      _
    // Predicated region
    $region46: #{tpu_custom_call.1} parent=1 // pred_check
      _
    $region47: #{tpu_custom_call.1} parent=1 // pred_check_branch
      %110 = sbr.rel (0) target = $region49
    $region48: #{tpu_custom_call.1} parent=1 // pred_region
      %112 = dma.done [#allocation10], 64
    $region49: #{tpu_custom_call.1} parent=1 // pred_fallthru
      _
    // Predicated region
    $region50: #{tpu_custom_call.1} parent=1 // pred_check
      _
    $region51: #{tpu_custom_call.1} parent=1 // pred_check_branch
      %114 = sbr.rel (0) target = $region53
    $region52: #{tpu_custom_call.1} parent=1 // pred_region
      %116 = dma.done [#allocation13], 1024
    $region53: #{tpu_custom_call.1} parent=1 // pred_fallthru
      _
    %v118 = vld [vmem:[#allocation3] sm:$0xf]
    %v119 = vld [vmem:[#allocation3 + $0x4] sm:$0xf]
    %v120 = vld [vmem:[#allocation3 + $0x8] sm:$0xf]
    %v121 = vld [vmem:[#allocation3 + $0xc] sm:$0xf]
    %v122 = vld [vmem:[#allocation3 + $0x10] sm:$0xf]
    %v123 = vld [vmem:[#allocation3 + $0x14] sm:$0xf]
    %v124 = vld [vmem:[#allocation3 + $0x18] sm:$0xf]
    %v125 = vld [vmem:[#allocation3 + $0x1c] sm:$0xf]
    %v126 = vld [vmem:[#allocation3 + $0x20] sm:$0xf]
    %v127 = vld [vmem:[#allocation3 + $0x24] sm:$0xf]
    %v128 = vld [vmem:[#allocation3 + $0x28] sm:$0xf]
    %v129 = vld [vmem:[#allocation3 + $0x2c] sm:$0xf]
    %v130 = vld [vmem:[#allocation3 + $0x30] sm:$0xf]
    %v131 = vld [vmem:[#allocation3 + $0x34] sm:$0xf]
    %v132 = vld [vmem:[#allocation3 + $0x38] sm:$0xf]
    %v133 = vld [vmem:[#allocation3 + $0x3c] sm:$0xf]
    %v134 = vld [vmem:[#allocation6] sm:$0xff]
    %v135 = vld [vmem:[#allocation6 + $0x8] sm:$0xff]
    %v136 = vld [vmem:[#allocation6 + $0x10] sm:$0xff]
    %v137 = vld [vmem:[#allocation6 + $0x18] sm:$0xff]
    %v138 = vld [vmem:[#allocation6 + $0x20] sm:$0xff]
    %v139 = vld [vmem:[#allocation6 + $0x28] sm:$0xff]
    %v140 = vld [vmem:[#allocation6 + $0x30] sm:$0xff]
    %v141 = vld [vmem:[#allocation6 + $0x38] sm:$0xff]
    %v142 = vld [vmem:[#allocation6 + $0x40] sm:$0xff]
    %v143 = vld [vmem:[#allocation6 + $0x48] sm:$0xff]
    %v144 = vld [vmem:[#allocation6 + $0x50] sm:$0xff]
    %v145 = vld [vmem:[#allocation6 + $0x58] sm:$0xff]
    %v146 = vld [vmem:[#allocation6 + $0x60] sm:$0xff]
    %v147 = vld [vmem:[#allocation6 + $0x68] sm:$0xff]
    %v148 = vld [vmem:[#allocation6 + $0x70] sm:$0xff]
    %v149 = vld [vmem:[#allocation6 + $0x78] sm:$0xff]
    %v150 = vld [vmem:[#allocation6 + $0x80] sm:$0xff]
    %v151 = vld [vmem:[#allocation6 + $0x88] sm:$0xff]
    %v152 = vld [vmem:[#allocation6 + $0x90] sm:$0xff]
    %v153 = vld [vmem:[#allocation6 + $0x98] sm:$0xff]
    %v154 = vld [vmem:[#allocation6 + $0xa0] sm:$0xff]
    %v155 = vld [vmem:[#allocation6 + $0xa8] sm:$0xff]
    %v156 = vld [vmem:[#allocation6 + $0xb0] sm:$0xff]
    %v157 = vld [vmem:[#allocation6 + $0xb8] sm:$0xff]
    %v158 = vld [vmem:[#allocation6 + $0xc0] sm:$0xff]
    %v159 = vld [vmem:[#allocation6 + $0xc8] sm:$0xff]
    %v160 = vld [vmem:[#allocation6 + $0xd0] sm:$0xff]
    %v161 = vld [vmem:[#allocation6 + $0xd8] sm:$0xff]
    %v162 = vld [vmem:[#allocation6 + $0xe0] sm:$0xff]
    %v163 = vld [vmem:[#allocation6 + $0xe8] sm:$0xff]
    %v164 = vld [vmem:[#allocation6 + $0xf0] sm:$0xff]
    %v165 = vld [vmem:[#allocation6 + $0xf8] sm:$0xff]
    %v166 = vld [vmem:[#allocation8] sm:$0xf]
    %v168 = vperm.slane %v166, 0
    %v169 = vperm.slane %v166, 1
    %v170 = vperm.slane %v166, 2
    %v171 = vperm.slane %v166, 3
    %v192 = vunpack.c.l.b16 %v118
    %v193 = vunpack.c.l.b16 %v119
    %v194 = vunpack.c.l.b16 %v120
    %v195 = vunpack.c.l.b16 %v121
    %v196 = vunpack.c.l.b16 %v122
    %v197 = vunpack.c.l.b16 %v123
    %v198 = vunpack.c.l.b16 %v124
    %v199 = vunpack.c.l.b16 %v125
    %v200 = vunpack.c.l.b16 %v126
    %v201 = vunpack.c.l.b16 %v127
    %v202 = vunpack.c.l.b16 %v128
    %v203 = vunpack.c.l.b16 %v129
    %v204 = vunpack.c.l.b16 %v130
    %v205 = vunpack.c.l.b16 %v131
    %v206 = vunpack.c.l.b16 %v132
    %v207 = vunpack.c.l.b16 %v133
    %v208 = vpack.c.b16 %v193, %v192
    %v209 = vpack.c.b16 %v195, %v194
    %v210 = vpack.c.b16 %v197, %v196
    %v211 = vpack.c.b16 %v199, %v198
    %v212 = vpack.c.b16 %v201, %v200
    %v213 = vpack.c.b16 %v203, %v202
    %v214 = vpack.c.b16 %v205, %v204
    %v215 = vpack.c.b16 %v207, %v206
    %v256 = vunpack.c.l.b16 %v134
    %v257 = vunpack.c.h.b16 %v134
    %v258 = vunpack.c.l.b16 %v135
    %v259 = vunpack.c.h.b16 %v135
    %v260 = vunpack.c.l.b16 %v136
    %v261 = vunpack.c.h.b16 %v136
    %v262 = vunpack.c.l.b16 %v137
    %v263 = vunpack.c.h.b16 %v137
    %v264 = vunpack.c.l.b16 %v138
    %v265 = vunpack.c.h.b16 %v138
    %v266 = vunpack.c.l.b16 %v139
    %v267 = vunpack.c.h.b16 %v139
    %v268 = vunpack.c.l.b16 %v140
    %v269 = vunpack.c.h.b16 %v140
    %v270 = vunpack.c.l.b16 %v141
    %v271 = vunpack.c.h.b16 %v141
    %v272 = vunpack.c.l.b16 %v142
    %v273 = vunpack.c.h.b16 %v142
    %v274 = vunpack.c.l.b16 %v143
    %v275 = vunpack.c.h.b16 %v143
    %v276 = vunpack.c.l.b16 %v144
    %v277 = vunpack.c.h.b16 %v144
    %v278 = vunpack.c.l.b16 %v145
    %v279 = vunpack.c.h.b16 %v145
    %v280 = vunpack.c.l.b16 %v146
    %v281 = vunpack.c.h.b16 %v146
    %v282 = vunpack.c.l.b16 %v147
    %v283 = vunpack.c.h.b16 %v147
    %v284 = vunpack.c.l.b16 %v148
    %v285 = vunpack.c.h.b16 %v148
    %v286 = vunpack.c.l.b16 %v149
    %v287 = vunpack.c.h.b16 %v149
    %v288 = vunpack.c.l.b16 %v150
    %v289 = vunpack.c.h.b16 %v150
    %v290 = vunpack.c.l.b16 %v151
    %v291 = vunpack.c.h.b16 %v151
    %v292 = vunpack.c.l.b16 %v152
    %v293 = vunpack.c.h.b16 %v152
    %v294 = vunpack.c.l.b16 %v153
    %v295 = vunpack.c.h.b16 %v153
    %v296 = vunpack.c.l.b16 %v154
    %v297 = vunpack.c.h.b16 %v154
    %v298 = vunpack.c.l.b16 %v155
    %v299 = vunpack.c.h.b16 %v155
    %v300 = vunpack.c.l.b16 %v156
    %v301 = vunpack.c.h.b16 %v156
    %v302 = vunpack.c.l.b16 %v157
    %v303 = vunpack.c.h.b16 %v157
    %v304 = vunpack.c.l.b16 %v158
    %v305 = vunpack.c.h.b16 %v158
    %v306 = vunpack.c.l.b16 %v159
    %v307 = vunpack.c.h.b16 %v159
    %v308 = vunpack.c.l.b16 %v160
    %v309 = vunpack.c.h.b16 %v160
    %v310 = vunpack.c.l.b16 %v161
    %v311 = vunpack.c.h.b16 %v161
    %v312 = vunpack.c.l.b16 %v162
    %v313 = vunpack.c.h.b16 %v162
    %v314 = vunpack.c.l.b16 %v163
    %v315 = vunpack.c.h.b16 %v163
    %v316 = vunpack.c.l.b16 %v164
    %v317 = vunpack.c.h.b16 %v164
    %v318 = vunpack.c.l.b16 %v165
    %v319 = vunpack.c.h.b16 %v165
    %v320 = vpack.c.b16 %v260, %v256
    %v321 = vpack.c.b16 %v261, %v257
    %v322 = vpack.c.b16 %v262, %v258
    %v323 = vpack.c.b16 %v263, %v259
    %v324 = vpack.c.b16 %v268, %v264
    %v325 = vpack.c.b16 %v269, %v265
    %v326 = vpack.c.b16 %v270, %v266
    %v327 = vpack.c.b16 %v271, %v267
    %v328 = vpack.c.b16 %v276, %v272
    %v329 = vpack.c.b16 %v277, %v273
    %v330 = vpack.c.b16 %v278, %v274
    %v331 = vpack.c.b16 %v279, %v275
    %v332 = vpack.c.b16 %v284, %v280
    %v333 = vpack.c.b16 %v285, %v281
    %v334 = vpack.c.b16 %v286, %v282
    %v335 = vpack.c.b16 %v287, %v283
    %v336 = vpack.c.b16 %v292, %v288
    %v337 = vpack.c.b16 %v293, %v289
    %v338 = vpack.c.b16 %v294, %v290
    %v339 = vpack.c.b16 %v295, %v291
    %v340 = vpack.c.b16 %v300, %v296
    %v341 = vpack.c.b16 %v301, %v297
    %v342 = vpack.c.b16 %v302, %v298
    %v343 = vpack.c.b16 %v303, %v299
    %v344 = vpack.c.b16 %v308, %v304
    %v345 = vpack.c.b16 %v309, %v305
    %v346 = vpack.c.b16 %v310, %v306
    %v347 = vpack.c.b16 %v311, %v307
    %v348 = vpack.c.b16 %v316, %v312
    %v349 = vpack.c.b16 %v317, %v313
    %v350 = vpack.c.b16 %v318, %v314
    %v351 = vpack.c.b16 %v319, %v315
    %384 = vmatpush.bf16.msra.mxu0 %v348
    %385 = vmatpush.bf16.msra.mxu0 %v344
    %386 = vmatpush.bf16.msra.mxu0 %v340
    %387 = vmatpush.bf16.msra.mxu0 %v336
    %388 = vmatpush.bf16.msra.mxu0 %v332
    %389 = vmatpush.bf16.msra.mxu0 %v328
    %390 = vmatpush.bf16.msra.mxu0 %v324
    %391 = vmatpush.bf16.msra.mxu0 %v320
    %392 = vmatmul.bf16.gmra.mxu0 %v208
    %v393 = vpop.f32.mrf.mxu0
    %v394 = vadd.f32 %v168, %v393
    %v395 = vpop.f32.mrf.mxu0
    %v396 = vadd.f32 %v168, %v395
    %397 = vmatmul.bf16.gmra.mxu0 %v209
    %v398 = vpop.f32.mrf.mxu0
    %v399 = vadd.f32 %v168, %v398
    %v400 = vpop.f32.mrf.mxu0
    %v401 = vadd.f32 %v168, %v400
    %402 = vmatmul.bf16.gmra.mxu0 %v210
    %v403 = vpop.f32.mrf.mxu0
    %v404 = vadd.f32 %v168, %v403
    %v405 = vpop.f32.mrf.mxu0
    %v406 = vadd.f32 %v168, %v405
    %407 = vmatmul.bf16.gmra.mxu0 %v211
    %v408 = vpop.f32.mrf.mxu0
    %v409 = vadd.f32 %v168, %v408
    %v410 = vpop.f32.mrf.mxu0
    %v411 = vadd.f32 %v168, %v410
    %412 = vmatmul.bf16.gmra.mxu0 %v212
    %v413 = vpop.f32.mrf.mxu0
    %v414 = vadd.f32 %v168, %v413
    %v415 = vpop.f32.mrf.mxu0
    %v416 = vadd.f32 %v168, %v415
    %417 = vmatmul.bf16.gmra.mxu0 %v213
    %v418 = vpop.f32.mrf.mxu0
    %v419 = vadd.f32 %v168, %v418
    %v420 = vpop.f32.mrf.mxu0
    %v421 = vadd.f32 %v168, %v420
    %422 = vmatmul.bf16.gmra.mxu0 %v214
    %v423 = vpop.f32.mrf.mxu0
    %v424 = vadd.f32 %v168, %v423
    %v425 = vpop.f32.mrf.mxu0
    %v426 = vadd.f32 %v168, %v425
    %427 = vmatmul.bf16.gmra.mxu0 %v215
    %v428 = vpop.f32.mrf.mxu0
    %v429 = vadd.f32 %v168, %v428
    %v430 = vpop.f32.mrf.mxu0
    %v431 = vadd.f32 %v168, %v430
    %432 = vdwg.mxu0
    %433 = vmatpush.bf16.msra.mxu0 %v349
    %434 = vmatpush.bf16.msra.mxu0 %v345
    %435 = vmatpush.bf16.msra.mxu0 %v341
    %436 = vmatpush.bf16.msra.mxu0 %v337
    %437 = vmatpush.bf16.msra.mxu0 %v333
    %438 = vmatpush.bf16.msra.mxu0 %v329
    %439 = vmatpush.bf16.msra.mxu0 %v325
    %440 = vmatpush.bf16.msra.mxu0 %v321
    %441 = vmatmul.bf16.gmra.mxu0 %v208
    %v442 = vpop.f32.mrf.mxu0
    %v443 = vadd.f32 %v169, %v442
    %v444 = vpop.f32.mrf.mxu0
    %v445 = vadd.f32 %v169, %v444
    %446 = vmatmul.bf16.gmra.mxu0 %v209
    %v447 = vpop.f32.mrf.mxu0
    %v448 = vadd.f32 %v169, %v447
    %v449 = vpop.f32.mrf.mxu0
    %v450 = vadd.f32 %v169, %v449
    %451 = vmatmul.bf16.gmra.mxu0 %v210
    %v452 = vpop.f32.mrf.mxu0
    %v453 = vadd.f32 %v169, %v452
    %v454 = vpop.f32.mrf.mxu0
    %v455 = vadd.f32 %v169, %v454
    %456 = vmatmul.bf16.gmra.mxu0 %v211
    %v457 = vpop.f32.mrf.mxu0
    %v458 = vadd.f32 %v169, %v457
    %v459 = vpop.f32.mrf.mxu0
    %v460 = vadd.f32 %v169, %v459
    %461 = vmatmul.bf16.gmra.mxu0 %v212
    %v462 = vpop.f32.mrf.mxu0
    %v463 = vadd.f32 %v169, %v462
    %v464 = vpop.f32.mrf.mxu0
    %v465 = vadd.f32 %v169, %v464
    %466 = vmatmul.bf16.gmra.mxu0 %v213
    %v467 = vpop.f32.mrf.mxu0
    %v468 = vadd.f32 %v169, %v467
    %v469 = vpop.f32.mrf.mxu0
    %v470 = vadd.f32 %v169, %v469
    %471 = vmatmul.bf16.gmra.mxu0 %v214
    %v472 = vpop.f32.mrf.mxu0
    %v473 = vadd.f32 %v169, %v472
    %v474 = vpop.f32.mrf.mxu0
    %v475 = vadd.f32 %v169, %v474
    %476 = vmatmul.bf16.gmra.mxu0 %v215
    %v477 = vpop.f32.mrf.mxu0
    %v478 = vadd.f32 %v169, %v477
    %v479 = vpop.f32.mrf.mxu0
    %v480 = vadd.f32 %v169, %v479
    %481 = vdwg.mxu0
    %482 = vmatpush.bf16.msra.mxu0 %v350
    %483 = vmatpush.bf16.msra.mxu0 %v346
    %484 = vmatpush.bf16.msra.mxu0 %v342
    %485 = vmatpush.bf16.msra.mxu0 %v338
    %486 = vmatpush.bf16.msra.mxu0 %v334
    %487 = vmatpush.bf16.msra.mxu0 %v330
    %488 = vmatpush.bf16.msra.mxu0 %v326
    %489 = vmatpush.bf16.msra.mxu0 %v322
    %490 = vmatmul.bf16.gmra.mxu0 %v208
    %v491 = vpop.f32.mrf.mxu0
    %v492 = vadd.f32 %v170, %v491
    %v493 = vpop.f32.mrf.mxu0
    %v494 = vadd.f32 %v170, %v493
    %495 = vmatmul.bf16.gmra.mxu0 %v209
    %v496 = vpop.f32.mrf.mxu0
    %v497 = vadd.f32 %v170, %v496
    %v498 = vpop.f32.mrf.mxu0
    %v499 = vadd.f32 %v170, %v498
    %500 = vmatmul.bf16.gmra.mxu0 %v210
    %v501 = vpop.f32.mrf.mxu0
    %v502 = vadd.f32 %v170, %v501
    %v503 = vpop.f32.mrf.mxu0
    %v504 = vadd.f32 %v170, %v503
    %505 = vmatmul.bf16.gmra.mxu0 %v211
    %v506 = vpop.f32.mrf.mxu0
    %v507 = vadd.f32 %v170, %v506
    %v508 = vpop.f32.mrf.mxu0
    %v509 = vadd.f32 %v170, %v508
    %510 = vmatmul.bf16.gmra.mxu0 %v212
    %v511 = vpop.f32.mrf.mxu0
    %v512 = vadd.f32 %v170, %v511
    %v513 = vpop.f32.mrf.mxu0
    %v514 = vadd.f32 %v170, %v513
    %515 = vmatmul.bf16.gmra.mxu0 %v213
    %v516 = vpop.f32.mrf.mxu0
    %v517 = vadd.f32 %v170, %v516
    %v518 = vpop.f32.mrf.mxu0
    %v519 = vadd.f32 %v170, %v518
    %520 = vmatmul.bf16.gmra.mxu0 %v214
    %v521 = vpop.f32.mrf.mxu0
    %v522 = vadd.f32 %v170, %v521
    %v523 = vpop.f32.mrf.mxu0
    %v524 = vadd.f32 %v170, %v523
    %525 = vmatmul.bf16.gmra.mxu0 %v215
    %v526 = vpop.f32.mrf.mxu0
    %v527 = vadd.f32 %v170, %v526
    %v528 = vpop.f32.mrf.mxu0
    %v529 = vadd.f32 %v170, %v528
    %530 = vdwg.mxu0
    %531 = vmatpush.bf16.msra.mxu0 %v351
    %532 = vmatpush.bf16.msra.mxu0 %v347
    %533 = vmatpush.bf16.msra.mxu0 %v343
    %534 = vmatpush.bf16.msra.mxu0 %v339
    %535 = vmatpush.bf16.msra.mxu0 %v335
    %536 = vmatpush.bf16.msra.mxu0 %v331
    %537 = vmatpush.bf16.msra.mxu0 %v327
    %538 = vmatpush.bf16.msra.mxu0 %v323
    %539 = vmatmul.bf16.gmra.mxu0 %v208
    %v540 = vpop.f32.mrf.mxu0
    %v541 = vadd.f32 %v171, %v540
    %v542 = vpop.f32.mrf.mxu0
    %v543 = vadd.f32 %v171, %v542
    %544 = vmatmul.bf16.gmra.mxu0 %v209
    %v545 = vpop.f32.mrf.mxu0
    %v546 = vadd.f32 %v171, %v545
    %v547 = vpop.f32.mrf.mxu0
    %v548 = vadd.f32 %v171, %v547
    %549 = vmatmul.bf16.gmra.mxu0 %v210
    %v550 = vpop.f32.mrf.mxu0
    %v551 = vadd.f32 %v171, %v550
    %v552 = vpop.f32.mrf.mxu0
    %v553 = vadd.f32 %v171, %v552
    %554 = vmatmul.bf16.gmra.mxu0 %v211
    %v555 = vpop.f32.mrf.mxu0
    %v556 = vadd.f32 %v171, %v555
    %v557 = vpop.f32.mrf.mxu0
    %v558 = vadd.f32 %v171, %v557
    %559 = vmatmul.bf16.gmra.mxu0 %v212
    %v560 = vpop.f32.mrf.mxu0
    %v561 = vadd.f32 %v171, %v560
    %v562 = vpop.f32.mrf.mxu0
    %v563 = vadd.f32 %v171, %v562
    %564 = vmatmul.bf16.gmra.mxu0 %v213
    %v565 = vpop.f32.mrf.mxu0
    %v566 = vadd.f32 %v171, %v565
    %v567 = vpop.f32.mrf.mxu0
    %v568 = vadd.f32 %v171, %v567
    %569 = vmatmul.bf16.gmra.mxu0 %v214
    %v570 = vpop.f32.mrf.mxu0
    %v571 = vadd.f32 %v171, %v570
    %v572 = vpop.f32.mrf.mxu0
    %v573 = vadd.f32 %v171, %v572
    %574 = vmatmul.bf16.gmra.mxu0 %v215
    %v575 = vpop.f32.mrf.mxu0
    %v576 = vadd.f32 %v171, %v575
    %v577 = vpop.f32.mrf.mxu0
    %v578 = vadd.f32 %v171, %v577
    %579 = vdwg.mxu0
    %580 = vst [vmem:[#allocation2] sm:$0xff] %v394
    %581 = vst [vmem:[#allocation2 + $0x8] sm:$0xff] %v443
    %582 = vst [vmem:[#allocation2 + $0x10] sm:$0xff] %v492
    %583 = vst [vmem:[#allocation2 + $0x18] sm:$0xff] %v541
    %584 = vst [vmem:[#allocation2 + $0x20] sm:$0xff] %v396
    %585 = vst [vmem:[#allocation2 + $0x28] sm:$0xff] %v445
    %586 = vst [vmem:[#allocation2 + $0x30] sm:$0xff] %v494
    %587 = vst [vmem:[#allocation2 + $0x38] sm:$0xff] %v543
    %588 = vst [vmem:[#allocation2 + $0x40] sm:$0xff] %v399
    %589 = vst [vmem:[#allocation2 + $0x48] sm:$0xff] %v448
    %590 = vst [vmem:[#allocation2 + $0x50] sm:$0xff] %v497
    %591 = vst [vmem:[#allocation2 + $0x58] sm:$0xff] %v546
    %592 = vst [vmem:[#allocation2 + $0x60] sm:$0xff] %v401
    %593 = vst [vmem:[#allocation2 + $0x68] sm:$0xff] %v450
    %594 = vst [vmem:[#allocation2 + $0x70] sm:$0xff] %v499
    %595 = vst [vmem:[#allocation2 + $0x78] sm:$0xff] %v548
    %596 = vst [vmem:[#allocation2 + $0x80] sm:$0xff] %v404
    %597 = vst [vmem:[#allocation2 + $0x88] sm:$0xff] %v453
    %598 = vst [vmem:[#allocation2 + $0x90] sm:$0xff] %v502
    %599 = vst [vmem:[#allocation2 + $0x98] sm:$0xff] %v551
    %600 = vst [vmem:[#allocation2 + $0xa0] sm:$0xff] %v406
    %601 = vst [vmem:[#allocation2 + $0xa8] sm:$0xff] %v455
    %602 = vst [vmem:[#allocation2 + $0xb0] sm:$0xff] %v504
    %603 = vst [vmem:[#allocation2 + $0xb8] sm:$0xff] %v553
    %604 = vst [vmem:[#allocation2 + $0xc0] sm:$0xff] %v409
    %605 = vst [vmem:[#allocation2 + $0xc8] sm:$0xff] %v458
    %606 = vst [vmem:[#allocation2 + $0xd0] sm:$0xff] %v507
    %607 = vst [vmem:[#allocation2 + $0xd8] sm:$0xff] %v556
    %608 = vst [vmem:[#allocation2 + $0xe0] sm:$0xff] %v411
    %609 = vst [vmem:[#allocation2 + $0xe8] sm:$0xff] %v460
    %610 = vst [vmem:[#allocation2 + $0xf0] sm:$0xff] %v509
    %611 = vst [vmem:[#allocation2 + $0xf8] sm:$0xff] %v558
    %612 = vst [vmem:[#allocation2 + $0x100] sm:$0xff] %v414
    %613 = vst [vmem:[#allocation2 + $0x108] sm:$0xff] %v463
    %614 = vst [vmem:[#allocation2 + $0x110] sm:$0xff] %v512
    %615 = vst [vmem:[#allocation2 + $0x118] sm:$0xff] %v561
    %616 = vst [vmem:[#allocation2 + $0x120] sm:$0xff] %v416
    %617 = vst [vmem:[#allocation2 + $0x128] sm:$0xff] %v465
    %618 = vst [vmem:[#allocation2 + $0x130] sm:$0xff] %v514
    %619 = vst [vmem:[#allocation2 + $0x138] sm:$0xff] %v563
    %620 = vst [vmem:[#allocation2 + $0x140] sm:$0xff] %v419
    %621 = vst [vmem:[#allocation2 + $0x148] sm:$0xff] %v468
    %622 = vst [vmem:[#allocation2 + $0x150] sm:$0xff] %v517
    %623 = vst [vmem:[#allocation2 + $0x158] sm:$0xff] %v566
    %624 = vst [vmem:[#allocation2 + $0x160] sm:$0xff] %v421
    %625 = vst [vmem:[#allocation2 + $0x168] sm:$0xff] %v470
    %626 = vst [vmem:[#allocation2 + $0x170] sm:$0xff] %v519
    %627 = vst [vmem:[#allocation2 + $0x178] sm:$0xff] %v568
    %628 = vst [vmem:[#allocation2 + $0x180] sm:$0xff] %v424
    %629 = vst [vmem:[#allocation2 + $0x188] sm:$0xff] %v473
    %630 = vst [vmem:[#allocation2 + $0x190] sm:$0xff] %v522
    %631 = vst [vmem:[#allocation2 + $0x198] sm:$0xff] %v571
    %632 = vst [vmem:[#allocation2 + $0x1a0] sm:$0xff] %v426
    %633 = vst [vmem:[#allocation2 + $0x1a8] sm:$0xff] %v475
    %634 = vst [vmem:[#allocation2 + $0x1b0] sm:$0xff] %v524
    %635 = vst [vmem:[#allocation2 + $0x1b8] sm:$0xff] %v573
    %636 = vst [vmem:[#allocation2 + $0x1c0] sm:$0xff] %v429
    %637 = vst [vmem:[#allocation2 + $0x1c8] sm:$0xff] %v478
    %638 = vst [vmem:[#allocation2 + $0x1d0] sm:$0xff] %v527
    %639 = vst [vmem:[#allocation2 + $0x1d8] sm:$0xff] %v576
    %640 = vst [vmem:[#allocation2 + $0x1e0] sm:$0xff] %v431
    %641 = vst [vmem:[#allocation2 + $0x1e8] sm:$0xff] %v480
    %642 = vst [vmem:[#allocation2 + $0x1f0] sm:$0xff] %v529
    %643 = vst [vmem:[#allocation2 + $0x1f8] sm:$0xff] %v578
    %v644 = vld [vmem:[#allocation9] sm:$0xff]
    %v645 = vld [vmem:[#allocation9 + $0x8] sm:$0xff]
    %v646 = vld [vmem:[#allocation9 + $0x10] sm:$0xff]
    %v647 = vld [vmem:[#allocation9 + $0x18] sm:$0xff]
    %v648 = vld [vmem:[#allocation9 + $0x20] sm:$0xff]
    %v649 = vld [vmem:[#allocation9 + $0x28] sm:$0xff]
    %v650 = vld [vmem:[#allocation9 + $0x30] sm:$0xff]
    %v651 = vld [vmem:[#allocation9 + $0x38] sm:$0xff]
    %v652 = vld [vmem:[#allocation9 + $0x40] sm:$0xff]
    %v653 = vld [vmem:[#allocation9 + $0x48] sm:$0xff]
    %v654 = vld [vmem:[#allocation9 + $0x50] sm:$0xff]
    %v655 = vld [vmem:[#allocation9 + $0x58] sm:$0xff]
    %v656 = vld [vmem:[#allocation9 + $0x60] sm:$0xff]
    %v657 = vld [vmem:[#allocation9 + $0x68] sm:$0xff]
    %v658 = vld [vmem:[#allocation9 + $0x70] sm:$0xff]
    %v659 = vld [vmem:[#allocation9 + $0x78] sm:$0xff]
    %v660 = vld [vmem:[#allocation9 + $0x80] sm:$0xff]
    %v661 = vld [vmem:[#allocation9 + $0x88] sm:$0xff]
    %v662 = vld [vmem:[#allocation9 + $0x90] sm:$0xff]
    %v663 = vld [vmem:[#allocation9 + $0x98] sm:$0xff]
    %v664 = vld [vmem:[#allocation9 + $0xa0] sm:$0xff]
    %v665 = vld [vmem:[#allocation9 + $0xa8] sm:$0xff]
    %v666 = vld [vmem:[#allocation9 + $0xb0] sm:$0xff]
    %v667 = vld [vmem:[#allocation9 + $0xb8] sm:$0xff]
    %v668 = vld [vmem:[#allocation9 + $0xc0] sm:$0xff]
    %v669 = vld [vmem:[#allocation9 + $0xc8] sm:$0xff]
    %v670 = vld [vmem:[#allocation9 + $0xd0] sm:$0xff]
    %v671 = vld [vmem:[#allocation9 + $0xd8] sm:$0xff]
    %v672 = vld [vmem:[#allocation9 + $0xe0] sm:$0xff]
    %v673 = vld [vmem:[#allocation9 + $0xe8] sm:$0xff]
    %v674 = vld [vmem:[#allocation9 + $0xf0] sm:$0xff]
    %v675 = vld [vmem:[#allocation9 + $0xf8] sm:$0xff]
    %v676 = vld [vmem:[#allocation9 + $0x100] sm:$0xff]
    %v677 = vld [vmem:[#allocation9 + $0x108] sm:$0xff]
    %v678 = vld [vmem:[#allocation9 + $0x110] sm:$0xff]
    %v679 = vld [vmem:[#allocation9 + $0x118] sm:$0xff]
    %v680 = vld [vmem:[#allocation9 + $0x120] sm:$0xff]
    %v681 = vld [vmem:[#allocation9 + $0x128] sm:$0xff]
    %v682 = vld [vmem:[#allocation9 + $0x130] sm:$0xff]
    %v683 = vld [vmem:[#allocation9 + $0x138] sm:$0xff]
    %v684 = vld [vmem:[#allocation9 + $0x140] sm:$0xff]
    %v685 = vld [vmem:[#allocation9 + $0x148] sm:$0xff]
    %v686 = vld [vmem:[#allocation9 + $0x150] sm:$0xff]
    %v687 = vld [vmem:[#allocation9 + $0x158] sm:$0xff]
    %v688 = vld [vmem:[#allocation9 + $0x160] sm:$0xff]
    %v689 = vld [vmem:[#allocation9 + $0x168] sm:$0xff]
    %v690 = vld [vmem:[#allocation9 + $0x170] sm:$0xff]
    %v691 = vld [vmem:[#allocation9 + $0x178] sm:$0xff]
    %v692 = vld [vmem:[#allocation9 + $0x180] sm:$0xff]
    %v693 = vld [vmem:[#allocation9 + $0x188] sm:$0xff]
    %v694 = vld [vmem:[#allocation9 + $0x190] sm:$0xff]
    %v695 = vld [vmem:[#allocation9 + $0x198] sm:$0xff]
    %v696 = vld [vmem:[#allocation9 + $0x1a0] sm:$0xff]
    %v697 = vld [vmem:[#allocation9 + $0x1a8] sm:$0xff]
    %v698 = vld [vmem:[#allocation9 + $0x1b0] sm:$0xff]
    %v699 = vld [vmem:[#allocation9 + $0x1b8] sm:$0xff]
    %v700 = vld [vmem:[#allocation9 + $0x1c0] sm:$0xff]
    %v701 = vld [vmem:[#allocation9 + $0x1c8] sm:$0xff]
    %v702 = vld [vmem:[#allocation9 + $0x1d0] sm:$0xff]
    %v703 = vld [vmem:[#allocation9 + $0x1d8] sm:$0xff]
    %v704 = vld [vmem:[#allocation9 + $0x1e0] sm:$0xff]
    %v705 = vld [vmem:[#allocation9 + $0x1e8] sm:$0xff]
    %v706 = vld [vmem:[#allocation9 + $0x1f0] sm:$0xff]
    %v707 = vld [vmem:[#allocation9 + $0x1f8] sm:$0xff]
    %v708 = vld [vmem:[#allocation9 + $0x200] sm:$0xff]
    %v709 = vld [vmem:[#allocation9 + $0x208] sm:$0xff]
    %v710 = vld [vmem:[#allocation9 + $0x210] sm:$0xff]
    %v711 = vld [vmem:[#allocation9 + $0x218] sm:$0xff]
    %v712 = vld [vmem:[#allocation9 + $0x220] sm:$0xff]
    %v713 = vld [vmem:[#allocation9 + $0x228] sm:$0xff]
    %v714 = vld [vmem:[#allocation9 + $0x230] sm:$0xff]
    %v715 = vld [vmem:[#allocation9 + $0x238] sm:$0xff]
    %v716 = vld [vmem:[#allocation9 + $0x240] sm:$0xff]
    %v717 = vld [vmem:[#allocation9 + $0x248] sm:$0xff]
    %v718 = vld [vmem:[#allocation9 + $0x250] sm:$0xff]
    %v719 = vld [vmem:[#allocation9 + $0x258] sm:$0xff]
    %v720 = vld [vmem:[#allocation9 + $0x260] sm:$0xff]
    %v721 = vld [vmem:[#allocation9 + $0x268] sm:$0xff]
    %v722 = vld [vmem:[#allocation9 + $0x270] sm:$0xff]
    %v723 = vld [vmem:[#allocation9 + $0x278] sm:$0xff]
    %v724 = vld [vmem:[#allocation9 + $0x280] sm:$0xff]
    %v725 = vld [vmem:[#allocation9 + $0x288] sm:$0xff]
    %v726 = vld [vmem:[#allocation9 + $0x290] sm:$0xff]
    %v727 = vld [vmem:[#allocation9 + $0x298] sm:$0xff]
    %v728 = vld [vmem:[#allocation9 + $0x2a0] sm:$0xff]
    %v729 = vld [vmem:[#allocation9 + $0x2a8] sm:$0xff]
    %v730 = vld [vmem:[#allocation9 + $0x2b0] sm:$0xff]
    %v731 = vld [vmem:[#allocation9 + $0x2b8] sm:$0xff]
    %v732 = vld [vmem:[#allocation9 + $0x2c0] sm:$0xff]
    %v733 = vld [vmem:[#allocation9 + $0x2c8] sm:$0xff]
    %v734 = vld [vmem:[#allocation9 + $0x2d0] sm:$0xff]
    %v735 = vld [vmem:[#allocation9 + $0x2d8] sm:$0xff]
    %v736 = vld [vmem:[#allocation9 + $0x2e0] sm:$0xff]
    %v737 = vld [vmem:[#allocation9 + $0x2e8] sm:$0xff]
    %v738 = vld [vmem:[#allocation9 + $0x2f0] sm:$0xff]
    %v739 = vld [vmem:[#allocation9 + $0x2f8] sm:$0xff]
    %v740 = vld [vmem:[#allocation9 + $0x300] sm:$0xff]
    %v741 = vld [vmem:[#allocation9 + $0x308] sm:$0xff]
    %v742 = vld [vmem:[#allocation9 + $0x310] sm:$0xff]
    %v743 = vld [vmem:[#allocation9 + $0x318] sm:$0xff]
    %v744 = vld [vmem:[#allocation9 + $0x320] sm:$0xff]
    %v745 = vld [vmem:[#allocation9 + $0x328] sm:$0xff]
    %v746 = vld [vmem:[#allocation9 + $0x330] sm:$0xff]
    %v747 = vld [vmem:[#allocation9 + $0x338] sm:$0xff]
    %v748 = vld [vmem:[#allocation9 + $0x340] sm:$0xff]
    %v749 = vld [vmem:[#allocation9 + $0x348] sm:$0xff]
    %v750 = vld [vmem:[#allocation9 + $0x350] sm:$0xff]
    %v751 = vld [vmem:[#allocation9 + $0x358] sm:$0xff]
    %v752 = vld [vmem:[#allocation9 + $0x360] sm:$0xff]
    %v753 = vld [vmem:[#allocation9 + $0x368] sm:$0xff]
    %v754 = vld [vmem:[#allocation9 + $0x370] sm:$0xff]
    %v755 = vld [vmem:[#allocation9 + $0x378] sm:$0xff]
    %v756 = vld [vmem:[#allocation9 + $0x380] sm:$0xff]
    %v757 = vld [vmem:[#allocation9 + $0x388] sm:$0xff]
    %v758 = vld [vmem:[#allocation9 + $0x390] sm:$0xff]
    %v759 = vld [vmem:[#allocation9 + $0x398] sm:$0xff]
    %v760 = vld [vmem:[#allocation9 + $0x3a0] sm:$0xff]
    %v761 = vld [vmem:[#allocation9 + $0x3a8] sm:$0xff]
    %v762 = vld [vmem:[#allocation9 + $0x3b0] sm:$0xff]
    %v763 = vld [vmem:[#allocation9 + $0x3b8] sm:$0xff]
    %v764 = vld [vmem:[#allocation9 + $0x3c0] sm:$0xff]
    %v765 = vld [vmem:[#allocation9 + $0x3c8] sm:$0xff]
    %v766 = vld [vmem:[#allocation9 + $0x3d0] sm:$0xff]
    %v767 = vld [vmem:[#allocation9 + $0x3d8] sm:$0xff]
    %v768 = vld [vmem:[#allocation9 + $0x3e0] sm:$0xff]
    %v769 = vld [vmem:[#allocation9 + $0x3e8] sm:$0xff]
    %v770 = vld [vmem:[#allocation9 + $0x3f0] sm:$0xff]
    %v771 = vld [vmem:[#allocation9 + $0x3f8] sm:$0xff]
    %v772 = vld [vmem:[#allocation11] sm:$0xf]
    %v774 = vperm.slane %v772, 0
    %v775 = vperm.slane %v772, 1
    %v776 = vperm.slane %v772, 2
    %v777 = vperm.slane %v772, 3
    %v782 = vld [vmem:[#allocation2] sm:$0xff]
    %v783 = vld [vmem:[#allocation2 + $0x8] sm:$0xff]
    %v784 = vld [vmem:[#allocation2 + $0x10] sm:$0xff]
    %v785 = vld [vmem:[#allocation2 + $0x18] sm:$0xff]
    %v786 = vld [vmem:[#allocation2 + $0x20] sm:$0xff]
    %v787 = vld [vmem:[#allocation2 + $0x28] sm:$0xff]
    %v788 = vld [vmem:[#allocation2 + $0x30] sm:$0xff]
    %v789 = vld [vmem:[#allocation2 + $0x38] sm:$0xff]
    %v790 = vxor.u32 %v782, 2147483648
    %v791 = vxor.u32 %v786, 2147483648
    %v792 = vmul.f32 %v790, 1.442695
    %v793 = vpow.pop %v792
    %v794 = vmul.f32 %v791, 1.442695
    %v795 = vpow.pop %v794
    %v796 = vadd.f32 %v793, 1.0
    %v797 = vadd.f32 %v795, 1.0
    %v798 = vrcp.pop %v796
    %v799 = vmul.f32 %v796, %v798
    %v800 = vsub.f32 1.0, %v799
    %v801 = vmul.f32 %v798, %v800
    %v802 = vadd.f32 %v798, %v801
    %vm803 = vweird.f32 %v796
    %vm804 = vweird.f32 %v798
    %vm805 = vmor %vm803, %vm804
    %v806 = vsel %vm805, %v798, %v802
    %v807 = vand.u32 2147483647, %v796
    %vm808 = vcmp.eq.f32.partialorder %v807, 8.507059e+37
    %v809 = vand.u32 %v796, 2147483648
    %v810 = vor.u32 1.1754944e-38, %v809
    %v811 = vsel %vm808, %v810, %v806
    %v812 = vmul.f32 1.0, %v811
    %v813 = vrcp.pop %v797
    %v814 = vmul.f32 %v797, %v813
    %v815 = vsub.f32 1.0, %v814
    %v816 = vmul.f32 %v813, %v815
    %v817 = vadd.f32 %v813, %v816
    %vm818 = vweird.f32 %v797
    %vm819 = vweird.f32 %v813
    %vm820 = vmor %vm818, %vm819
    %v821 = vsel %vm820, %v813, %v817
    %v822 = vand.u32 2147483647, %v797
    %vm823 = vcmp.eq.f32.partialorder %v822, 8.507059e+37
    %v824 = vand.u32 %v797, 2147483648
    %v825 = vor.u32 1.1754944e-38, %v824
    %v826 = vsel %vm823, %v825, %v821
    %v827 = vmul.f32 1.0, %v826
    %v828 = vxor.u32 %v783, 2147483648
    %v829 = vxor.u32 %v787, 2147483648
    %v830 = vmul.f32 %v828, 1.442695
    %v831 = vpow.pop %v830
    %v832 = vmul.f32 %v829, 1.442695
    %v833 = vpow.pop %v832
    %v834 = vadd.f32 %v831, 1.0
    %v835 = vadd.f32 %v833, 1.0
    %v836 = vrcp.pop %v834
    %v837 = vmul.f32 %v834, %v836
    %v838 = vsub.f32 1.0, %v837
    %v839 = vmul.f32 %v836, %v838
    %v840 = vadd.f32 %v836, %v839
    %vm841 = vweird.f32 %v834
    %vm842 = vweird.f32 %v836
    %vm843 = vmor %vm841, %vm842
    %v844 = vsel %vm843, %v836, %v840
    %v845 = vand.u32 2147483647, %v834
    %vm846 = vcmp.eq.f32.partialorder %v845, 8.507059e+37
    %v847 = vand.u32 %v834, 2147483648
    %v848 = vor.u32 1.1754944e-38, %v847
    %v849 = vsel %vm846, %v848, %v844
    %v850 = vmul.f32 1.0, %v849
    %v851 = vrcp.pop %v835
    %v852 = vmul.f32 %v835, %v851
    %v853 = vsub.f32 1.0, %v852
    %v854 = vmul.f32 %v851, %v853
    %v855 = vadd.f32 %v851, %v854
    %vm856 = vweird.f32 %v835
    %vm857 = vweird.f32 %v851
    %vm858 = vmor %vm856, %vm857
    %v859 = vsel %vm858, %v851, %v855
    %v860 = vand.u32 2147483647, %v835
    %vm861 = vcmp.eq.f32.partialorder %v860, 8.507059e+37
    %v862 = vand.u32 %v835, 2147483648
    %v863 = vor.u32 1.1754944e-38, %v862
    %v864 = vsel %vm861, %v863, %v859
    %v865 = vmul.f32 1.0, %v864
    %v866 = vtanh.pop %v784
    %v867 = vtanh.pop %v788
    %v868 = vxor.u32 %v785, 2147483648
    %v869 = vxor.u32 %v789, 2147483648
    %v870 = vmul.f32 %v868, 1.442695
    %v871 = vpow.pop %v870
    %v872 = vmul.f32 %v869, 1.442695
    %v873 = vpow.pop %v872
    %v874 = vadd.f32 %v871, 1.0
    %v875 = vadd.f32 %v873, 1.0
    %v876 = vrcp.pop %v874
    %v877 = vmul.f32 %v874, %v876
    %v878 = vsub.f32 1.0, %v877
    %v879 = vmul.f32 %v876, %v878
    %v880 = vadd.f32 %v876, %v879
    %vm881 = vweird.f32 %v874
    %vm882 = vweird.f32 %v876
    %vm883 = vmor %vm881, %vm882
    %v884 = vsel %vm883, %v876, %v880
    %v885 = vand.u32 2147483647, %v874
    %vm886 = vcmp.eq.f32.partialorder %v885, 8.507059e+37
    %v887 = vand.u32 %v874, 2147483648
    %v888 = vor.u32 1.1754944e-38, %v887
    %v889 = vsel %vm886, %v888, %v884
    %v890 = vmul.f32 1.0, %v889
    %v891 = vrcp.pop %v875
    %v892 = vmul.f32 %v875, %v891
    %v893 = vsub.f32 1.0, %v892
    %v894 = vmul.f32 %v891, %v893
    %v895 = vadd.f32 %v891, %v894
    %vm896 = vweird.f32 %v875
    %vm897 = vweird.f32 %v891
    %vm898 = vmor %vm896, %vm897
    %v899 = vsel %vm898, %v891, %v895
    %v900 = vand.u32 2147483647, %v875
    %vm901 = vcmp.eq.f32.partialorder %v900, 8.507059e+37
    %v902 = vand.u32 %v875, 2147483648
    %v903 = vor.u32 1.1754944e-38, %v902
    %v904 = vsel %vm901, %v903, %v899
    %v905 = vmul.f32 1.0, %v904
    %v906 = vmul.f32 %v850, 0.0
    %v907 = vmul.f32 %v865, 0.0
    %v908 = vmul.f32 %v812, %v866
    %v909 = vmul.f32 %v827, %v867
    %v910 = vadd.f32 %v906, %v908
    %v911 = vadd.f32 %v907, %v909
    %v912 = vtanh.pop %v910
    %v913 = vtanh.pop %v911
    %v914 = vmul.f32 %v890, %v912
    %v915 = vmul.f32 %v905, %v913
    %v916 = vpack.c.bf16 %v914, %v914
    %v917 = vpack.c.bf16 %v915, %v915
    %v920 = vunpack.c.l.b16 %v916
    %v921 = vunpack.c.l.b16 %v917
    %v922 = vpack.c.b16 %v921, %v920
    %v1052 = vunpack.c.l.b16 %v644
    %v1053 = vunpack.c.h.b16 %v644
    %v1054 = vunpack.c.l.b16 %v645
    %v1055 = vunpack.c.h.b16 %v645
    %v1056 = vunpack.c.l.b16 %v646
    %v1057 = vunpack.c.h.b16 %v646
    %v1058 = vunpack.c.l.b16 %v647
    %v1059 = vunpack.c.h.b16 %v647
    %v1060 = vunpack.c.l.b16 %v648
    %v1061 = vunpack.c.h.b16 %v648
    %v1062 = vunpack.c.l.b16 %v649
    %v1063 = vunpack.c.h.b16 %v649
    %v1064 = vunpack.c.l.b16 %v650
    %v1065 = vunpack.c.h.b16 %v650
    %v1066 = vunpack.c.l.b16 %v651
    %v1067 = vunpack.c.h.b16 %v651
    %v1068 = vunpack.c.l.b16 %v652
    %v1069 = vunpack.c.h.b16 %v652
    %v1070 = vunpack.c.l.b16 %v653
    %v1071 = vunpack.c.h.b16 %v653
    %v1072 = vunpack.c.l.b16 %v654
    %v1073 = vunpack.c.h.b16 %v654
    %v1074 = vunpack.c.l.b16 %v655
    %v1075 = vunpack.c.h.b16 %v655
    %v1076 = vunpack.c.l.b16 %v656
    %v1077 = vunpack.c.h.b16 %v656
    %v1078 = vunpack.c.l.b16 %v657
    %v1079 = vunpack.c.h.b16 %v657
    %v1080 = vunpack.c.l.b16 %v658
    %v1081 = vunpack.c.h.b16 %v658
    %v1082 = vunpack.c.l.b16 %v659
    %v1083 = vunpack.c.h.b16 %v659
    %v1084 = vunpack.c.l.b16 %v660
    %v1085 = vunpack.c.h.b16 %v660
    %v1086 = vunpack.c.l.b16 %v661
    %v1087 = vunpack.c.h.b16 %v661
    %v1088 = vunpack.c.l.b16 %v662
    %v1089 = vunpack.c.h.b16 %v662
    %v1090 = vunpack.c.l.b16 %v663
    %v1091 = vunpack.c.h.b16 %v663
    %v1092 = vunpack.c.l.b16 %v664
    %v1093 = vunpack.c.h.b16 %v664
    %v1094 = vunpack.c.l.b16 %v665
    %v1095 = vunpack.c.h.b16 %v665
    %v1096 = vunpack.c.l.b16 %v666
    %v1097 = vunpack.c.h.b16 %v666
    %v1098 = vunpack.c.l.b16 %v667
    %v1099 = vunpack.c.h.b16 %v667
    %v1100 = vunpack.c.l.b16 %v668
    %v1101 = vunpack.c.h.b16 %v668
    %v1102 = vunpack.c.l.b16 %v669
    %v1103 = vunpack.c.h.b16 %v669
    %v1104 = vunpack.c.l.b16 %v670
    %v1105 = vunpack.c.h.b16 %v670
    %v1106 = vunpack.c.l.b16 %v671
    %v1107 = vunpack.c.h.b16 %v671
    %v1108 = vunpack.c.l.b16 %v672
    %v1109 = vunpack.c.h.b16 %v672
    %v1110 = vunpack.c.l.b16 %v673
    %v1111 = vunpack.c.h.b16 %v673
    %v1112 = vunpack.c.l.b16 %v674
    %v1113 = vunpack.c.h.b16 %v674
    %v1114 = vunpack.c.l.b16 %v675
    %v1115 = vunpack.c.h.b16 %v675
    %v1116 = vunpack.c.l.b16 %v676
    %v1117 = vunpack.c.h.b16 %v676
    %v1118 = vunpack.c.l.b16 %v677
    %v1119 = vunpack.c.h.b16 %v677
    %v1120 = vunpack.c.l.b16 %v678
    %v1121 = vunpack.c.h.b16 %v678
    %v1122 = vunpack.c.l.b16 %v679
    %v1123 = vunpack.c.h.b16 %v679
    %v1124 = vunpack.c.l.b16 %v680
    %v1125 = vunpack.c.h.b16 %v680
    %v1126 = vunpack.c.l.b16 %v681
    %v1127 = vunpack.c.h.b16 %v681
    %v1128 = vunpack.c.l.b16 %v682
    %v1129 = vunpack.c.h.b16 %v682
    %v1130 = vunpack.c.l.b16 %v683
    %v1131 = vunpack.c.h.b16 %v683
    %v1132 = vunpack.c.l.b16 %v684
    %v1133 = vunpack.c.h.b16 %v684
    %v1134 = vunpack.c.l.b16 %v685
    %v1135 = vunpack.c.h.b16 %v685
    %v1136 = vunpack.c.l.b16 %v686
    %v1137 = vunpack.c.h.b16 %v686
    %v1138 = vunpack.c.l.b16 %v687
    %v1139 = vunpack.c.h.b16 %v687
    %v1140 = vunpack.c.l.b16 %v688
    %v1141 = vunpack.c.h.b16 %v688
    %v1142 = vunpack.c.l.b16 %v689
    %v1143 = vunpack.c.h.b16 %v689
    %v1144 = vunpack.c.l.b16 %v690
    %v1145 = vunpack.c.h.b16 %v690
    %v1146 = vunpack.c.l.b16 %v691
    %v1147 = vunpack.c.h.b16 %v691
    %v1148 = vunpack.c.l.b16 %v692
    %v1149 = vunpack.c.h.b16 %v692
    %v1150 = vunpack.c.l.b16 %v693
    %v1151 = vunpack.c.h.b16 %v693
    %v1152 = vunpack.c.l.b16 %v694
    %v1153 = vunpack.c.h.b16 %v694
    %v1154 = vunpack.c.l.b16 %v695
    %v1155 = vunpack.c.h.b16 %v695
    %v1156 = vunpack.c.l.b16 %v696
    %v1157 = vunpack.c.h.b16 %v696
    %v1158 = vunpack.c.l.b16 %v697
    %v1159 = vunpack.c.h.b16 %v697
    %v1160 = vunpack.c.l.b16 %v698
    %v1161 = vunpack.c.h.b16 %v698
    %v1162 = vunpack.c.l.b16 %v699
    %v1163 = vunpack.c.h.b16 %v699
    %v1164 = vunpack.c.l.b16 %v700
    %v1165 = vunpack.c.h.b16 %v700
    %v1166 = vunpack.c.l.b16 %v701
    %v1167 = vunpack.c.h.b16 %v701
    %v1168 = vunpack.c.l.b16 %v702
    %v1169 = vunpack.c.h.b16 %v702
    %v1170 = vunpack.c.l.b16 %v703
    %v1171 = vunpack.c.h.b16 %v703
    %v1172 = vunpack.c.l.b16 %v704
    %v1173 = vunpack.c.h.b16 %v704
    %v1174 = vunpack.c.l.b16 %v705
    %v1175 = vunpack.c.h.b16 %v705
    %v1176 = vunpack.c.l.b16 %v706
    %v1177 = vunpack.c.h.b16 %v706
    %v1178 = vunpack.c.l.b16 %v707
    %v1179 = vunpack.c.h.b16 %v707
    %v1180 = vunpack.c.l.b16 %v708
    %v1181 = vunpack.c.h.b16 %v708
    %v1182 = vunpack.c.l.b16 %v709
    %v1183 = vunpack.c.h.b16 %v709
    %v1184 = vunpack.c.l.b16 %v710
    %v1185 = vunpack.c.h.b16 %v710
    %v1186 = vunpack.c.l.b16 %v711
    %v1187 = vunpack.c.h.b16 %v711
    %v1188 = vunpack.c.l.b16 %v712
    %v1189 = vunpack.c.h.b16 %v712
    %v1190 = vunpack.c.l.b16 %v713
    %v1191 = vunpack.c.h.b16 %v713
    %v1192 = vunpack.c.l.b16 %v714
    %v1193 = vunpack.c.h.b16 %v714
    %v1194 = vunpack.c.l.b16 %v715
    %v1195 = vunpack.c.h.b16 %v715
    %v1196 = vunpack.c.l.b16 %v716
    %v1197 = vunpack.c.h.b16 %v716
    %v1198 = vunpack.c.l.b16 %v717
    %v1199 = vunpack.c.h.b16 %v717
    %v1200 = vunpack.c.l.b16 %v718
    %v1201 = vunpack.c.h.b16 %v718
    %v1202 = vunpack.c.l.b16 %v719
    %v1203 = vunpack.c.h.b16 %v719
    %v1204 = vunpack.c.l.b16 %v720
    %v1205 = vunpack.c.h.b16 %v720
    %v1206 = vunpack.c.l.b16 %v721
    %v1207 = vunpack.c.h.b16 %v721
    %v1208 = vunpack.c.l.b16 %v722
    %v1209 = vunpack.c.h.b16 %v722
    %v1210 = vunpack.c.l.b16 %v723
    %v1211 = vunpack.c.h.b16 %v723
    %v1212 = vunpack.c.l.b16 %v724
    %v1213 = vunpack.c.h.b16 %v724
    %v1214 = vunpack.c.l.b16 %v725
    %v1215 = vunpack.c.h.b16 %v725
    %v1216 = vunpack.c.l.b16 %v726
    %v1217 = vunpack.c.h.b16 %v726
    %v1218 = vunpack.c.l.b16 %v727
    %v1219 = vunpack.c.h.b16 %v727
    %v1220 = vunpack.c.l.b16 %v728
    %v1221 = vunpack.c.h.b16 %v728
    %v1222 = vunpack.c.l.b16 %v729
    %v1223 = vunpack.c.h.b16 %v729
    %v1224 = vunpack.c.l.b16 %v730
    %v1225 = vunpack.c.h.b16 %v730
    %v1226 = vunpack.c.l.b16 %v731
    %v1227 = vunpack.c.h.b16 %v731
    %v1228 = vunpack.c.l.b16 %v732
    %v1229 = vunpack.c.h.b16 %v732
    %v1230 = vunpack.c.l.b16 %v733
    %v1231 = vunpack.c.h.b16 %v733
    %v1232 = vunpack.c.l.b16 %v734
    %v1233 = vunpack.c.h.b16 %v734
    %v1234 = vunpack.c.l.b16 %v735
    %v1235 = vunpack.c.h.b16 %v735
    %v1236 = vunpack.c.l.b16 %v736
    %v1237 = vunpack.c.h.b16 %v736
    %v1238 = vunpack.c.l.b16 %v737
    %v1239 = vunpack.c.h.b16 %v737
    %v1240 = vunpack.c.l.b16 %v738
    %v1241 = vunpack.c.h.b16 %v738
    %v1242 = vunpack.c.l.b16 %v739
    %v1243 = vunpack.c.h.b16 %v739
    %v1244 = vunpack.c.l.b16 %v740
    %v1245 = vunpack.c.h.b16 %v740
    %v1246 = vunpack.c.l.b16 %v741
    %v1247 = vunpack.c.h.b16 %v741
    %v1248 = vunpack.c.l.b16 %v742
    %v1249 = vunpack.c.h.b16 %v742
    %v1250 = vunpack.c.l.b16 %v743
    %v1251 = vunpack.c.h.b16 %v743
    %v1252 = vunpack.c.l.b16 %v744
    %v1253 = vunpack.c.h.b16 %v744
    %v1254 = vunpack.c.l.b16 %v745
    %v1255 = vunpack.c.h.b16 %v745
    %v1256 = vunpack.c.l.b16 %v746
    %v1257 = vunpack.c.h.b16 %v746
    %v1258 = vunpack.c.l.b16 %v747
    %v1259 = vunpack.c.h.b16 %v747
    %v1260 = vunpack.c.l.b16 %v748
    %v1261 = vunpack.c.h.b16 %v748
    %v1262 = vunpack.c.l.b16 %v749
    %v1263 = vunpack.c.h.b16 %v749
    %v1264 = vunpack.c.l.b16 %v750
    %v1265 = vunpack.c.h.b16 %v750
    %v1266 = vunpack.c.l.b16 %v751
    %v1267 = vunpack.c.h.b16 %v751
    %v1268 = vunpack.c.l.b16 %v752
    %v1269 = vunpack.c.h.b16 %v752
    %v1270 = vunpack.c.l.b16 %v753
    %v1271 = vunpack.c.h.b16 %v753
    %v1272 = vunpack.c.l.b16 %v754
    %v1273 = vunpack.c.h.b16 %v754
    %v1274 = vunpack.c.l.b16 %v755
    %v1275 = vunpack.c.h.b16 %v755
    %v1276 = vunpack.c.l.b16 %v756
    %v1277 = vunpack.c.h.b16 %v756
    %v1278 = vunpack.c.l.b16 %v757
    %v1279 = vunpack.c.h.b16 %v757
    %v1280 = vunpack.c.l.b16 %v758
    %v1281 = vunpack.c.h.b16 %v758
    %v1282 = vunpack.c.l.b16 %v759
    %v1283 = vunpack.c.h.b16 %v759
    %v1284 = vunpack.c.l.b16 %v760
    %v1285 = vunpack.c.h.b16 %v760
    %v1286 = vunpack.c.l.b16 %v761
    %v1287 = vunpack.c.h.b16 %v761
    %v1288 = vunpack.c.l.b16 %v762
    %v1289 = vunpack.c.h.b16 %v762
    %v1290 = vunpack.c.l.b16 %v763
    %v1291 = vunpack.c.h.b16 %v763
    %v1292 = vunpack.c.l.b16 %v764
    %v1293 = vunpack.c.h.b16 %v764
    %v1294 = vunpack.c.l.b16 %v765
    %v1295 = vunpack.c.h.b16 %v765
    %v1296 = vunpack.c.l.b16 %v766
    %v1297 = vunpack.c.h.b16 %v766
    %v1298 = vunpack.c.l.b16 %v767
    %v1299 = vunpack.c.h.b16 %v767
    %v1300 = vunpack.c.l.b16 %v768
    %v1301 = vunpack.c.h.b16 %v768
    %v1302 = vunpack.c.l.b16 %v769
    %v1303 = vunpack.c.h.b16 %v769
    %v1304 = vunpack.c.l.b16 %v770
    %v1305 = vunpack.c.h.b16 %v770
    %v1306 = vunpack.c.l.b16 %v771
    %v1307 = vunpack.c.h.b16 %v771
    %v1308 = vpack.c.b16 %v1060, %v1052
    %v1309 = vpack.c.b16 %v1061, %v1053
    %v1310 = vpack.c.b16 %v1062, %v1054
    %v1311 = vpack.c.b16 %v1063, %v1055
    %v1312 = vpack.c.b16 %v1064, %v1056
    %v1313 = vpack.c.b16 %v1065, %v1057
    %v1314 = vpack.c.b16 %v1066, %v1058
    %v1315 = vpack.c.b16 %v1067, %v1059
    %v1316 = vpack.c.b16 %v1076, %v1068
    %v1317 = vpack.c.b16 %v1077, %v1069
    %v1318 = vpack.c.b16 %v1078, %v1070
    %v1319 = vpack.c.b16 %v1079, %v1071
    %v1320 = vpack.c.b16 %v1080, %v1072
    %v1321 = vpack.c.b16 %v1081, %v1073
    %v1322 = vpack.c.b16 %v1082, %v1074
    %v1323 = vpack.c.b16 %v1083, %v1075
    %v1324 = vpack.c.b16 %v1092, %v1084
    %v1325 = vpack.c.b16 %v1093, %v1085
    %v1326 = vpack.c.b16 %v1094, %v1086
    %v1327 = vpack.c.b16 %v1095, %v1087
    %v1328 = vpack.c.b16 %v1096, %v1088
    %v1329 = vpack.c.b16 %v1097, %v1089
    %v1330 = vpack.c.b16 %v1098, %v1090
    %v1331 = vpack.c.b16 %v1099, %v1091
    %v1332 = vpack.c.b16 %v1108, %v1100
    %v1333 = vpack.c.b16 %v1109, %v1101
    %v1334 = vpack.c.b16 %v1110, %v1102
    %v1335 = vpack.c.b16 %v1111, %v1103
    %v1336 = vpack.c.b16 %v1112, %v1104
    %v1337 = vpack.c.b16 %v1113, %v1105
    %v1338 = vpack.c.b16 %v1114, %v1106
    %v1339 = vpack.c.b16 %v1115, %v1107
    %v1340 = vpack.c.b16 %v1124, %v1116
    %v1341 = vpack.c.b16 %v1125, %v1117
    %v1342 = vpack.c.b16 %v1126, %v1118
    %v1343 = vpack.c.b16 %v1127, %v1119
    %v1344 = vpack.c.b16 %v1128, %v1120
    %v1345 = vpack.c.b16 %v1129, %v1121
    %v1346 = vpack.c.b16 %v1130, %v1122
    %v1347 = vpack.c.b16 %v1131, %v1123
    %v1348 = vpack.c.b16 %v1140, %v1132
    %v1349 = vpack.c.b16 %v1141, %v1133
    %v1350 = vpack.c.b16 %v1142, %v1134
    %v1351 = vpack.c.b16 %v1143, %v1135
    %v1352 = vpack.c.b16 %v1144, %v1136
    %v1353 = vpack.c.b16 %v1145, %v1137
    %v1354 = vpack.c.b16 %v1146, %v1138
    %v1355 = vpack.c.b16 %v1147, %v1139
    %v1356 = vpack.c.b16 %v1156, %v1148
    %v1357 = vpack.c.b16 %v1157, %v1149
    %v1358 = vpack.c.b16 %v1158, %v1150
    %v1359 = vpack.c.b16 %v1159, %v1151
    %v1360 = vpack.c.b16 %v1160, %v1152
    %v1361 = vpack.c.b16 %v1161, %v1153
    %v1362 = vpack.c.b16 %v1162, %v1154
    %v1363 = vpack.c.b16 %v1163, %v1155
    %v1364 = vpack.c.b16 %v1172, %v1164
    %v1365 = vpack.c.b16 %v1173, %v1165
    %v1366 = vpack.c.b16 %v1174, %v1166
    %v1367 = vpack.c.b16 %v1175, %v1167
    %v1368 = vpack.c.b16 %v1176, %v1168
    %v1369 = vpack.c.b16 %v1177, %v1169
    %v1370 = vpack.c.b16 %v1178, %v1170
    %v1371 = vpack.c.b16 %v1179, %v1171
    %v1372 = vpack.c.b16 %v1188, %v1180
    %v1373 = vpack.c.b16 %v1189, %v1181
    %v1374 = vpack.c.b16 %v1190, %v1182
    %v1375 = vpack.c.b16 %v1191, %v1183
    %v1376 = vpack.c.b16 %v1192, %v1184
    %v1377 = vpack.c.b16 %v1193, %v1185
    %v1378 = vpack.c.b16 %v1194, %v1186
    %v1379 = vpack.c.b16 %v1195, %v1187
    %v1380 = vpack.c.b16 %v1204, %v1196
    %v1381 = vpack.c.b16 %v1205, %v1197
    %v1382 = vpack.c.b16 %v1206, %v1198
    %v1383 = vpack.c.b16 %v1207, %v1199
    %v1384 = vpack.c.b16 %v1208, %v1200
    %v1385 = vpack.c.b16 %v1209, %v1201
    %v1386 = vpack.c.b16 %v1210, %v1202
    %v1387 = vpack.c.b16 %v1211, %v1203
    %v1388 = vpack.c.b16 %v1220, %v1212
    %v1389 = vpack.c.b16 %v1221, %v1213
    %v1390 = vpack.c.b16 %v1222, %v1214
    %v1391 = vpack.c.b16 %v1223, %v1215
    %v1392 = vpack.c.b16 %v1224, %v1216
    %v1393 = vpack.c.b16 %v1225, %v1217
    %v1394 = vpack.c.b16 %v1226, %v1218
    %v1395 = vpack.c.b16 %v1227, %v1219
    %v1396 = vpack.c.b16 %v1236, %v1228
    %v1397 = vpack.c.b16 %v1237, %v1229
    %v1398 = vpack.c.b16 %v1238, %v1230
    %v1399 = vpack.c.b16 %v1239, %v1231
    %v1400 = vpack.c.b16 %v1240, %v1232
    %v1401 = vpack.c.b16 %v1241, %v1233
    %v1402 = vpack.c.b16 %v1242, %v1234
    %v1403 = vpack.c.b16 %v1243, %v1235
    %v1404 = vpack.c.b16 %v1252, %v1244
    %v1405 = vpack.c.b16 %v1253, %v1245
    %v1406 = vpack.c.b16 %v1254, %v1246
    %v1407 = vpack.c.b16 %v1255, %v1247
    %v1408 = vpack.c.b16 %v1256, %v1248
    %v1409 = vpack.c.b16 %v1257, %v1249
    %v1410 = vpack.c.b16 %v1258, %v1250
    %v1411 = vpack.c.b16 %v1259, %v1251
    %v1412 = vpack.c.b16 %v1268, %v1260
    %v1413 = vpack.c.b16 %v1269, %v1261
    %v1414 = vpack.c.b16 %v1270, %v1262
    %v1415 = vpack.c.b16 %v1271, %v1263
    %v1416 = vpack.c.b16 %v1272, %v1264
    %v1417 = vpack.c.b16 %v1273, %v1265
    %v1418 = vpack.c.b16 %v1274, %v1266
    %v1419 = vpack.c.b16 %v1275, %v1267
    %v1420 = vpack.c.b16 %v1284, %v1276
    %v1421 = vpack.c.b16 %v1285, %v1277
    %v1422 = vpack.c.b16 %v1286, %v1278
    %v1423 = vpack.c.b16 %v1287, %v1279
    %v1424 = vpack.c.b16 %v1288, %v1280
    %v1425 = vpack.c.b16 %v1289, %v1281
    %v1426 = vpack.c.b16 %v1290, %v1282
    %v1427 = vpack.c.b16 %v1291, %v1283
    %v1428 = vpack.c.b16 %v1300, %v1292
    %v1429 = vpack.c.b16 %v1301, %v1293
    %v1430 = vpack.c.b16 %v1302, %v1294
    %v1431 = vpack.c.b16 %v1303, %v1295
    %v1432 = vpack.c.b16 %v1304, %v1296
    %v1433 = vpack.c.b16 %v1305, %v1297
    %v1434 = vpack.c.b16 %v1306, %v1298
    %v1435 = vpack.c.b16 %v1307, %v1299
    %1564 = vmatpush.bf16.msra.mxu0 %v1364
    %1565 = vmatpush.bf16.msra.mxu0 %v1356
    %1566 = vmatpush.bf16.msra.mxu0 %v1348
    %1567 = vmatpush.bf16.msra.mxu0 %v1340
    %1568 = vmatpush.bf16.msra.mxu0 %v1332
    %1569 = vmatpush.bf16.msra.mxu0 %v1324
    %1570 = vmatpush.bf16.msra.mxu0 %v1316
    %1571 = vmatpush.bf16.msra.mxu0 %v1308
    %1572 = vmatmul.bf16.gmra.mxu0 %v922
    %v1573 = vpop.f32.mrf.mxu0
    %v1574 = vadd.f32 0.0, %v1573
    %v1575 = vpop.f32.mrf.mxu0
    %v1576 = vadd.f32 0.0, %v1575
    %1577 = vdwg.mxu0
    %1578 = vmatpush.bf16.msra.mxu0 %v1428
    %1579 = vmatpush.bf16.msra.mxu0 %v1420
    %1580 = vmatpush.bf16.msra.mxu0 %v1412
    %1581 = vmatpush.bf16.msra.mxu0 %v1404
    %1582 = vmatpush.bf16.msra.mxu0 %v1396
    %1583 = vmatpush.bf16.msra.mxu0 %v1388
    %1584 = vmatpush.bf16.msra.mxu0 %v1380
    %1585 = vmatpush.bf16.msra.mxu0 %v1372
    %1586 = vmatmul.bf16.gmra.mxu0 0
    %v1587 = vpop.f32.mrf.mxu0
    %v1588 = vadd.f32 %v1574, %v1587
    %v1589 = vpop.f32.mrf.mxu0
    %v1590 = vadd.f32 %v1576, %v1589
    %1591 = vdwg.mxu0
    %1592 = vmatpush.bf16.msra.mxu0 %v1365
    %1593 = vmatpush.bf16.msra.mxu0 %v1357
    %1594 = vmatpush.bf16.msra.mxu0 %v1349
    %1595 = vmatpush.bf16.msra.mxu0 %v1341
    %1596 = vmatpush.bf16.msra.mxu0 %v1333
    %1597 = vmatpush.bf16.msra.mxu0 %v1325
    %1598 = vmatpush.bf16.msra.mxu0 %v1317
    %1599 = vmatpush.bf16.msra.mxu0 %v1309
    %1600 = vmatmul.bf16.gmra.mxu0 %v922
    %v1601 = vpop.f32.mrf.mxu0
    %v1602 = vadd.f32 0.0, %v1601
    %v1603 = vpop.f32.mrf.mxu0
    %v1604 = vadd.f32 0.0, %v1603
    %1605 = vdwg.mxu0
    %1606 = vmatpush.bf16.msra.mxu0 %v1429
    %1607 = vmatpush.bf16.msra.mxu0 %v1421
    %1608 = vmatpush.bf16.msra.mxu0 %v1413
    %1609 = vmatpush.bf16.msra.mxu0 %v1405
    %1610 = vmatpush.bf16.msra.mxu0 %v1397
    %1611 = vmatpush.bf16.msra.mxu0 %v1389
    %1612 = vmatpush.bf16.msra.mxu0 %v1381
    %1613 = vmatpush.bf16.msra.mxu0 %v1373
    %1614 = vmatmul.bf16.gmra.mxu0 0
    %v1615 = vpop.f32.mrf.mxu0
    %v1616 = vadd.f32 %v1602, %v1615
    %v1617 = vpop.f32.mrf.mxu0
    %v1618 = vadd.f32 %v1604, %v1617
    %1619 = vdwg.mxu0
    %1620 = vmatpush.bf16.msra.mxu0 %v1366
    %1621 = vmatpush.bf16.msra.mxu0 %v1358
    %1622 = vmatpush.bf16.msra.mxu0 %v1350
    %1623 = vmatpush.bf16.msra.mxu0 %v1342
    %1624 = vmatpush.bf16.msra.mxu0 %v1334
    %1625 = vmatpush.bf16.msra.mxu0 %v1326
    %1626 = vmatpush.bf16.msra.mxu0 %v1318
    %1627 = vmatpush.bf16.msra.mxu0 %v1310
    %1628 = vmatmul.bf16.gmra.mxu0 %v922
    %v1629 = vpop.f32.mrf.mxu0
    %v1630 = vadd.f32 0.0, %v1629
    %v1631 = vpop.f32.mrf.mxu0
    %v1632 = vadd.f32 0.0, %v1631
    %1633 = vdwg.mxu0
    %1634 = vmatpush.bf16.msra.mxu0 %v1430
    %1635 = vmatpush.bf16.msra.mxu0 %v1422
    %1636 = vmatpush.bf16.msra.mxu0 %v1414
    %1637 = vmatpush.bf16.msra.mxu0 %v1406
    %1638 = vmatpush.bf16.msra.mxu0 %v1398
    %1639 = vmatpush.bf16.msra.mxu0 %v1390
    %1640 = vmatpush.bf16.msra.mxu0 %v1382
    %1641 = vmatpush.bf16.msra.mxu0 %v1374
    %1642 = vmatmul.bf16.gmra.mxu0 0
    %v1643 = vpop.f32.mrf.mxu0
    %v1644 = vadd.f32 %v1630, %v1643
    %v1645 = vpop.f32.mrf.mxu0
    %v1646 = vadd.f32 %v1632, %v1645
    %1647 = vdwg.mxu0
    %1648 = vmatpush.bf16.msra.mxu0 %v1367
    %1649 = vmatpush.bf16.msra.mxu0 %v1359
    %1650 = vmatpush.bf16.msra.mxu0 %v1351
    %1651 = vmatpush.bf16.msra.mxu0 %v1343
    %1652 = vmatpush.bf16.msra.mxu0 %v1335
    %1653 = vmatpush.bf16.msra.mxu0 %v1327
    %1654 = vmatpush.bf16.msra.mxu0 %v1319
    %1655 = vmatpush.bf16.msra.mxu0 %v1311
    %1656 = vmatmul.bf16.gmra.mxu0 %v922
    %v1657 = vpop.f32.mrf.mxu0
    %v1658 = vadd.f32 0.0, %v1657
    %v1659 = vpop.f32.mrf.mxu0
    %v1660 = vadd.f32 0.0, %v1659
    %1661 = vdwg.mxu0
    %1662 = vmatpush.bf16.msra.mxu0 %v1431
    %1663 = vmatpush.bf16.msra.mxu0 %v1423
    %1664 = vmatpush.bf16.msra.mxu0 %v1415
    %1665 = vmatpush.bf16.msra.mxu0 %v1407
    %1666 = vmatpush.bf16.msra.mxu0 %v1399
    %1667 = vmatpush.bf16.msra.mxu0 %v1391
    %1668 = vmatpush.bf16.msra.mxu0 %v1383
    %1669 = vmatpush.bf16.msra.mxu0 %v1375
    %1670 = vmatmul.bf16.gmra.mxu0 0
    %v1671 = vpop.f32.mrf.mxu0
    %v1672 = vadd.f32 %v1658, %v1671
    %v1673 = vpop.f32.mrf.mxu0
    %v1674 = vadd.f32 %v1660, %v1673
    %1675 = vdwg.mxu0
    %1676 = vmatpush.bf16.msra.mxu0 %v1368
    %1677 = vmatpush.bf16.msra.mxu0 %v1360
    %1678 = vmatpush.bf16.msra.mxu0 %v1352
    %1679 = vmatpush.bf16.msra.mxu0 %v1344
    %1680 = vmatpush.bf16.msra.mxu0 %v1336
    %1681 = vmatpush.bf16.msra.mxu0 %v1328
    %1682 = vmatpush.bf16.msra.mxu0 %v1320
    %1683 = vmatpush.bf16.msra.mxu0 %v1312
    %1684 = vmatmul.bf16.gmra.mxu0 %v922
    %v1685 = vpop.f32.mrf.mxu0
    %v1686 = vadd.f32 0.0, %v1685
    %v1687 = vpop.f32.mrf.mxu0
    %v1688 = vadd.f32 0.0, %v1687
    %1689 = vdwg.mxu0
    %1690 = vmatpush.bf16.msra.mxu0 %v1432
    %1691 = vmatpush.bf16.msra.mxu0 %v1424
    %1692 = vmatpush.bf16.msra.mxu0 %v1416
    %1693 = vmatpush.bf16.msra.mxu0 %v1408
    %1694 = vmatpush.bf16.msra.mxu0 %v1400
    %1695 = vmatpush.bf16.msra.mxu0 %v1392
    %1696 = vmatpush.bf16.msra.mxu0 %v1384
    %1697 = vmatpush.bf16.msra.mxu0 %v1376
    %1698 = vmatmul.bf16.gmra.mxu0 0
    %v1699 = vpop.f32.mrf.mxu0
    %v1700 = vadd.f32 %v1686, %v1699
    %v1701 = vpop.f32.mrf.mxu0
    %v1702 = vadd.f32 %v1688, %v1701
    %1703 = vdwg.mxu0
    %1704 = vmatpush.bf16.msra.mxu0 %v1369
    %1705 = vmatpush.bf16.msra.mxu0 %v1361
    %1706 = vmatpush.bf16.msra.mxu0 %v1353
    %1707 = vmatpush.bf16.msra.mxu0 %v1345
    %1708 = vmatpush.bf16.msra.mxu0 %v1337
    %1709 = vmatpush.bf16.msra.mxu0 %v1329
    %1710 = vmatpush.bf16.msra.mxu0 %v1321
    %1711 = vmatpush.bf16.msra.mxu0 %v1313
    %1712 = vmatmul.bf16.gmra.mxu0 %v922
    %v1713 = vpop.f32.mrf.mxu0
    %v1714 = vadd.f32 0.0, %v1713
    %v1715 = vpop.f32.mrf.mxu0
    %v1716 = vadd.f32 0.0, %v1715
    %1717 = vdwg.mxu0
    %1718 = vmatpush.bf16.msra.mxu0 %v1433
    %1719 = vmatpush.bf16.msra.mxu0 %v1425
    %1720 = vmatpush.bf16.msra.mxu0 %v1417
    %1721 = vmatpush.bf16.msra.mxu0 %v1409
    %1722 = vmatpush.bf16.msra.mxu0 %v1401
    %1723 = vmatpush.bf16.msra.mxu0 %v1393
    %1724 = vmatpush.bf16.msra.mxu0 %v1385
    %1725 = vmatpush.bf16.msra.mxu0 %v1377
    %1726 = vmatmul.bf16.gmra.mxu0 0
    %v1727 = vpop.f32.mrf.mxu0
    %v1728 = vadd.f32 %v1714, %v1727
    %v1729 = vpop.f32.mrf.mxu0
    %v1730 = vadd.f32 %v1716, %v1729
    %1731 = vdwg.mxu0
    %1732 = vmatpush.bf16.msra.mxu0 %v1370
    %1733 = vmatpush.bf16.msra.mxu0 %v1362
    %1734 = vmatpush.bf16.msra.mxu0 %v1354
    %1735 = vmatpush.bf16.msra.mxu0 %v1346
    %1736 = vmatpush.bf16.msra.mxu0 %v1338
    %1737 = vmatpush.bf16.msra.mxu0 %v1330
    %1738 = vmatpush.bf16.msra.mxu0 %v1322
    %1739 = vmatpush.bf16.msra.mxu0 %v1314
    %1740 = vmatmul.bf16.gmra.mxu0 %v922
    %v1741 = vpop.f32.mrf.mxu0
    %v1742 = vadd.f32 0.0, %v1741
    %v1743 = vpop.f32.mrf.mxu0
    %v1744 = vadd.f32 0.0, %v1743
    %1745 = vdwg.mxu0
    %1746 = vmatpush.bf16.msra.mxu0 %v1434
    %1747 = vmatpush.bf16.msra.mxu0 %v1426
    %1748 = vmatpush.bf16.msra.mxu0 %v1418
    %1749 = vmatpush.bf16.msra.mxu0 %v1410
    %1750 = vmatpush.bf16.msra.mxu0 %v1402
    %1751 = vmatpush.bf16.msra.mxu0 %v1394
    %1752 = vmatpush.bf16.msra.mxu0 %v1386
    %1753 = vmatpush.bf16.msra.mxu0 %v1378
    %1754 = vmatmul.bf16.gmra.mxu0 0
    %v1755 = vpop.f32.mrf.mxu0
    %v1756 = vadd.f32 %v1742, %v1755
    %v1757 = vpop.f32.mrf.mxu0
    %v1758 = vadd.f32 %v1744, %v1757
    %1759 = vdwg.mxu0
    %1760 = vmatpush.bf16.msra.mxu0 %v1371
    %1761 = vmatpush.bf16.msra.mxu0 %v1363
    %1762 = vmatpush.bf16.msra.mxu0 %v1355
    %1763 = vmatpush.bf16.msra.mxu0 %v1347
    %1764 = vmatpush.bf16.msra.mxu0 %v1339
    %1765 = vmatpush.bf16.msra.mxu0 %v1331
    %1766 = vmatpush.bf16.msra.mxu0 %v1323
    %1767 = vmatpush.bf16.msra.mxu0 %v1315
    %1768 = vmatmul.bf16.gmra.mxu0 %v922
    %v1769 = vpop.f32.mrf.mxu0
    %v1770 = vadd.f32 0.0, %v1769
    %v1771 = vpop.f32.mrf.mxu0
    %v1772 = vadd.f32 0.0, %v1771
    %1773 = vdwg.mxu0
    %1774 = vmatpush.bf16.msra.mxu0 %v1435
    %1775 = vmatpush.bf16.msra.mxu0 %v1427
    %1776 = vmatpush.bf16.msra.mxu0 %v1419
    %1777 = vmatpush.bf16.msra.mxu0 %v1411
    %1778 = vmatpush.bf16.msra.mxu0 %v1403
    %1779 = vmatpush.bf16.msra.mxu0 %v1395
    %1780 = vmatpush.bf16.msra.mxu0 %v1387
    %1781 = vmatpush.bf16.msra.mxu0 %v1379
    %1782 = vmatmul.bf16.gmra.mxu0 0
    %v1783 = vpop.f32.mrf.mxu0
    %v1784 = vadd.f32 %v1770, %v1783
    %v1785 = vpop.f32.mrf.mxu0
    %v1786 = vadd.f32 %v1772, %v1785
    %1787 = vdwg.mxu0
    %s1788 = smul.u32 2, 4
    %s1789 = smul.addr %s1788, 8
    %s1790 = scalar_lea.vmem [#allocation2], %s1789
    %v1791 = vld [vmem:[%s1790] sm:$0xff]
    %v1792 = vld [vmem:[%s1790 + $0x8] sm:$0xff]
    %v1793 = vld [vmem:[%s1790 + $0x10] sm:$0xff]
    %v1794 = vld [vmem:[%s1790 + $0x18] sm:$0xff]
    %v1795 = vld [vmem:[%s1790 + $0x20] sm:$0xff]
    %v1796 = vld [vmem:[%s1790 + $0x28] sm:$0xff]
    %v1797 = vld [vmem:[%s1790 + $0x30] sm:$0xff]
    %v1798 = vld [vmem:[%s1790 + $0x38] sm:$0xff]
    %v1799 = vadd.f32 %v1791, %v1588
    %v1800 = vadd.f32 %v1792, %v1616
    %v1801 = vadd.f32 %v1793, %v1644
    %v1802 = vadd.f32 %v1794, %v1672
    %v1803 = vadd.f32 %v1795, %v1590
    %v1804 = vadd.f32 %v1796, %v1618
    %v1805 = vadd.f32 %v1797, %v1646
    %v1806 = vadd.f32 %v1798, %v1674
    %v1807 = vadd.f32 %v774, %v1700
    %v1808 = vadd.f32 %v775, %v1728
    %v1809 = vadd.f32 %v776, %v1756
    %v1810 = vadd.f32 %v777, %v1784
    %v1811 = vadd.f32 %v774, %v1702
    %v1812 = vadd.f32 %v775, %v1730
    %v1813 = vadd.f32 %v776, %v1758
    %v1814 = vadd.f32 %v777, %v1786
    %v1815 = vxor.u32 %v1799, 2147483648
    %v1816 = vxor.u32 %v1803, 2147483648
    %v1817 = vmul.f32 %v1815, 1.442695
    %v1818 = vpow.pop %v1817
    %v1819 = vmul.f32 %v1816, 1.442695
    %v1820 = vpow.pop %v1819
    %v1821 = vadd.f32 %v1818, 1.0
    %v1822 = vadd.f32 %v1820, 1.0
    %v1823 = vrcp.pop %v1821
    %v1824 = vmul.f32 %v1821, %v1823
    %v1825 = vsub.f32 1.0, %v1824
    %v1826 = vmul.f32 %v1823, %v1825
    %v1827 = vadd.f32 %v1823, %v1826
    %vm1828 = vweird.f32 %v1821
    %vm1829 = vweird.f32 %v1823
    %vm1830 = vmor %vm1828, %vm1829
    %v1831 = vsel %vm1830, %v1823, %v1827
    %v1832 = vand.u32 2147483647, %v1821
    %vm1833 = vcmp.eq.f32.partialorder %v1832, 8.507059e+37
    %v1834 = vand.u32 %v1821, 2147483648
    %v1835 = vor.u32 1.1754944e-38, %v1834
    %v1836 = vsel %vm1833, %v1835, %v1831
    %v1837 = vmul.f32 1.0, %v1836
    %v1838 = vrcp.pop %v1822
    %v1839 = vmul.f32 %v1822, %v1838
    %v1840 = vsub.f32 1.0, %v1839
    %v1841 = vmul.f32 %v1838, %v1840
    %v1842 = vadd.f32 %v1838, %v1841
    %vm1843 = vweird.f32 %v1822
    %vm1844 = vweird.f32 %v1838
    %vm1845 = vmor %vm1843, %vm1844
    %v1846 = vsel %vm1845, %v1838, %v1842
    %v1847 = vand.u32 2147483647, %v1822
    %vm1848 = vcmp.eq.f32.partialorder %v1847, 8.507059e+37
    %v1849 = vand.u32 %v1822, 2147483648
    %v1850 = vor.u32 1.1754944e-38, %v1849
    %v1851 = vsel %vm1848, %v1850, %v1846
    %v1852 = vmul.f32 1.0, %v1851
    %v1853 = vxor.u32 %v1800, 2147483648
    %v1854 = vxor.u32 %v1804, 2147483648
    %v1855 = vmul.f32 %v1853, 1.442695
    %v1856 = vpow.pop %v1855
    %v1857 = vmul.f32 %v1854, 1.442695
    %v1858 = vpow.pop %v1857
    %v1859 = vadd.f32 %v1856, 1.0
    %v1860 = vadd.f32 %v1858, 1.0
    %v1861 = vrcp.pop %v1859
    %v1862 = vmul.f32 %v1859, %v1861
    %v1863 = vsub.f32 1.0, %v1862
    %v1864 = vmul.f32 %v1861, %v1863
    %v1865 = vadd.f32 %v1861, %v1864
    %vm1866 = vweird.f32 %v1859
    %vm1867 = vweird.f32 %v1861
    %vm1868 = vmor %vm1866, %vm1867
    %v1869 = vsel %vm1868, %v1861, %v1865
    %v1870 = vand.u32 2147483647, %v1859
    %vm1871 = vcmp.eq.f32.partialorder %v1870, 8.507059e+37
    %v1872 = vand.u32 %v1859, 2147483648
    %v1873 = vor.u32 1.1754944e-38, %v1872
    %v1874 = vsel %vm1871, %v1873, %v1869
    %v1875 = vmul.f32 1.0, %v1874
    %v1876 = vrcp.pop %v1860
    %v1877 = vmul.f32 %v1860, %v1876
    %v1878 = vsub.f32 1.0, %v1877
    %v1879 = vmul.f32 %v1876, %v1878
    %v1880 = vadd.f32 %v1876, %v1879
    %vm1881 = vweird.f32 %v1860
    %vm1882 = vweird.f32 %v1876
    %vm1883 = vmor %vm1881, %vm1882
    %v1884 = vsel %vm1883, %v1876, %v1880
    %v1885 = vand.u32 2147483647, %v1860
    %vm1886 = vcmp.eq.f32.partialorder %v1885, 8.507059e+37
    %v1887 = vand.u32 %v1860, 2147483648
    %v1888 = vor.u32 1.1754944e-38, %v1887
    %v1889 = vsel %vm1886, %v1888, %v1884
    %v1890 = vmul.f32 1.0, %v1889
    %v1891 = vtanh.pop %v1801
    %v1892 = vtanh.pop %v1805
    %v1893 = vxor.u32 %v1802, 2147483648
    %v1894 = vxor.u32 %v1806, 2147483648
    %v1895 = vmul.f32 %v1893, 1.442695
    %v1896 = vpow.pop %v1895
    %v1897 = vmul.f32 %v1894, 1.442695
    %v1898 = vpow.pop %v1897
    %v1899 = vadd.f32 %v1896, 1.0
    %v1900 = vadd.f32 %v1898, 1.0
    %v1901 = vrcp.pop %v1899
    %v1902 = vmul.f32 %v1899, %v1901
    %v1903 = vsub.f32 1.0, %v1902
    %v1904 = vmul.f32 %v1901, %v1903
    %v1905 = vadd.f32 %v1901, %v1904
    %vm1906 = vweird.f32 %v1899
    %vm1907 = vweird.f32 %v1901
    %vm1908 = vmor %vm1906, %vm1907
    %v1909 = vsel %vm1908, %v1901, %v1905
    %v1910 = vand.u32 2147483647, %v1899
    %vm1911 = vcmp.eq.f32.partialorder %v1910, 8.507059e+37
    %v1912 = vand.u32 %v1899, 2147483648
    %v1913 = vor.u32 1.1754944e-38, %v1912
    %v1914 = vsel %vm1911, %v1913, %v1909
    %v1915 = vmul.f32 1.0, %v1914
    %v1916 = vrcp.pop %v1900
    %v1917 = vmul.f32 %v1900, %v1916
    %v1918 = vsub.f32 1.0, %v1917
    %v1919 = vmul.f32 %v1916, %v1918
    %v1920 = vadd.f32 %v1916, %v1919
    %vm1921 = vweird.f32 %v1900
    %vm1922 = vweird.f32 %v1916
    %vm1923 = vmor %vm1921, %vm1922
    %v1924 = vsel %vm1923, %v1916, %v1920
    %v1925 = vand.u32 2147483647, %v1900
    %vm1926 = vcmp.eq.f32.partialorder %v1925, 8.507059e+37
    %v1927 = vand.u32 %v1900, 2147483648
    %v1928 = vor.u32 1.1754944e-38, %v1927
    %v1929 = vsel %vm1926, %v1928, %v1924
    %v1930 = vmul.f32 1.0, %v1929
    %v1931 = vmul.f32 %v1875, %v910
    %v1932 = vmul.f32 %v1890, %v911
    %v1933 = vmul.f32 %v1837, %v1891
    %v1934 = vmul.f32 %v1852, %v1892
    %v1935 = vadd.f32 %v1931, %v1933
    %v1936 = vadd.f32 %v1932, %v1934
    %v1937 = vtanh.pop %v1935
    %v1938 = vtanh.pop %v1936
    %v1939 = vmul.f32 %v1915, %v1937
    %v1940 = vmul.f32 %v1930, %v1938
    %v1941 = vxor.u32 %v1807, 2147483648
    %v1942 = vxor.u32 %v1811, 2147483648
    %v1943 = vmul.f32 %v1941, 1.442695
    %v1944 = vpow.pop %v1943
    %v1945 = vmul.f32 %v1942, 1.442695
    %v1946 = vpow.pop %v1945
    %v1947 = vadd.f32 %v1944, 1.0
    %v1948 = vadd.f32 %v1946, 1.0
    %v1949 = vrcp.pop %v1947
    %v1950 = vmul.f32 %v1947, %v1949
    %v1951 = vsub.f32 1.0, %v1950
    %v1952 = vmul.f32 %v1949, %v1951
    %v1953 = vadd.f32 %v1949, %v1952
    %vm1954 = vweird.f32 %v1947
    %vm1955 = vweird.f32 %v1949
    %vm1956 = vmor %vm1954, %vm1955
    %v1957 = vsel %vm1956, %v1949, %v1953
    %v1958 = vand.u32 2147483647, %v1947
    %vm1959 = vcmp.eq.f32.partialorder %v1958, 8.507059e+37
    %v1960 = vand.u32 %v1947, 2147483648
    %v1961 = vor.u32 1.1754944e-38, %v1960
    %v1962 = vsel %vm1959, %v1961, %v1957
    %v1963 = vmul.f32 1.0, %v1962
    %v1964 = vrcp.pop %v1948
    %v1965 = vmul.f32 %v1948, %v1964
    %v1966 = vsub.f32 1.0, %v1965
    %v1967 = vmul.f32 %v1964, %v1966
    %v1968 = vadd.f32 %v1964, %v1967
    %vm1969 = vweird.f32 %v1948
    %vm1970 = vweird.f32 %v1964
    %vm1971 = vmor %vm1969, %vm1970
    %v1972 = vsel %vm1971, %v1964, %v1968
    %v1973 = vand.u32 2147483647, %v1948
    %vm1974 = vcmp.eq.f32.partialorder %v1973, 8.507059e+37
    %v1975 = vand.u32 %v1948, 2147483648
    %v1976 = vor.u32 1.1754944e-38, %v1975
    %v1977 = vsel %vm1974, %v1976, %v1972
    %v1978 = vmul.f32 1.0, %v1977
    %v1979 = vxor.u32 %v1808, 2147483648
    %v1980 = vxor.u32 %v1812, 2147483648
    %v1981 = vmul.f32 %v1979, 1.442695
    %v1982 = vpow.pop %v1981
    %v1983 = vmul.f32 %v1980, 1.442695
    %v1984 = vpow.pop %v1983
    %v1985 = vadd.f32 %v1982, 1.0
    %v1986 = vadd.f32 %v1984, 1.0
    %v1987 = vrcp.pop %v1985
    %v1988 = vmul.f32 %v1985, %v1987
    %v1989 = vsub.f32 1.0, %v1988
    %v1990 = vmul.f32 %v1987, %v1989
    %v1991 = vadd.f32 %v1987, %v1990
    %vm1992 = vweird.f32 %v1985
    %vm1993 = vweird.f32 %v1987
    %vm1994 = vmor %vm1992, %vm1993
    %v1995 = vsel %vm1994, %v1987, %v1991
    %v1996 = vand.u32 2147483647, %v1985
    %vm1997 = vcmp.eq.f32.partialorder %v1996, 8.507059e+37
    %v1998 = vand.u32 %v1985, 2147483648
    %v1999 = vor.u32 1.1754944e-38, %v1998
    %v2000 = vsel %vm1997, %v1999, %v1995
    %v2001 = vmul.f32 1.0, %v2000
    %v2002 = vrcp.pop %v1986
    %v2003 = vmul.f32 %v1986, %v2002
    %v2004 = vsub.f32 1.0, %v2003
    %v2005 = vmul.f32 %v2002, %v2004
    %v2006 = vadd.f32 %v2002, %v2005
    %vm2007 = vweird.f32 %v1986
    %vm2008 = vweird.f32 %v2002
    %vm2009 = vmor %vm2007, %vm2008
    %v2010 = vsel %vm2009, %v2002, %v2006
    %v2011 = vand.u32 2147483647, %v1986
    %vm2012 = vcmp.eq.f32.partialorder %v2011, 8.507059e+37
    %v2013 = vand.u32 %v1986, 2147483648
    %v2014 = vor.u32 1.1754944e-38, %v2013
    %v2015 = vsel %vm2012, %v2014, %v2010
    %v2016 = vmul.f32 1.0, %v2015
    %v2017 = vtanh.pop %v1809
    %v2018 = vtanh.pop %v1813
    %v2019 = vxor.u32 %v1810, 2147483648
    %v2020 = vxor.u32 %v1814, 2147483648
    %v2021 = vmul.f32 %v2019, 1.442695
    %v2022 = vpow.pop %v2021
    %v2023 = vmul.f32 %v2020, 1.442695
    %v2024 = vpow.pop %v2023
    %v2025 = vadd.f32 %v2022, 1.0
    %v2026 = vadd.f32 %v2024, 1.0
    %v2027 = vrcp.pop %v2025
    %v2028 = vmul.f32 %v2025, %v2027
    %v2029 = vsub.f32 1.0, %v2028
    %v2030 = vmul.f32 %v2027, %v2029
    %v2031 = vadd.f32 %v2027, %v2030
    %vm2032 = vweird.f32 %v2025
    %vm2033 = vweird.f32 %v2027
    %vm2034 = vmor %vm2032, %vm2033
    %v2035 = vsel %vm2034, %v2027, %v2031
    %v2036 = vand.u32 2147483647, %v2025
    %vm2037 = vcmp.eq.f32.partialorder %v2036, 8.507059e+37
    %v2038 = vand.u32 %v2025, 2147483648
    %v2039 = vor.u32 1.1754944e-38, %v2038
    %v2040 = vsel %vm2037, %v2039, %v2035
    %v2041 = vmul.f32 1.0, %v2040
    %v2042 = vrcp.pop %v2026
    %v2043 = vmul.f32 %v2026, %v2042
    %v2044 = vsub.f32 1.0, %v2043
    %v2045 = vmul.f32 %v2042, %v2044
    %v2046 = vadd.f32 %v2042, %v2045
    %vm2047 = vweird.f32 %v2026
    %vm2048 = vweird.f32 %v2042
    %vm2049 = vmor %vm2047, %vm2048
    %v2050 = vsel %vm2049, %v2042, %v2046
    %v2051 = vand.u32 2147483647, %v2026
    %vm2052 = vcmp.eq.f32.partialorder %v2051, 8.507059e+37
    %v2053 = vand.u32 %v2026, 2147483648
    %v2054 = vor.u32 1.1754944e-38, %v2053
    %v2055 = vsel %vm2052, %v2054, %v2050
    %v2056 = vmul.f32 1.0, %v2055
    %v2057 = vmul.f32 %v2001, 0.0
    %v2058 = vmul.f32 %v2016, 0.0
    %v2059 = vmul.f32 %v1963, %v2017
    %v2060 = vmul.f32 %v1978, %v2018
    %v2061 = vadd.f32 %v2057, %v2059
    %v2062 = vadd.f32 %v2058, %v2060
    %v2063 = vtanh.pop %v2061
    %v2064 = vtanh.pop %v2062
    %v2065 = vmul.f32 %v2041, %v2063
    %v2066 = vmul.f32 %v2056, %v2064
    %v2067 = vpack.c.bf16 %v1939, %v1939
    %v2068 = vpack.c.bf16 %v1940, %v1940
    %v2069 = vpack.c.bf16 %v2065, %v2065
    %v2070 = vpack.c.bf16 %v2066, %v2066
    %v2073 = vunpack.c.l.b16 %v2067
    %v2074 = vunpack.c.l.b16 %v2068
    %v2075 = vpack.c.b16 %v2074, %v2073
    %v2079 = vunpack.c.l.b16 %v2069
    %v2080 = vunpack.c.l.b16 %v2070
    %v2081 = vpack.c.b16 %v2080, %v2079
    %2083 = vmatpush.bf16.msra.mxu0 %v1364
    %2084 = vmatpush.bf16.msra.mxu0 %v1356
    %2085 = vmatpush.bf16.msra.mxu0 %v1348
    %2086 = vmatpush.bf16.msra.mxu0 %v1340
    %2087 = vmatpush.bf16.msra.mxu0 %v1332
    %2088 = vmatpush.bf16.msra.mxu0 %v1324
    %2089 = vmatpush.bf16.msra.mxu0 %v1316
    %2090 = vmatpush.bf16.msra.mxu0 %v1308
    %2091 = vmatmul.bf16.gmra.mxu0 %v2075
    %v2092 = vpop.f32.mrf.mxu0
    %v2093 = vadd.f32 0.0, %v2092
    %v2094 = vpop.f32.mrf.mxu0
    %v2095 = vadd.f32 0.0, %v2094
    %2096 = vdwg.mxu0
    %2097 = vmatpush.bf16.msra.mxu0 %v1428
    %2098 = vmatpush.bf16.msra.mxu0 %v1420
    %2099 = vmatpush.bf16.msra.mxu0 %v1412
    %2100 = vmatpush.bf16.msra.mxu0 %v1404
    %2101 = vmatpush.bf16.msra.mxu0 %v1396
    %2102 = vmatpush.bf16.msra.mxu0 %v1388
    %2103 = vmatpush.bf16.msra.mxu0 %v1380
    %2104 = vmatpush.bf16.msra.mxu0 %v1372
    %2105 = vmatmul.bf16.gmra.mxu0 %v2081
    %v2106 = vpop.f32.mrf.mxu0
    %v2107 = vadd.f32 %v2093, %v2106
    %v2108 = vpop.f32.mrf.mxu0
    %v2109 = vadd.f32 %v2095, %v2108
    %2110 = vdwg.mxu0
    %2111 = vmatpush.bf16.msra.mxu0 %v1365
    %2112 = vmatpush.bf16.msra.mxu0 %v1357
    %2113 = vmatpush.bf16.msra.mxu0 %v1349
    %2114 = vmatpush.bf16.msra.mxu0 %v1341
    %2115 = vmatpush.bf16.msra.mxu0 %v1333
    %2116 = vmatpush.bf16.msra.mxu0 %v1325
    %2117 = vmatpush.bf16.msra.mxu0 %v1317
    %2118 = vmatpush.bf16.msra.mxu0 %v1309
    %2119 = vmatmul.bf16.gmra.mxu0 %v2075
    %v2120 = vpop.f32.mrf.mxu0
    %v2121 = vadd.f32 0.0, %v2120
    %v2122 = vpop.f32.mrf.mxu0
    %v2123 = vadd.f32 0.0, %v2122
    %2124 = vdwg.mxu0
    %2125 = vmatpush.bf16.msra.mxu0 %v1429
    %2126 = vmatpush.bf16.msra.mxu0 %v1421
    %2127 = vmatpush.bf16.msra.mxu0 %v1413
    %2128 = vmatpush.bf16.msra.mxu0 %v1405
    %2129 = vmatpush.bf16.msra.mxu0 %v1397
    %2130 = vmatpush.bf16.msra.mxu0 %v1389
    %2131 = vmatpush.bf16.msra.mxu0 %v1381
    %2132 = vmatpush.bf16.msra.mxu0 %v1373
    %2133 = vmatmul.bf16.gmra.mxu0 %v2081
    %v2134 = vpop.f32.mrf.mxu0
    %v2135 = vadd.f32 %v2121, %v2134
    %v2136 = vpop.f32.mrf.mxu0
    %v2137 = vadd.f32 %v2123, %v2136
    %2138 = vdwg.mxu0
    %2139 = vmatpush.bf16.msra.mxu0 %v1366
    %2140 = vmatpush.bf16.msra.mxu0 %v1358
    %2141 = vmatpush.bf16.msra.mxu0 %v1350
    %2142 = vmatpush.bf16.msra.mxu0 %v1342
    %2143 = vmatpush.bf16.msra.mxu0 %v1334
    %2144 = vmatpush.bf16.msra.mxu0 %v1326
    %2145 = vmatpush.bf16.msra.mxu0 %v1318
    %2146 = vmatpush.bf16.msra.mxu0 %v1310
    %2147 = vmatmul.bf16.gmra.mxu0 %v2075
    %v2148 = vpop.f32.mrf.mxu0
    %v2149 = vadd.f32 0.0, %v2148
    %v2150 = vpop.f32.mrf.mxu0
    %v2151 = vadd.f32 0.0, %v2150
    %2152 = vdwg.mxu0
    %2153 = vmatpush.bf16.msra.mxu0 %v1430
    %2154 = vmatpush.bf16.msra.mxu0 %v1422
    %2155 = vmatpush.bf16.msra.mxu0 %v1414
    %2156 = vmatpush.bf16.msra.mxu0 %v1406
    %2157 = vmatpush.bf16.msra.mxu0 %v1398
    %2158 = vmatpush.bf16.msra.mxu0 %v1390
    %2159 = vmatpush.bf16.msra.mxu0 %v1382
    %2160 = vmatpush.bf16.msra.mxu0 %v1374
    %2161 = vmatmul.bf16.gmra.mxu0 %v2081
    %v2162 = vpop.f32.mrf.mxu0
    %v2163 = vadd.f32 %v2149, %v2162
    %v2164 = vpop.f32.mrf.mxu0
    %v2165 = vadd.f32 %v2151, %v2164
    %2166 = vdwg.mxu0
    %2167 = vmatpush.bf16.msra.mxu0 %v1367
    %2168 = vmatpush.bf16.msra.mxu0 %v1359
    %2169 = vmatpush.bf16.msra.mxu0 %v1351
    %2170 = vmatpush.bf16.msra.mxu0 %v1343
    %2171 = vmatpush.bf16.msra.mxu0 %v1335
    %2172 = vmatpush.bf16.msra.mxu0 %v1327
    %2173 = vmatpush.bf16.msra.mxu0 %v1319
    %2174 = vmatpush.bf16.msra.mxu0 %v1311
    %2175 = vmatmul.bf16.gmra.mxu0 %v2075
    %v2176 = vpop.f32.mrf.mxu0
    %v2177 = vadd.f32 0.0, %v2176
    %v2178 = vpop.f32.mrf.mxu0
    %v2179 = vadd.f32 0.0, %v2178
    %2180 = vdwg.mxu0
    %2181 = vmatpush.bf16.msra.mxu0 %v1431
    %2182 = vmatpush.bf16.msra.mxu0 %v1423
    %2183 = vmatpush.bf16.msra.mxu0 %v1415
    %2184 = vmatpush.bf16.msra.mxu0 %v1407
    %2185 = vmatpush.bf16.msra.mxu0 %v1399
    %2186 = vmatpush.bf16.msra.mxu0 %v1391
    %2187 = vmatpush.bf16.msra.mxu0 %v1383
    %2188 = vmatpush.bf16.msra.mxu0 %v1375
    %2189 = vmatmul.bf16.gmra.mxu0 %v2081
    %v2190 = vpop.f32.mrf.mxu0
    %v2191 = vadd.f32 %v2177, %v2190
    %v2192 = vpop.f32.mrf.mxu0
    %v2193 = vadd.f32 %v2179, %v2192
    %2194 = vdwg.mxu0
    %2195 = vmatpush.bf16.msra.mxu0 %v1368
    %2196 = vmatpush.bf16.msra.mxu0 %v1360
    %2197 = vmatpush.bf16.msra.mxu0 %v1352
    %2198 = vmatpush.bf16.msra.mxu0 %v1344
    %2199 = vmatpush.bf16.msra.mxu0 %v1336
    %2200 = vmatpush.bf16.msra.mxu0 %v1328
    %2201 = vmatpush.bf16.msra.mxu0 %v1320
    %2202 = vmatpush.bf16.msra.mxu0 %v1312
    %2203 = vmatmul.bf16.gmra.mxu0 %v2075
    %v2204 = vpop.f32.mrf.mxu0
    %v2205 = vadd.f32 0.0, %v2204
    %v2206 = vpop.f32.mrf.mxu0
    %v2207 = vadd.f32 0.0, %v2206
    %2208 = vdwg.mxu0
    %2209 = vmatpush.bf16.msra.mxu0 %v1432
    %2210 = vmatpush.bf16.msra.mxu0 %v1424
    %2211 = vmatpush.bf16.msra.mxu0 %v1416
    %2212 = vmatpush.bf16.msra.mxu0 %v1408
    %2213 = vmatpush.bf16.msra.mxu0 %v1400
    %2214 = vmatpush.bf16.msra.mxu0 %v1392
    %2215 = vmatpush.bf16.msra.mxu0 %v1384
    %2216 = vmatpush.bf16.msra.mxu0 %v1376
    %2217 = vmatmul.bf16.gmra.mxu0 %v2081
    %v2218 = vpop.f32.mrf.mxu0
    %v2219 = vadd.f32 %v2205, %v2218
    %v2220 = vpop.f32.mrf.mxu0
    %v2221 = vadd.f32 %v2207, %v2220
    %2222 = vdwg.mxu0
    %2223 = vmatpush.bf16.msra.mxu0 %v1369
    %2224 = vmatpush.bf16.msra.mxu0 %v1361
    %2225 = vmatpush.bf16.msra.mxu0 %v1353
    %2226 = vmatpush.bf16.msra.mxu0 %v1345
    %2227 = vmatpush.bf16.msra.mxu0 %v1337
    %2228 = vmatpush.bf16.msra.mxu0 %v1329
    %2229 = vmatpush.bf16.msra.mxu0 %v1321
    %2230 = vmatpush.bf16.msra.mxu0 %v1313
    %2231 = vmatmul.bf16.gmra.mxu0 %v2075
    %v2232 = vpop.f32.mrf.mxu0
    %v2233 = vadd.f32 0.0, %v2232
    %v2234 = vpop.f32.mrf.mxu0
    %v2235 = vadd.f32 0.0, %v2234
    %2236 = vdwg.mxu0
    %2237 = vmatpush.bf16.msra.mxu0 %v1433
    %2238 = vmatpush.bf16.msra.mxu0 %v1425
    %2239 = vmatpush.bf16.msra.mxu0 %v1417
    %2240 = vmatpush.bf16.msra.mxu0 %v1409
    %2241 = vmatpush.bf16.msra.mxu0 %v1401
    %2242 = vmatpush.bf16.msra.mxu0 %v1393
    %2243 = vmatpush.bf16.msra.mxu0 %v1385
    %2244 = vmatpush.bf16.msra.mxu0 %v1377
    %2245 = vmatmul.bf16.gmra.mxu0 %v2081
    %v2246 = vpop.f32.mrf.mxu0
    %v2247 = vadd.f32 %v2233, %v2246
    %v2248 = vpop.f32.mrf.mxu0
    %v2249 = vadd.f32 %v2235, %v2248
    %2250 = vdwg.mxu0
    %2251 = vmatpush.bf16.msra.mxu0 %v1370
    %2252 = vmatpush.bf16.msra.mxu0 %v1362
    %2253 = vmatpush.bf16.msra.mxu0 %v1354
    %2254 = vmatpush.bf16.msra.mxu0 %v1346
    %2255 = vmatpush.bf16.msra.mxu0 %v1338
    %2256 = vmatpush.bf16.msra.mxu0 %v1330
    %2257 = vmatpush.bf16.msra.mxu0 %v1322
    %2258 = vmatpush.bf16.msra.mxu0 %v1314
    %2259 = vmatmul.bf16.gmra.mxu0 %v2075
    %v2260 = vpop.f32.mrf.mxu0
    %v2261 = vadd.f32 0.0, %v2260
    %v2262 = vpop.f32.mrf.mxu0
    %v2263 = vadd.f32 0.0, %v2262
    %2264 = vdwg.mxu0
    %2265 = vmatpush.bf16.msra.mxu0 %v1434
    %2266 = vmatpush.bf16.msra.mxu0 %v1426
    %2267 = vmatpush.bf16.msra.mxu0 %v1418
    %2268 = vmatpush.bf16.msra.mxu0 %v1410
    %2269 = vmatpush.bf16.msra.mxu0 %v1402
    %2270 = vmatpush.bf16.msra.mxu0 %v1394
    %2271 = vmatpush.bf16.msra.mxu0 %v1386
    %2272 = vmatpush.bf16.msra.mxu0 %v1378
    %2273 = vmatmul.bf16.gmra.mxu0 %v2081
    %v2274 = vpop.f32.mrf.mxu0
    %v2275 = vadd.f32 %v2261, %v2274
    %v2276 = vpop.f32.mrf.mxu0
    %v2277 = vadd.f32 %v2263, %v2276
    %2278 = vdwg.mxu0
    %2279 = vmatpush.bf16.msra.mxu0 %v1371
    %2280 = vmatpush.bf16.msra.mxu0 %v1363
    %2281 = vmatpush.bf16.msra.mxu0 %v1355
    %2282 = vmatpush.bf16.msra.mxu0 %v1347
    %2283 = vmatpush.bf16.msra.mxu0 %v1339
    %2284 = vmatpush.bf16.msra.mxu0 %v1331
    %2285 = vmatpush.bf16.msra.mxu0 %v1323
    %2286 = vmatpush.bf16.msra.mxu0 %v1315
    %2287 = vmatmul.bf16.gmra.mxu0 %v2075
    %v2288 = vpop.f32.mrf.mxu0
    %v2289 = vadd.f32 0.0, %v2288
    %v2290 = vpop.f32.mrf.mxu0
    %v2291 = vadd.f32 0.0, %v2290
    %2292 = vdwg.mxu0
    %2293 = vmatpush.bf16.msra.mxu0 %v1435
    %2294 = vmatpush.bf16.msra.mxu0 %v1427
    %2295 = vmatpush.bf16.msra.mxu0 %v1419
    %2296 = vmatpush.bf16.msra.mxu0 %v1411
    %2297 = vmatpush.bf16.msra.mxu0 %v1403
    %2298 = vmatpush.bf16.msra.mxu0 %v1395
    %2299 = vmatpush.bf16.msra.mxu0 %v1387
    %2300 = vmatpush.bf16.msra.mxu0 %v1379
    %2301 = vmatmul.bf16.gmra.mxu0 %v2081
    %v2302 = vpop.f32.mrf.mxu0
    %v2303 = vadd.f32 %v2289, %v2302
    %v2304 = vpop.f32.mrf.mxu0
    %v2305 = vadd.f32 %v2291, %v2304
    %2306 = vdwg.mxu0
    %s2307 = smul.u32 4, 4
    %s2308 = smul.addr %s2307, 8
    %s2309 = scalar_lea.vmem [#allocation2], %s2308
    %v2310 = vld [vmem:[%s2309] sm:$0xff]
    %v2311 = vld [vmem:[%s2309 + $0x8] sm:$0xff]
    %v2312 = vld [vmem:[%s2309 + $0x10] sm:$0xff]
    %v2313 = vld [vmem:[%s2309 + $0x18] sm:$0xff]
    %v2314 = vld [vmem:[%s2309 + $0x20] sm:$0xff]
    %v2315 = vld [vmem:[%s2309 + $0x28] sm:$0xff]
    %v2316 = vld [vmem:[%s2309 + $0x30] sm:$0xff]
    %v2317 = vld [vmem:[%s2309 + $0x38] sm:$0xff]
    %v2318 = vadd.f32 %v2310, %v2107
    %v2319 = vadd.f32 %v2311, %v2135
    %v2320 = vadd.f32 %v2312, %v2163
    %v2321 = vadd.f32 %v2313, %v2191
    %v2322 = vadd.f32 %v2314, %v2109
    %v2323 = vadd.f32 %v2315, %v2137
    %v2324 = vadd.f32 %v2316, %v2165
    %v2325 = vadd.f32 %v2317, %v2193
    %v2326 = vadd.f32 %v774, %v2219
    %v2327 = vadd.f32 %v775, %v2247
    %v2328 = vadd.f32 %v776, %v2275
    %v2329 = vadd.f32 %v777, %v2303
    %v2330 = vadd.f32 %v774, %v2221
    %v2331 = vadd.f32 %v775, %v2249
    %v2332 = vadd.f32 %v776, %v2277
    %v2333 = vadd.f32 %v777, %v2305
    %v2334 = vxor.u32 %v2318, 2147483648
    %v2335 = vxor.u32 %v2322, 2147483648
    %v2336 = vmul.f32 %v2334, 1.442695
    %v2337 = vpow.pop %v2336
    %v2338 = vmul.f32 %v2335, 1.442695
    %v2339 = vpow.pop %v2338
    %v2340 = vadd.f32 %v2337, 1.0
    %v2341 = vadd.f32 %v2339, 1.0
    %v2342 = vrcp.pop %v2340
    %v2343 = vmul.f32 %v2340, %v2342
    %v2344 = vsub.f32 1.0, %v2343
    %v2345 = vmul.f32 %v2342, %v2344
    %v2346 = vadd.f32 %v2342, %v2345
    %vm2347 = vweird.f32 %v2340
    %vm2348 = vweird.f32 %v2342
    %vm2349 = vmor %vm2347, %vm2348
    %v2350 = vsel %vm2349, %v2342, %v2346
    %v2351 = vand.u32 2147483647, %v2340
    %vm2352 = vcmp.eq.f32.partialorder %v2351, 8.507059e+37
    %v2353 = vand.u32 %v2340, 2147483648
    %v2354 = vor.u32 1.1754944e-38, %v2353
    %v2355 = vsel %vm2352, %v2354, %v2350
    %v2356 = vmul.f32 1.0, %v2355
    %v2357 = vrcp.pop %v2341
    %v2358 = vmul.f32 %v2341, %v2357
    %v2359 = vsub.f32 1.0, %v2358
    %v2360 = vmul.f32 %v2357, %v2359
    %v2361 = vadd.f32 %v2357, %v2360
    %vm2362 = vweird.f32 %v2341
    %vm2363 = vweird.f32 %v2357
    %vm2364 = vmor %vm2362, %vm2363
    %v2365 = vsel %vm2364, %v2357, %v2361
    %v2366 = vand.u32 2147483647, %v2341
    %vm2367 = vcmp.eq.f32.partialorder %v2366, 8.507059e+37
    %v2368 = vand.u32 %v2341, 2147483648
    %v2369 = vor.u32 1.1754944e-38, %v2368
    %v2370 = vsel %vm2367, %v2369, %v2365
    %v2371 = vmul.f32 1.0, %v2370
    %v2372 = vxor.u32 %v2319, 2147483648
    %v2373 = vxor.u32 %v2323, 2147483648
    %v2374 = vmul.f32 %v2372, 1.442695
    %v2375 = vpow.pop %v2374
    %v2376 = vmul.f32 %v2373, 1.442695
    %v2377 = vpow.pop %v2376
    %v2378 = vadd.f32 %v2375, 1.0
    %v2379 = vadd.f32 %v2377, 1.0
    %v2380 = vrcp.pop %v2378
    %v2381 = vmul.f32 %v2378, %v2380
    %v2382 = vsub.f32 1.0, %v2381
    %v2383 = vmul.f32 %v2380, %v2382
    %v2384 = vadd.f32 %v2380, %v2383
    %vm2385 = vweird.f32 %v2378
    %vm2386 = vweird.f32 %v2380
    %vm2387 = vmor %vm2385, %vm2386
    %v2388 = vsel %vm2387, %v2380, %v2384
    %v2389 = vand.u32 2147483647, %v2378
    %vm2390 = vcmp.eq.f32.partialorder %v2389, 8.507059e+37
    %v2391 = vand.u32 %v2378, 2147483648
    %v2392 = vor.u32 1.1754944e-38, %v2391
    %v2393 = vsel %vm2390, %v2392, %v2388
    %v2394 = vmul.f32 1.0, %v2393
    %v2395 = vrcp.pop %v2379
    %v2396 = vmul.f32 %v2379, %v2395
    %v2397 = vsub.f32 1.0, %v2396
    %v2398 = vmul.f32 %v2395, %v2397
    %v2399 = vadd.f32 %v2395, %v2398
    %vm2400 = vweird.f32 %v2379
    %vm2401 = vweird.f32 %v2395
    %vm2402 = vmor %vm2400, %vm2401
    %v2403 = vsel %vm2402, %v2395, %v2399
    %v2404 = vand.u32 2147483647, %v2379
    %vm2405 = vcmp.eq.f32.partialorder %v2404, 8.507059e+37
    %v2406 = vand.u32 %v2379, 2147483648
    %v2407 = vor.u32 1.1754944e-38, %v2406
    %v2408 = vsel %vm2405, %v2407, %v2403
    %v2409 = vmul.f32 1.0, %v2408
    %v2410 = vtanh.pop %v2320
    %v2411 = vtanh.pop %v2324
    %v2412 = vxor.u32 %v2321, 2147483648
    %v2413 = vxor.u32 %v2325, 2147483648
    %v2414 = vmul.f32 %v2412, 1.442695
    %v2415 = vpow.pop %v2414
    %v2416 = vmul.f32 %v2413, 1.442695
    %v2417 = vpow.pop %v2416
    %v2418 = vadd.f32 %v2415, 1.0
    %v2419 = vadd.f32 %v2417, 1.0
    %v2420 = vrcp.pop %v2418
    %v2421 = vmul.f32 %v2418, %v2420
    %v2422 = vsub.f32 1.0, %v2421
    %v2423 = vmul.f32 %v2420, %v2422
    %v2424 = vadd.f32 %v2420, %v2423
    %vm2425 = vweird.f32 %v2418
    %vm2426 = vweird.f32 %v2420
    %vm2427 = vmor %vm2425, %vm2426
    %v2428 = vsel %vm2427, %v2420, %v2424
    %v2429 = vand.u32 2147483647, %v2418
    %vm2430 = vcmp.eq.f32.partialorder %v2429, 8.507059e+37
    %v2431 = vand.u32 %v2418, 2147483648
    %v2432 = vor.u32 1.1754944e-38, %v2431
    %v2433 = vsel %vm2430, %v2432, %v2428
    %v2434 = vmul.f32 1.0, %v2433
    %v2435 = vrcp.pop %v2419
    %v2436 = vmul.f32 %v2419, %v2435
    %v2437 = vsub.f32 1.0, %v2436
    %v2438 = vmul.f32 %v2435, %v2437
    %v2439 = vadd.f32 %v2435, %v2438
    %vm2440 = vweird.f32 %v2419
    %vm2441 = vweird.f32 %v2435
    %vm2442 = vmor %vm2440, %vm2441
    %v2443 = vsel %vm2442, %v2435, %v2439
    %v2444 = vand.u32 2147483647, %v2419
    %vm2445 = vcmp.eq.f32.partialorder %v2444, 8.507059e+37
    %v2446 = vand.u32 %v2419, 2147483648
    %v2447 = vor.u32 1.1754944e-38, %v2446
    %v2448 = vsel %vm2445, %v2447, %v2443
    %v2449 = vmul.f32 1.0, %v2448
    %v2450 = vmul.f32 %v2394, %v1935
    %v2451 = vmul.f32 %v2409, %v1936
    %v2452 = vmul.f32 %v2356, %v2410
    %v2453 = vmul.f32 %v2371, %v2411
    %v2454 = vadd.f32 %v2450, %v2452
    %v2455 = vadd.f32 %v2451, %v2453
    %v2456 = vtanh.pop %v2454
    %v2457 = vtanh.pop %v2455
    %v2458 = vmul.f32 %v2434, %v2456
    %v2459 = vmul.f32 %v2449, %v2457
    %v2460 = vxor.u32 %v2326, 2147483648
    %v2461 = vxor.u32 %v2330, 2147483648
    %v2462 = vmul.f32 %v2460, 1.442695
    %v2463 = vpow.pop %v2462
    %v2464 = vmul.f32 %v2461, 1.442695
    %v2465 = vpow.pop %v2464
    %v2466 = vadd.f32 %v2463, 1.0
    %v2467 = vadd.f32 %v2465, 1.0
    %v2468 = vrcp.pop %v2466
    %v2469 = vmul.f32 %v2466, %v2468
    %v2470 = vsub.f32 1.0, %v2469
    %v2471 = vmul.f32 %v2468, %v2470
    %v2472 = vadd.f32 %v2468, %v2471
    %vm2473 = vweird.f32 %v2466
    %vm2474 = vweird.f32 %v2468
    %vm2475 = vmor %vm2473, %vm2474
    %v2476 = vsel %vm2475, %v2468, %v2472
    %v2477 = vand.u32 2147483647, %v2466
    %vm2478 = vcmp.eq.f32.partialorder %v2477, 8.507059e+37
    %v2479 = vand.u32 %v2466, 2147483648
    %v2480 = vor.u32 1.1754944e-38, %v2479
    %v2481 = vsel %vm2478, %v2480, %v2476
    %v2482 = vmul.f32 1.0, %v2481
    %v2483 = vrcp.pop %v2467
    %v2484 = vmul.f32 %v2467, %v2483
    %v2485 = vsub.f32 1.0, %v2484
    %v2486 = vmul.f32 %v2483, %v2485
    %v2487 = vadd.f32 %v2483, %v2486
    %vm2488 = vweird.f32 %v2467
    %vm2489 = vweird.f32 %v2483
    %vm2490 = vmor %vm2488, %vm2489
    %v2491 = vsel %vm2490, %v2483, %v2487
    %v2492 = vand.u32 2147483647, %v2467
    %vm2493 = vcmp.eq.f32.partialorder %v2492, 8.507059e+37
    %v2494 = vand.u32 %v2467, 2147483648
    %v2495 = vor.u32 1.1754944e-38, %v2494
    %v2496 = vsel %vm2493, %v2495, %v2491
    %v2497 = vmul.f32 1.0, %v2496
    %v2498 = vxor.u32 %v2327, 2147483648
    %v2499 = vxor.u32 %v2331, 2147483648
    %v2500 = vmul.f32 %v2498, 1.442695
    %v2501 = vpow.pop %v2500
    %v2502 = vmul.f32 %v2499, 1.442695
    %v2503 = vpow.pop %v2502
    %v2504 = vadd.f32 %v2501, 1.0
    %v2505 = vadd.f32 %v2503, 1.0
    %v2506 = vrcp.pop %v2504
    %v2507 = vmul.f32 %v2504, %v2506
    %v2508 = vsub.f32 1.0, %v2507
    %v2509 = vmul.f32 %v2506, %v2508
    %v2510 = vadd.f32 %v2506, %v2509
    %vm2511 = vweird.f32 %v2504
    %vm2512 = vweird.f32 %v2506
    %vm2513 = vmor %vm2511, %vm2512
    %v2514 = vsel %vm2513, %v2506, %v2510
    %v2515 = vand.u32 2147483647, %v2504
    %vm2516 = vcmp.eq.f32.partialorder %v2515, 8.507059e+37
    %v2517 = vand.u32 %v2504, 2147483648
    %v2518 = vor.u32 1.1754944e-38, %v2517
    %v2519 = vsel %vm2516, %v2518, %v2514
    %v2520 = vmul.f32 1.0, %v2519
    %v2521 = vrcp.pop %v2505
    %v2522 = vmul.f32 %v2505, %v2521
    %v2523 = vsub.f32 1.0, %v2522
    %v2524 = vmul.f32 %v2521, %v2523
    %v2525 = vadd.f32 %v2521, %v2524
    %vm2526 = vweird.f32 %v2505
    %vm2527 = vweird.f32 %v2521
    %vm2528 = vmor %vm2526, %vm2527
    %v2529 = vsel %vm2528, %v2521, %v2525
    %v2530 = vand.u32 2147483647, %v2505
    %vm2531 = vcmp.eq.f32.partialorder %v2530, 8.507059e+37
    %v2532 = vand.u32 %v2505, 2147483648
    %v2533 = vor.u32 1.1754944e-38, %v2532
    %v2534 = vsel %vm2531, %v2533, %v2529
    %v2535 = vmul.f32 1.0, %v2534
    %v2536 = vtanh.pop %v2328
    %v2537 = vtanh.pop %v2332
    %v2538 = vxor.u32 %v2329, 2147483648
    %v2539 = vxor.u32 %v2333, 2147483648
    %v2540 = vmul.f32 %v2538, 1.442695
    %v2541 = vpow.pop %v2540
    %v2542 = vmul.f32 %v2539, 1.442695
    %v2543 = vpow.pop %v2542
    %v2544 = vadd.f32 %v2541, 1.0
    %v2545 = vadd.f32 %v2543, 1.0
    %v2546 = vrcp.pop %v2544
    %v2547 = vmul.f32 %v2544, %v2546
    %v2548 = vsub.f32 1.0, %v2547
    %v2549 = vmul.f32 %v2546, %v2548
    %v2550 = vadd.f32 %v2546, %v2549
    %vm2551 = vweird.f32 %v2544
    %vm2552 = vweird.f32 %v2546
    %vm2553 = vmor %vm2551, %vm2552
    %v2554 = vsel %vm2553, %v2546, %v2550
    %v2555 = vand.u32 2147483647, %v2544
    %vm2556 = vcmp.eq.f32.partialorder %v2555, 8.507059e+37
    %v2557 = vand.u32 %v2544, 2147483648
    %v2558 = vor.u32 1.1754944e-38, %v2557
    %v2559 = vsel %vm2556, %v2558, %v2554
    %v2560 = vmul.f32 1.0, %v2559
    %v2561 = vrcp.pop %v2545
    %v2562 = vmul.f32 %v2545, %v2561
    %v2563 = vsub.f32 1.0, %v2562
    %v2564 = vmul.f32 %v2561, %v2563
    %v2565 = vadd.f32 %v2561, %v2564
    %vm2566 = vweird.f32 %v2545
    %vm2567 = vweird.f32 %v2561
    %vm2568 = vmor %vm2566, %vm2567
    %v2569 = vsel %vm2568, %v2561, %v2565
    %v2570 = vand.u32 2147483647, %v2545
    %vm2571 = vcmp.eq.f32.partialorder %v2570, 8.507059e+37
    %v2572 = vand.u32 %v2545, 2147483648
    %v2573 = vor.u32 1.1754944e-38, %v2572
    %v2574 = vsel %vm2571, %v2573, %v2569
    %v2575 = vmul.f32 1.0, %v2574
    %v2576 = vmul.f32 %v2520, %v2061
    %v2577 = vmul.f32 %v2535, %v2062
    %v2578 = vmul.f32 %v2482, %v2536
    %v2579 = vmul.f32 %v2497, %v2537
    %v2580 = vadd.f32 %v2576, %v2578
    %v2581 = vadd.f32 %v2577, %v2579
    %v2582 = vtanh.pop %v2580
    %v2583 = vtanh.pop %v2581
    %v2584 = vmul.f32 %v2560, %v2582
    %v2585 = vmul.f32 %v2575, %v2583
    %v2586 = vpack.c.bf16 %v2458, %v2458
    %v2587 = vpack.c.bf16 %v2459, %v2459
    %v2588 = vpack.c.bf16 %v2584, %v2584
    %v2589 = vpack.c.bf16 %v2585, %v2585
    %v2592 = vunpack.c.l.b16 %v2586
    %v2593 = vunpack.c.l.b16 %v2587
    %v2594 = vpack.c.b16 %v2593, %v2592
    %v2598 = vunpack.c.l.b16 %v2588
    %v2599 = vunpack.c.l.b16 %v2589
    %v2600 = vpack.c.b16 %v2599, %v2598
    %2602 = vmatpush.bf16.msra.mxu0 %v1364
    %2603 = vmatpush.bf16.msra.mxu0 %v1356
    %2604 = vmatpush.bf16.msra.mxu0 %v1348
    %2605 = vmatpush.bf16.msra.mxu0 %v1340
    %2606 = vmatpush.bf16.msra.mxu0 %v1332
    %2607 = vmatpush.bf16.msra.mxu0 %v1324
    %2608 = vmatpush.bf16.msra.mxu0 %v1316
    %2609 = vmatpush.bf16.msra.mxu0 %v1308
    %2610 = vmatmul.bf16.gmra.mxu0 %v2594
    %v2611 = vpop.f32.mrf.mxu0
    %v2612 = vadd.f32 0.0, %v2611
    %v2613 = vpop.f32.mrf.mxu0
    %v2614 = vadd.f32 0.0, %v2613
    %2615 = vdwg.mxu0
    %2616 = vmatpush.bf16.msra.mxu0 %v1428
    %2617 = vmatpush.bf16.msra.mxu0 %v1420
    %2618 = vmatpush.bf16.msra.mxu0 %v1412
    %2619 = vmatpush.bf16.msra.mxu0 %v1404
    %2620 = vmatpush.bf16.msra.mxu0 %v1396
    %2621 = vmatpush.bf16.msra.mxu0 %v1388
    %2622 = vmatpush.bf16.msra.mxu0 %v1380
    %2623 = vmatpush.bf16.msra.mxu0 %v1372
    %2624 = vmatmul.bf16.gmra.mxu0 %v2600
    %v2625 = vpop.f32.mrf.mxu0
    %v2626 = vadd.f32 %v2612, %v2625
    %v2627 = vpop.f32.mrf.mxu0
    %v2628 = vadd.f32 %v2614, %v2627
    %2629 = vdwg.mxu0
    %2630 = vmatpush.bf16.msra.mxu0 %v1365
    %2631 = vmatpush.bf16.msra.mxu0 %v1357
    %2632 = vmatpush.bf16.msra.mxu0 %v1349
    %2633 = vmatpush.bf16.msra.mxu0 %v1341
    %2634 = vmatpush.bf16.msra.mxu0 %v1333
    %2635 = vmatpush.bf16.msra.mxu0 %v1325
    %2636 = vmatpush.bf16.msra.mxu0 %v1317
    %2637 = vmatpush.bf16.msra.mxu0 %v1309
    %2638 = vmatmul.bf16.gmra.mxu0 %v2594
    %v2639 = vpop.f32.mrf.mxu0
    %v2640 = vadd.f32 0.0, %v2639
    %v2641 = vpop.f32.mrf.mxu0
    %v2642 = vadd.f32 0.0, %v2641
    %2643 = vdwg.mxu0
    %2644 = vmatpush.bf16.msra.mxu0 %v1429
    %2645 = vmatpush.bf16.msra.mxu0 %v1421
    %2646 = vmatpush.bf16.msra.mxu0 %v1413
    %2647 = vmatpush.bf16.msra.mxu0 %v1405
    %2648 = vmatpush.bf16.msra.mxu0 %v1397
    %2649 = vmatpush.bf16.msra.mxu0 %v1389
    %2650 = vmatpush.bf16.msra.mxu0 %v1381
    %2651 = vmatpush.bf16.msra.mxu0 %v1373
    %2652 = vmatmul.bf16.gmra.mxu0 %v2600
    %v2653 = vpop.f32.mrf.mxu0
    %v2654 = vadd.f32 %v2640, %v2653
    %v2655 = vpop.f32.mrf.mxu0
    %v2656 = vadd.f32 %v2642, %v2655
    %2657 = vdwg.mxu0
    %2658 = vmatpush.bf16.msra.mxu0 %v1366
    %2659 = vmatpush.bf16.msra.mxu0 %v1358
    %2660 = vmatpush.bf16.msra.mxu0 %v1350
    %2661 = vmatpush.bf16.msra.mxu0 %v1342
    %2662 = vmatpush.bf16.msra.mxu0 %v1334
    %2663 = vmatpush.bf16.msra.mxu0 %v1326
    %2664 = vmatpush.bf16.msra.mxu0 %v1318
    %2665 = vmatpush.bf16.msra.mxu0 %v1310
    %2666 = vmatmul.bf16.gmra.mxu0 %v2594
    %v2667 = vpop.f32.mrf.mxu0
    %v2668 = vadd.f32 0.0, %v2667
    %v2669 = vpop.f32.mrf.mxu0
    %v2670 = vadd.f32 0.0, %v2669
    %2671 = vdwg.mxu0
    %2672 = vmatpush.bf16.msra.mxu0 %v1430
    %2673 = vmatpush.bf16.msra.mxu0 %v1422
    %2674 = vmatpush.bf16.msra.mxu0 %v1414
    %2675 = vmatpush.bf16.msra.mxu0 %v1406
    %2676 = vmatpush.bf16.msra.mxu0 %v1398
    %2677 = vmatpush.bf16.msra.mxu0 %v1390
    %2678 = vmatpush.bf16.msra.mxu0 %v1382
    %2679 = vmatpush.bf16.msra.mxu0 %v1374
    %2680 = vmatmul.bf16.gmra.mxu0 %v2600
    %v2681 = vpop.f32.mrf.mxu0
    %v2682 = vadd.f32 %v2668, %v2681
    %v2683 = vpop.f32.mrf.mxu0
    %v2684 = vadd.f32 %v2670, %v2683
    %2685 = vdwg.mxu0
    %2686 = vmatpush.bf16.msra.mxu0 %v1367
    %2687 = vmatpush.bf16.msra.mxu0 %v1359
    %2688 = vmatpush.bf16.msra.mxu0 %v1351
    %2689 = vmatpush.bf16.msra.mxu0 %v1343
    %2690 = vmatpush.bf16.msra.mxu0 %v1335
    %2691 = vmatpush.bf16.msra.mxu0 %v1327
    %2692 = vmatpush.bf16.msra.mxu0 %v1319
    %2693 = vmatpush.bf16.msra.mxu0 %v1311
    %2694 = vmatmul.bf16.gmra.mxu0 %v2594
    %v2695 = vpop.f32.mrf.mxu0
    %v2696 = vadd.f32 0.0, %v2695
    %v2697 = vpop.f32.mrf.mxu0
    %v2698 = vadd.f32 0.0, %v2697
    %2699 = vdwg.mxu0
    %2700 = vmatpush.bf16.msra.mxu0 %v1431
    %2701 = vmatpush.bf16.msra.mxu0 %v1423
    %2702 = vmatpush.bf16.msra.mxu0 %v1415
    %2703 = vmatpush.bf16.msra.mxu0 %v1407
    %2704 = vmatpush.bf16.msra.mxu0 %v1399
    %2705 = vmatpush.bf16.msra.mxu0 %v1391
    %2706 = vmatpush.bf16.msra.mxu0 %v1383
    %2707 = vmatpush.bf16.msra.mxu0 %v1375
    %2708 = vmatmul.bf16.gmra.mxu0 %v2600
    %v2709 = vpop.f32.mrf.mxu0
    %v2710 = vadd.f32 %v2696, %v2709
    %v2711 = vpop.f32.mrf.mxu0
    %v2712 = vadd.f32 %v2698, %v2711
    %2713 = vdwg.mxu0
    %2714 = vmatpush.bf16.msra.mxu0 %v1368
    %2715 = vmatpush.bf16.msra.mxu0 %v1360
    %2716 = vmatpush.bf16.msra.mxu0 %v1352
    %2717 = vmatpush.bf16.msra.mxu0 %v1344
    %2718 = vmatpush.bf16.msra.mxu0 %v1336
    %2719 = vmatpush.bf16.msra.mxu0 %v1328
    %2720 = vmatpush.bf16.msra.mxu0 %v1320
    %2721 = vmatpush.bf16.msra.mxu0 %v1312
    %2722 = vmatmul.bf16.gmra.mxu0 %v2594
    %v2723 = vpop.f32.mrf.mxu0
    %v2724 = vadd.f32 0.0, %v2723
    %v2725 = vpop.f32.mrf.mxu0
    %v2726 = vadd.f32 0.0, %v2725
    %2727 = vdwg.mxu0
    %2728 = vmatpush.bf16.msra.mxu0 %v1432
    %2729 = vmatpush.bf16.msra.mxu0 %v1424
    %2730 = vmatpush.bf16.msra.mxu0 %v1416
    %2731 = vmatpush.bf16.msra.mxu0 %v1408
    %2732 = vmatpush.bf16.msra.mxu0 %v1400
    %2733 = vmatpush.bf16.msra.mxu0 %v1392
    %2734 = vmatpush.bf16.msra.mxu0 %v1384
    %2735 = vmatpush.bf16.msra.mxu0 %v1376
    %2736 = vmatmul.bf16.gmra.mxu0 %v2600
    %v2737 = vpop.f32.mrf.mxu0
    %v2738 = vadd.f32 %v2724, %v2737
    %v2739 = vpop.f32.mrf.mxu0
    %v2740 = vadd.f32 %v2726, %v2739
    %2741 = vdwg.mxu0
    %2742 = vmatpush.bf16.msra.mxu0 %v1369
    %2743 = vmatpush.bf16.msra.mxu0 %v1361
    %2744 = vmatpush.bf16.msra.mxu0 %v1353
    %2745 = vmatpush.bf16.msra.mxu0 %v1345
    %2746 = vmatpush.bf16.msra.mxu0 %v1337
    %2747 = vmatpush.bf16.msra.mxu0 %v1329
    %2748 = vmatpush.bf16.msra.mxu0 %v1321
    %2749 = vmatpush.bf16.msra.mxu0 %v1313
    %2750 = vmatmul.bf16.gmra.mxu0 %v2594
    %v2751 = vpop.f32.mrf.mxu0
    %v2752 = vadd.f32 0.0, %v2751
    %v2753 = vpop.f32.mrf.mxu0
    %v2754 = vadd.f32 0.0, %v2753
    %2755 = vdwg.mxu0
    %2756 = vmatpush.bf16.msra.mxu0 %v1433
    %2757 = vmatpush.bf16.msra.mxu0 %v1425
    %2758 = vmatpush.bf16.msra.mxu0 %v1417
    %2759 = vmatpush.bf16.msra.mxu0 %v1409
    %2760 = vmatpush.bf16.msra.mxu0 %v1401
    %2761 = vmatpush.bf16.msra.mxu0 %v1393
    %2762 = vmatpush.bf16.msra.mxu0 %v1385
    %2763 = vmatpush.bf16.msra.mxu0 %v1377
    %2764 = vmatmul.bf16.gmra.mxu0 %v2600
    %v2765 = vpop.f32.mrf.mxu0
    %v2766 = vadd.f32 %v2752, %v2765
    %v2767 = vpop.f32.mrf.mxu0
    %v2768 = vadd.f32 %v2754, %v2767
    %2769 = vdwg.mxu0
    %2770 = vmatpush.bf16.msra.mxu0 %v1370
    %2771 = vmatpush.bf16.msra.mxu0 %v1362
    %2772 = vmatpush.bf16.msra.mxu0 %v1354
    %2773 = vmatpush.bf16.msra.mxu0 %v1346
    %2774 = vmatpush.bf16.msra.mxu0 %v1338
    %2775 = vmatpush.bf16.msra.mxu0 %v1330
    %2776 = vmatpush.bf16.msra.mxu0 %v1322
    %2777 = vmatpush.bf16.msra.mxu0 %v1314
    %2778 = vmatmul.bf16.gmra.mxu0 %v2594
    %v2779 = vpop.f32.mrf.mxu0
    %v2780 = vadd.f32 0.0, %v2779
    %v2781 = vpop.f32.mrf.mxu0
    %v2782 = vadd.f32 0.0, %v2781
    %2783 = vdwg.mxu0
    %2784 = vmatpush.bf16.msra.mxu0 %v1434
    %2785 = vmatpush.bf16.msra.mxu0 %v1426
    %2786 = vmatpush.bf16.msra.mxu0 %v1418
    %2787 = vmatpush.bf16.msra.mxu0 %v1410
    %2788 = vmatpush.bf16.msra.mxu0 %v1402
    %2789 = vmatpush.bf16.msra.mxu0 %v1394
    %2790 = vmatpush.bf16.msra.mxu0 %v1386
    %2791 = vmatpush.bf16.msra.mxu0 %v1378
    %2792 = vmatmul.bf16.gmra.mxu0 %v2600
    %v2793 = vpop.f32.mrf.mxu0
    %v2794 = vadd.f32 %v2780, %v2793
    %v2795 = vpop.f32.mrf.mxu0
    %v2796 = vadd.f32 %v2782, %v2795
    %2797 = vdwg.mxu0
    %2798 = vmatpush.bf16.msra.mxu0 %v1371
    %2799 = vmatpush.bf16.msra.mxu0 %v1363
    %2800 = vmatpush.bf16.msra.mxu0 %v1355
    %2801 = vmatpush.bf16.msra.mxu0 %v1347
    %2802 = vmatpush.bf16.msra.mxu0 %v1339
    %2803 = vmatpush.bf16.msra.mxu0 %v1331
    %2804 = vmatpush.bf16.msra.mxu0 %v1323
    %2805 = vmatpush.bf16.msra.mxu0 %v1315
    %2806 = vmatmul.bf16.gmra.mxu0 %v2594
    %v2807 = vpop.f32.mrf.mxu0
    %v2808 = vadd.f32 0.0, %v2807
    %v2809 = vpop.f32.mrf.mxu0
    %v2810 = vadd.f32 0.0, %v2809
    %2811 = vdwg.mxu0
    %2812 = vmatpush.bf16.msra.mxu0 %v1435
    %2813 = vmatpush.bf16.msra.mxu0 %v1427
    %2814 = vmatpush.bf16.msra.mxu0 %v1419
    %2815 = vmatpush.bf16.msra.mxu0 %v1411
    %2816 = vmatpush.bf16.msra.mxu0 %v1403
    %2817 = vmatpush.bf16.msra.mxu0 %v1395
    %2818 = vmatpush.bf16.msra.mxu0 %v1387
    %2819 = vmatpush.bf16.msra.mxu0 %v1379
    %2820 = vmatmul.bf16.gmra.mxu0 %v2600
    %v2821 = vpop.f32.mrf.mxu0
    %v2822 = vadd.f32 %v2808, %v2821
    %v2823 = vpop.f32.mrf.mxu0
    %v2824 = vadd.f32 %v2810, %v2823
    %2825 = vdwg.mxu0
    %s2826 = smul.u32 6, 4
    %s2827 = smul.addr %s2826, 8
    %s2828 = scalar_lea.vmem [#allocation2], %s2827
    %v2829 = vld [vmem:[%s2828] sm:$0xff]
    %v2830 = vld [vmem:[%s2828 + $0x8] sm:$0xff]
    %v2831 = vld [vmem:[%s2828 + $0x10] sm:$0xff]
    %v2832 = vld [vmem:[%s2828 + $0x18] sm:$0xff]
    %v2833 = vld [vmem:[%s2828 + $0x20] sm:$0xff]
    %v2834 = vld [vmem:[%s2828 + $0x28] sm:$0xff]
    %v2835 = vld [vmem:[%s2828 + $0x30] sm:$0xff]
    %v2836 = vld [vmem:[%s2828 + $0x38] sm:$0xff]
    %v2837 = vadd.f32 %v2829, %v2626
    %v2838 = vadd.f32 %v2830, %v2654
    %v2839 = vadd.f32 %v2831, %v2682
    %v2840 = vadd.f32 %v2832, %v2710
    %v2841 = vadd.f32 %v2833, %v2628
    %v2842 = vadd.f32 %v2834, %v2656
    %v2843 = vadd.f32 %v2835, %v2684
    %v2844 = vadd.f32 %v2836, %v2712
    %v2845 = vadd.f32 %v774, %v2738
    %v2846 = vadd.f32 %v775, %v2766
    %v2847 = vadd.f32 %v776, %v2794
    %v2848 = vadd.f32 %v777, %v2822
    %v2849 = vadd.f32 %v774, %v2740
    %v2850 = vadd.f32 %v775, %v2768
    %v2851 = vadd.f32 %v776, %v2796
    %v2852 = vadd.f32 %v777, %v2824
    %v2853 = vxor.u32 %v2837, 2147483648
    %v2854 = vxor.u32 %v2841, 2147483648
    %v2855 = vmul.f32 %v2853, 1.442695
    %v2856 = vpow.pop %v2855
    %v2857 = vmul.f32 %v2854, 1.442695
    %v2858 = vpow.pop %v2857
    %v2859 = vadd.f32 %v2856, 1.0
    %v2860 = vadd.f32 %v2858, 1.0
    %v2861 = vrcp.pop %v2859
    %v2862 = vmul.f32 %v2859, %v2861
    %v2863 = vsub.f32 1.0, %v2862
    %v2864 = vmul.f32 %v2861, %v2863
    %v2865 = vadd.f32 %v2861, %v2864
    %vm2866 = vweird.f32 %v2859
    %vm2867 = vweird.f32 %v2861
    %vm2868 = vmor %vm2866, %vm2867
    %v2869 = vsel %vm2868, %v2861, %v2865
    %v2870 = vand.u32 2147483647, %v2859
    %vm2871 = vcmp.eq.f32.partialorder %v2870, 8.507059e+37
    %v2872 = vand.u32 %v2859, 2147483648
    %v2873 = vor.u32 1.1754944e-38, %v2872
    %v2874 = vsel %vm2871, %v2873, %v2869
    %v2875 = vmul.f32 1.0, %v2874
    %v2876 = vrcp.pop %v2860
    %v2877 = vmul.f32 %v2860, %v2876
    %v2878 = vsub.f32 1.0, %v2877
    %v2879 = vmul.f32 %v2876, %v2878
    %v2880 = vadd.f32 %v2876, %v2879
    %vm2881 = vweird.f32 %v2860
    %vm2882 = vweird.f32 %v2876
    %vm2883 = vmor %vm2881, %vm2882
    %v2884 = vsel %vm2883, %v2876, %v2880
    %v2885 = vand.u32 2147483647, %v2860
    %vm2886 = vcmp.eq.f32.partialorder %v2885, 8.507059e+37
    %v2887 = vand.u32 %v2860, 2147483648
    %v2888 = vor.u32 1.1754944e-38, %v2887
    %v2889 = vsel %vm2886, %v2888, %v2884
    %v2890 = vmul.f32 1.0, %v2889
    %v2891 = vxor.u32 %v2838, 2147483648
    %v2892 = vxor.u32 %v2842, 2147483648
    %v2893 = vmul.f32 %v2891, 1.442695
    %v2894 = vpow.pop %v2893
    %v2895 = vmul.f32 %v2892, 1.442695
    %v2896 = vpow.pop %v2895
    %v2897 = vadd.f32 %v2894, 1.0
    %v2898 = vadd.f32 %v2896, 1.0
    %v2899 = vrcp.pop %v2897
    %v2900 = vmul.f32 %v2897, %v2899
    %v2901 = vsub.f32 1.0, %v2900
    %v2902 = vmul.f32 %v2899, %v2901
    %v2903 = vadd.f32 %v2899, %v2902
    %vm2904 = vweird.f32 %v2897
    %vm2905 = vweird.f32 %v2899
    %vm2906 = vmor %vm2904, %vm2905
    %v2907 = vsel %vm2906, %v2899, %v2903
    %v2908 = vand.u32 2147483647, %v2897
    %vm2909 = vcmp.eq.f32.partialorder %v2908, 8.507059e+37
    %v2910 = vand.u32 %v2897, 2147483648
    %v2911 = vor.u32 1.1754944e-38, %v2910
    %v2912 = vsel %vm2909, %v2911, %v2907
    %v2913 = vmul.f32 1.0, %v2912
    %v2914 = vrcp.pop %v2898
    %v2915 = vmul.f32 %v2898, %v2914
    %v2916 = vsub.f32 1.0, %v2915
    %v2917 = vmul.f32 %v2914, %v2916
    %v2918 = vadd.f32 %v2914, %v2917
    %vm2919 = vweird.f32 %v2898
    %vm2920 = vweird.f32 %v2914
    %vm2921 = vmor %vm2919, %vm2920
    %v2922 = vsel %vm2921, %v2914, %v2918
    %v2923 = vand.u32 2147483647, %v2898
    %vm2924 = vcmp.eq.f32.partialorder %v2923, 8.507059e+37
    %v2925 = vand.u32 %v2898, 2147483648
    %v2926 = vor.u32 1.1754944e-38, %v2925
    %v2927 = vsel %vm2924, %v2926, %v2922
    %v2928 = vmul.f32 1.0, %v2927
    %v2929 = vtanh.pop %v2839
    %v2930 = vtanh.pop %v2843
    %v2931 = vxor.u32 %v2840, 2147483648
    %v2932 = vxor.u32 %v2844, 2147483648
    %v2933 = vmul.f32 %v2931, 1.442695
    %v2934 = vpow.pop %v2933
    %v2935 = vmul.f32 %v2932, 1.442695
    %v2936 = vpow.pop %v2935
    %v2937 = vadd.f32 %v2934, 1.0
    %v2938 = vadd.f32 %v2936, 1.0
    %v2939 = vrcp.pop %v2937
    %v2940 = vmul.f32 %v2937, %v2939
    %v2941 = vsub.f32 1.0, %v2940
    %v2942 = vmul.f32 %v2939, %v2941
    %v2943 = vadd.f32 %v2939, %v2942
    %vm2944 = vweird.f32 %v2937
    %vm2945 = vweird.f32 %v2939
    %vm2946 = vmor %vm2944, %vm2945
    %v2947 = vsel %vm2946, %v2939, %v2943
    %v2948 = vand.u32 2147483647, %v2937
    %vm2949 = vcmp.eq.f32.partialorder %v2948, 8.507059e+37
    %v2950 = vand.u32 %v2937, 2147483648
    %v2951 = vor.u32 1.1754944e-38, %v2950
    %v2952 = vsel %vm2949, %v2951, %v2947
    %v2953 = vmul.f32 1.0, %v2952
    %v2954 = vrcp.pop %v2938
    %v2955 = vmul.f32 %v2938, %v2954
    %v2956 = vsub.f32 1.0, %v2955
    %v2957 = vmul.f32 %v2954, %v2956
    %v2958 = vadd.f32 %v2954, %v2957
    %vm2959 = vweird.f32 %v2938
    %vm2960 = vweird.f32 %v2954
    %vm2961 = vmor %vm2959, %vm2960
    %v2962 = vsel %vm2961, %v2954, %v2958
    %v2963 = vand.u32 2147483647, %v2938
    %vm2964 = vcmp.eq.f32.partialorder %v2963, 8.507059e+37
    %v2965 = vand.u32 %v2938, 2147483648
    %v2966 = vor.u32 1.1754944e-38, %v2965
    %v2967 = vsel %vm2964, %v2966, %v2962
    %v2968 = vmul.f32 1.0, %v2967
    %v2969 = vmul.f32 %v2913, %v2454
    %v2970 = vmul.f32 %v2928, %v2455
    %v2971 = vmul.f32 %v2875, %v2929
    %v2972 = vmul.f32 %v2890, %v2930
    %v2973 = vadd.f32 %v2969, %v2971
    %v2974 = vadd.f32 %v2970, %v2972
    %v2975 = vtanh.pop %v2973
    %v2976 = vtanh.pop %v2974
    %v2977 = vmul.f32 %v2953, %v2975
    %v2978 = vmul.f32 %v2968, %v2976
    %v2979 = vxor.u32 %v2845, 2147483648
    %v2980 = vxor.u32 %v2849, 2147483648
    %v2981 = vmul.f32 %v2979, 1.442695
    %v2982 = vpow.pop %v2981
    %v2983 = vmul.f32 %v2980, 1.442695
    %v2984 = vpow.pop %v2983
    %v2985 = vadd.f32 %v2982, 1.0
    %v2986 = vadd.f32 %v2984, 1.0
    %v2987 = vrcp.pop %v2985
    %v2988 = vmul.f32 %v2985, %v2987
    %v2989 = vsub.f32 1.0, %v2988
    %v2990 = vmul.f32 %v2987, %v2989
    %v2991 = vadd.f32 %v2987, %v2990
    %vm2992 = vweird.f32 %v2985
    %vm2993 = vweird.f32 %v2987
    %vm2994 = vmor %vm2992, %vm2993
    %v2995 = vsel %vm2994, %v2987, %v2991
    %v2996 = vand.u32 2147483647, %v2985
    %vm2997 = vcmp.eq.f32.partialorder %v2996, 8.507059e+37
    %v2998 = vand.u32 %v2985, 2147483648
    %v2999 = vor.u32 1.1754944e-38, %v2998
    %v3000 = vsel %vm2997, %v2999, %v2995
    %v3001 = vmul.f32 1.0, %v3000
    %v3002 = vrcp.pop %v2986
    %v3003 = vmul.f32 %v2986, %v3002
    %v3004 = vsub.f32 1.0, %v3003
    %v3005 = vmul.f32 %v3002, %v3004
    %v3006 = vadd.f32 %v3002, %v3005
    %vm3007 = vweird.f32 %v2986
    %vm3008 = vweird.f32 %v3002
    %vm3009 = vmor %vm3007, %vm3008
    %v3010 = vsel %vm3009, %v3002, %v3006
    %v3011 = vand.u32 2147483647, %v2986
    %vm3012 = vcmp.eq.f32.partialorder %v3011, 8.507059e+37
    %v3013 = vand.u32 %v2986, 2147483648
    %v3014 = vor.u32 1.1754944e-38, %v3013
    %v3015 = vsel %vm3012, %v3014, %v3010
    %v3016 = vmul.f32 1.0, %v3015
    %v3017 = vxor.u32 %v2846, 2147483648
    %v3018 = vxor.u32 %v2850, 2147483648
    %v3019 = vmul.f32 %v3017, 1.442695
    %v3020 = vpow.pop %v3019
    %v3021 = vmul.f32 %v3018, 1.442695
    %v3022 = vpow.pop %v3021
    %v3023 = vadd.f32 %v3020, 1.0
    %v3024 = vadd.f32 %v3022, 1.0
    %v3025 = vrcp.pop %v3023
    %v3026 = vmul.f32 %v3023, %v3025
    %v3027 = vsub.f32 1.0, %v3026
    %v3028 = vmul.f32 %v3025, %v3027
    %v3029 = vadd.f32 %v3025, %v3028
    %vm3030 = vweird.f32 %v3023
    %vm3031 = vweird.f32 %v3025
    %vm3032 = vmor %vm3030, %vm3031
    %v3033 = vsel %vm3032, %v3025, %v3029
    %v3034 = vand.u32 2147483647, %v3023
    %vm3035 = vcmp.eq.f32.partialorder %v3034, 8.507059e+37
    %v3036 = vand.u32 %v3023, 2147483648
    %v3037 = vor.u32 1.1754944e-38, %v3036
    %v3038 = vsel %vm3035, %v3037, %v3033
    %v3039 = vmul.f32 1.0, %v3038
    %v3040 = vrcp.pop %v3024
    %v3041 = vmul.f32 %v3024, %v3040
    %v3042 = vsub.f32 1.0, %v3041
    %v3043 = vmul.f32 %v3040, %v3042
    %v3044 = vadd.f32 %v3040, %v3043
    %vm3045 = vweird.f32 %v3024
    %vm3046 = vweird.f32 %v3040
    %vm3047 = vmor %vm3045, %vm3046
    %v3048 = vsel %vm3047, %v3040, %v3044
    %v3049 = vand.u32 2147483647, %v3024
    %vm3050 = vcmp.eq.f32.partialorder %v3049, 8.507059e+37
    %v3051 = vand.u32 %v3024, 2147483648
    %v3052 = vor.u32 1.1754944e-38, %v3051
    %v3053 = vsel %vm3050, %v3052, %v3048
    %v3054 = vmul.f32 1.0, %v3053
    %v3055 = vtanh.pop %v2847
    %v3056 = vtanh.pop %v2851
    %v3057 = vxor.u32 %v2848, 2147483648
    %v3058 = vxor.u32 %v2852, 2147483648
    %v3059 = vmul.f32 %v3057, 1.442695
    %v3060 = vpow.pop %v3059
    %v3061 = vmul.f32 %v3058, 1.442695
    %v3062 = vpow.pop %v3061
    %v3063 = vadd.f32 %v3060, 1.0
    %v3064 = vadd.f32 %v3062, 1.0
    %v3065 = vrcp.pop %v3063
    %v3066 = vmul.f32 %v3063, %v3065
    %v3067 = vsub.f32 1.0, %v3066
    %v3068 = vmul.f32 %v3065, %v3067
    %v3069 = vadd.f32 %v3065, %v3068
    %vm3070 = vweird.f32 %v3063
    %vm3071 = vweird.f32 %v3065
    %vm3072 = vmor %vm3070, %vm3071
    %v3073 = vsel %vm3072, %v3065, %v3069
    %v3074 = vand.u32 2147483647, %v3063
    %vm3075 = vcmp.eq.f32.partialorder %v3074, 8.507059e+37
    %v3076 = vand.u32 %v3063, 2147483648
    %v3077 = vor.u32 1.1754944e-38, %v3076
    %v3078 = vsel %vm3075, %v3077, %v3073
    %v3079 = vmul.f32 1.0, %v3078
    %v3080 = vrcp.pop %v3064
    %v3081 = vmul.f32 %v3064, %v3080
    %v3082 = vsub.f32 1.0, %v3081
    %v3083 = vmul.f32 %v3080, %v3082
    %v3084 = vadd.f32 %v3080, %v3083
    %vm3085 = vweird.f32 %v3064
    %vm3086 = vweird.f32 %v3080
    %vm3087 = vmor %vm3085, %vm3086
    %v3088 = vsel %vm3087, %v3080, %v3084
    %v3089 = vand.u32 2147483647, %v3064
    %vm3090 = vcmp.eq.f32.partialorder %v3089, 8.507059e+37
    %v3091 = vand.u32 %v3064, 2147483648
    %v3092 = vor.u32 1.1754944e-38, %v3091
    %v3093 = vsel %vm3090, %v3092, %v3088
    %v3094 = vmul.f32 1.0, %v3093
    %v3095 = vmul.f32 %v3039, %v2580
    %v3096 = vmul.f32 %v3054, %v2581
    %v3097 = vmul.f32 %v3001, %v3055
    %v3098 = vmul.f32 %v3016, %v3056
    %v3099 = vadd.f32 %v3095, %v3097
    %v3100 = vadd.f32 %v3096, %v3098
    %v3101 = vtanh.pop %v3099
    %v3102 = vtanh.pop %v3100
    %v3103 = vmul.f32 %v3079, %v3101
    %v3104 = vmul.f32 %v3094, %v3102
    %v3105 = vpack.c.bf16 %v2977, %v2977
    %v3106 = vpack.c.bf16 %v2978, %v2978
    %v3107 = vpack.c.bf16 %v3103, %v3103
    %v3108 = vpack.c.bf16 %v3104, %v3104
    %v3111 = vunpack.c.l.b16 %v3105
    %v3112 = vunpack.c.l.b16 %v3106
    %v3113 = vpack.c.b16 %v3112, %v3111
    %v3117 = vunpack.c.l.b16 %v3107
    %v3118 = vunpack.c.l.b16 %v3108
    %v3119 = vpack.c.b16 %v3118, %v3117
    %3121 = vmatpush.bf16.msra.mxu0 %v1364
    %3122 = vmatpush.bf16.msra.mxu0 %v1356
    %3123 = vmatpush.bf16.msra.mxu0 %v1348
    %3124 = vmatpush.bf16.msra.mxu0 %v1340
    %3125 = vmatpush.bf16.msra.mxu0 %v1332
    %3126 = vmatpush.bf16.msra.mxu0 %v1324
    %3127 = vmatpush.bf16.msra.mxu0 %v1316
    %3128 = vmatpush.bf16.msra.mxu0 %v1308
    %3129 = vmatmul.bf16.gmra.mxu0 %v3113
    %v3130 = vpop.f32.mrf.mxu0
    %v3131 = vadd.f32 0.0, %v3130
    %v3132 = vpop.f32.mrf.mxu0
    %v3133 = vadd.f32 0.0, %v3132
    %3134 = vdwg.mxu0
    %3135 = vmatpush.bf16.msra.mxu0 %v1428
    %3136 = vmatpush.bf16.msra.mxu0 %v1420
    %3137 = vmatpush.bf16.msra.mxu0 %v1412
    %3138 = vmatpush.bf16.msra.mxu0 %v1404
    %3139 = vmatpush.bf16.msra.mxu0 %v1396
    %3140 = vmatpush.bf16.msra.mxu0 %v1388
    %3141 = vmatpush.bf16.msra.mxu0 %v1380
    %3142 = vmatpush.bf16.msra.mxu0 %v1372
    %3143 = vmatmul.bf16.gmra.mxu0 %v3119
    %v3144 = vpop.f32.mrf.mxu0
    %v3145 = vadd.f32 %v3131, %v3144
    %v3146 = vpop.f32.mrf.mxu0
    %v3147 = vadd.f32 %v3133, %v3146
    %3148 = vdwg.mxu0
    %3149 = vmatpush.bf16.msra.mxu0 %v1365
    %3150 = vmatpush.bf16.msra.mxu0 %v1357
    %3151 = vmatpush.bf16.msra.mxu0 %v1349
    %3152 = vmatpush.bf16.msra.mxu0 %v1341
    %3153 = vmatpush.bf16.msra.mxu0 %v1333
    %3154 = vmatpush.bf16.msra.mxu0 %v1325
    %3155 = vmatpush.bf16.msra.mxu0 %v1317
    %3156 = vmatpush.bf16.msra.mxu0 %v1309
    %3157 = vmatmul.bf16.gmra.mxu0 %v3113
    %v3158 = vpop.f32.mrf.mxu0
    %v3159 = vadd.f32 0.0, %v3158
    %v3160 = vpop.f32.mrf.mxu0
    %v3161 = vadd.f32 0.0, %v3160
    %3162 = vdwg.mxu0
    %3163 = vmatpush.bf16.msra.mxu0 %v1429
    %3164 = vmatpush.bf16.msra.mxu0 %v1421
    %3165 = vmatpush.bf16.msra.mxu0 %v1413
    %3166 = vmatpush.bf16.msra.mxu0 %v1405
    %3167 = vmatpush.bf16.msra.mxu0 %v1397
    %3168 = vmatpush.bf16.msra.mxu0 %v1389
    %3169 = vmatpush.bf16.msra.mxu0 %v1381
    %3170 = vmatpush.bf16.msra.mxu0 %v1373
    %3171 = vmatmul.bf16.gmra.mxu0 %v3119
    %v3172 = vpop.f32.mrf.mxu0
    %v3173 = vadd.f32 %v3159, %v3172
    %v3174 = vpop.f32.mrf.mxu0
    %v3175 = vadd.f32 %v3161, %v3174
    %3176 = vdwg.mxu0
    %3177 = vmatpush.bf16.msra.mxu0 %v1366
    %3178 = vmatpush.bf16.msra.mxu0 %v1358
    %3179 = vmatpush.bf16.msra.mxu0 %v1350
    %3180 = vmatpush.bf16.msra.mxu0 %v1342
    %3181 = vmatpush.bf16.msra.mxu0 %v1334
    %3182 = vmatpush.bf16.msra.mxu0 %v1326
    %3183 = vmatpush.bf16.msra.mxu0 %v1318
    %3184 = vmatpush.bf16.msra.mxu0 %v1310
    %3185 = vmatmul.bf16.gmra.mxu0 %v3113
    %v3186 = vpop.f32.mrf.mxu0
    %v3187 = vadd.f32 0.0, %v3186
    %v3188 = vpop.f32.mrf.mxu0
    %v3189 = vadd.f32 0.0, %v3188
    %3190 = vdwg.mxu0
    %3191 = vmatpush.bf16.msra.mxu0 %v1430
    %3192 = vmatpush.bf16.msra.mxu0 %v1422
    %3193 = vmatpush.bf16.msra.mxu0 %v1414
    %3194 = vmatpush.bf16.msra.mxu0 %v1406
    %3195 = vmatpush.bf16.msra.mxu0 %v1398
    %3196 = vmatpush.bf16.msra.mxu0 %v1390
    %3197 = vmatpush.bf16.msra.mxu0 %v1382
    %3198 = vmatpush.bf16.msra.mxu0 %v1374
    %3199 = vmatmul.bf16.gmra.mxu0 %v3119
    %v3200 = vpop.f32.mrf.mxu0
    %v3201 = vadd.f32 %v3187, %v3200
    %v3202 = vpop.f32.mrf.mxu0
    %v3203 = vadd.f32 %v3189, %v3202
    %3204 = vdwg.mxu0
    %3205 = vmatpush.bf16.msra.mxu0 %v1367
    %3206 = vmatpush.bf16.msra.mxu0 %v1359
    %3207 = vmatpush.bf16.msra.mxu0 %v1351
    %3208 = vmatpush.bf16.msra.mxu0 %v1343
    %3209 = vmatpush.bf16.msra.mxu0 %v1335
    %3210 = vmatpush.bf16.msra.mxu0 %v1327
    %3211 = vmatpush.bf16.msra.mxu0 %v1319
    %3212 = vmatpush.bf16.msra.mxu0 %v1311
    %3213 = vmatmul.bf16.gmra.mxu0 %v3113
    %v3214 = vpop.f32.mrf.mxu0
    %v3215 = vadd.f32 0.0, %v3214
    %v3216 = vpop.f32.mrf.mxu0
    %v3217 = vadd.f32 0.0, %v3216
    %3218 = vdwg.mxu0
    %3219 = vmatpush.bf16.msra.mxu0 %v1431
    %3220 = vmatpush.bf16.msra.mxu0 %v1423
    %3221 = vmatpush.bf16.msra.mxu0 %v1415
    %3222 = vmatpush.bf16.msra.mxu0 %v1407
    %3223 = vmatpush.bf16.msra.mxu0 %v1399
    %3224 = vmatpush.bf16.msra.mxu0 %v1391
    %3225 = vmatpush.bf16.msra.mxu0 %v1383
    %3226 = vmatpush.bf16.msra.mxu0 %v1375
    %3227 = vmatmul.bf16.gmra.mxu0 %v3119
    %v3228 = vpop.f32.mrf.mxu0
    %v3229 = vadd.f32 %v3215, %v3228
    %v3230 = vpop.f32.mrf.mxu0
    %v3231 = vadd.f32 %v3217, %v3230
    %3232 = vdwg.mxu0
    %3233 = vmatpush.bf16.msra.mxu0 %v1368
    %3234 = vmatpush.bf16.msra.mxu0 %v1360
    %3235 = vmatpush.bf16.msra.mxu0 %v1352
    %3236 = vmatpush.bf16.msra.mxu0 %v1344
    %3237 = vmatpush.bf16.msra.mxu0 %v1336
    %3238 = vmatpush.bf16.msra.mxu0 %v1328
    %3239 = vmatpush.bf16.msra.mxu0 %v1320
    %3240 = vmatpush.bf16.msra.mxu0 %v1312
    %3241 = vmatmul.bf16.gmra.mxu0 %v3113
    %v3242 = vpop.f32.mrf.mxu0
    %v3243 = vadd.f32 0.0, %v3242
    %v3244 = vpop.f32.mrf.mxu0
    %v3245 = vadd.f32 0.0, %v3244
    %3246 = vdwg.mxu0
    %3247 = vmatpush.bf16.msra.mxu0 %v1432
    %3248 = vmatpush.bf16.msra.mxu0 %v1424
    %3249 = vmatpush.bf16.msra.mxu0 %v1416
    %3250 = vmatpush.bf16.msra.mxu0 %v1408
    %3251 = vmatpush.bf16.msra.mxu0 %v1400
    %3252 = vmatpush.bf16.msra.mxu0 %v1392
    %3253 = vmatpush.bf16.msra.mxu0 %v1384
    %3254 = vmatpush.bf16.msra.mxu0 %v1376
    %3255 = vmatmul.bf16.gmra.mxu0 %v3119
    %v3256 = vpop.f32.mrf.mxu0
    %v3257 = vadd.f32 %v3243, %v3256
    %v3258 = vpop.f32.mrf.mxu0
    %v3259 = vadd.f32 %v3245, %v3258
    %3260 = vdwg.mxu0
    %3261 = vmatpush.bf16.msra.mxu0 %v1369
    %3262 = vmatpush.bf16.msra.mxu0 %v1361
    %3263 = vmatpush.bf16.msra.mxu0 %v1353
    %3264 = vmatpush.bf16.msra.mxu0 %v1345
    %3265 = vmatpush.bf16.msra.mxu0 %v1337
    %3266 = vmatpush.bf16.msra.mxu0 %v1329
    %3267 = vmatpush.bf16.msra.mxu0 %v1321
    %3268 = vmatpush.bf16.msra.mxu0 %v1313
    %3269 = vmatmul.bf16.gmra.mxu0 %v3113
    %v3270 = vpop.f32.mrf.mxu0
    %v3271 = vadd.f32 0.0, %v3270
    %v3272 = vpop.f32.mrf.mxu0
    %v3273 = vadd.f32 0.0, %v3272
    %3274 = vdwg.mxu0
    %3275 = vmatpush.bf16.msra.mxu0 %v1433
    %3276 = vmatpush.bf16.msra.mxu0 %v1425
    %3277 = vmatpush.bf16.msra.mxu0 %v1417
    %3278 = vmatpush.bf16.msra.mxu0 %v1409
    %3279 = vmatpush.bf16.msra.mxu0 %v1401
    %3280 = vmatpush.bf16.msra.mxu0 %v1393
    %3281 = vmatpush.bf16.msra.mxu0 %v1385
    %3282 = vmatpush.bf16.msra.mxu0 %v1377
    %3283 = vmatmul.bf16.gmra.mxu0 %v3119
    %v3284 = vpop.f32.mrf.mxu0
    %v3285 = vadd.f32 %v3271, %v3284
    %v3286 = vpop.f32.mrf.mxu0
    %v3287 = vadd.f32 %v3273, %v3286
    %3288 = vdwg.mxu0
    %3289 = vmatpush.bf16.msra.mxu0 %v1370
    %3290 = vmatpush.bf16.msra.mxu0 %v1362
    %3291 = vmatpush.bf16.msra.mxu0 %v1354
    %3292 = vmatpush.bf16.msra.mxu0 %v1346
    %3293 = vmatpush.bf16.msra.mxu0 %v1338
    %3294 = vmatpush.bf16.msra.mxu0 %v1330
    %3295 = vmatpush.bf16.msra.mxu0 %v1322
    %3296 = vmatpush.bf16.msra.mxu0 %v1314
    %3297 = vmatmul.bf16.gmra.mxu0 %v3113
    %v3298 = vpop.f32.mrf.mxu0
    %v3299 = vadd.f32 0.0, %v3298
    %v3300 = vpop.f32.mrf.mxu0
    %v3301 = vadd.f32 0.0, %v3300
    %3302 = vdwg.mxu0
    %3303 = vmatpush.bf16.msra.mxu0 %v1434
    %3304 = vmatpush.bf16.msra.mxu0 %v1426
    %3305 = vmatpush.bf16.msra.mxu0 %v1418
    %3306 = vmatpush.bf16.msra.mxu0 %v1410
    %3307 = vmatpush.bf16.msra.mxu0 %v1402
    %3308 = vmatpush.bf16.msra.mxu0 %v1394
    %3309 = vmatpush.bf16.msra.mxu0 %v1386
    %3310 = vmatpush.bf16.msra.mxu0 %v1378
    %3311 = vmatmul.bf16.gmra.mxu0 %v3119
    %v3312 = vpop.f32.mrf.mxu0
    %v3313 = vadd.f32 %v3299, %v3312
    %v3314 = vpop.f32.mrf.mxu0
    %v3315 = vadd.f32 %v3301, %v3314
    %3316 = vdwg.mxu0
    %3317 = vmatpush.bf16.msra.mxu0 %v1371
    %3318 = vmatpush.bf16.msra.mxu0 %v1363
    %3319 = vmatpush.bf16.msra.mxu0 %v1355
    %3320 = vmatpush.bf16.msra.mxu0 %v1347
    %3321 = vmatpush.bf16.msra.mxu0 %v1339
    %3322 = vmatpush.bf16.msra.mxu0 %v1331
    %3323 = vmatpush.bf16.msra.mxu0 %v1323
    %3324 = vmatpush.bf16.msra.mxu0 %v1315
    %3325 = vmatmul.bf16.gmra.mxu0 %v3113
    %v3326 = vpop.f32.mrf.mxu0
    %v3327 = vadd.f32 0.0, %v3326
    %v3328 = vpop.f32.mrf.mxu0
    %v3329 = vadd.f32 0.0, %v3328
    %3330 = vdwg.mxu0
    %3331 = vmatpush.bf16.msra.mxu0 %v1435
    %3332 = vmatpush.bf16.msra.mxu0 %v1427
    %3333 = vmatpush.bf16.msra.mxu0 %v1419
    %3334 = vmatpush.bf16.msra.mxu0 %v1411
    %3335 = vmatpush.bf16.msra.mxu0 %v1403
    %3336 = vmatpush.bf16.msra.mxu0 %v1395
    %3337 = vmatpush.bf16.msra.mxu0 %v1387
    %3338 = vmatpush.bf16.msra.mxu0 %v1379
    %3339 = vmatmul.bf16.gmra.mxu0 %v3119
    %v3340 = vpop.f32.mrf.mxu0
    %v3341 = vadd.f32 %v3327, %v3340
    %v3342 = vpop.f32.mrf.mxu0
    %v3343 = vadd.f32 %v3329, %v3342
    %3344 = vdwg.mxu0
    %s3345 = smul.u32 8, 4
    %s3346 = smul.addr %s3345, 8
    %s3347 = scalar_lea.vmem [#allocation2], %s3346
    %v3348 = vld [vmem:[%s3347] sm:$0xff]
    %v3349 = vld [vmem:[%s3347 + $0x8] sm:$0xff]
    %v3350 = vld [vmem:[%s3347 + $0x10] sm:$0xff]
    %v3351 = vld [vmem:[%s3347 + $0x18] sm:$0xff]
    %v3352 = vld [vmem:[%s3347 + $0x20] sm:$0xff]
    %v3353 = vld [vmem:[%s3347 + $0x28] sm:$0xff]
    %v3354 = vld [vmem:[%s3347 + $0x30] sm:$0xff]
    %v3355 = vld [vmem:[%s3347 + $0x38] sm:$0xff]
    %v3356 = vadd.f32 %v3348, %v3145
    %v3357 = vadd.f32 %v3349, %v3173
    %v3358 = vadd.f32 %v3350, %v3201
    %v3359 = vadd.f32 %v3351, %v3229
    %v3360 = vadd.f32 %v3352, %v3147
    %v3361 = vadd.f32 %v3353, %v3175
    %v3362 = vadd.f32 %v3354, %v3203
    %v3363 = vadd.f32 %v3355, %v3231
    %v3364 = vadd.f32 %v774, %v3257
    %v3365 = vadd.f32 %v775, %v3285
    %v3366 = vadd.f32 %v776, %v3313
    %v3367 = vadd.f32 %v777, %v3341
    %v3368 = vadd.f32 %v774, %v3259
    %v3369 = vadd.f32 %v775, %v3287
    %v3370 = vadd.f32 %v776, %v3315
    %v3371 = vadd.f32 %v777, %v3343
    %v3372 = vxor.u32 %v3356, 2147483648
    %v3373 = vxor.u32 %v3360, 2147483648
    %v3374 = vmul.f32 %v3372, 1.442695
    %v3375 = vpow.pop %v3374
    %v3376 = vmul.f32 %v3373, 1.442695
    %v3377 = vpow.pop %v3376
    %v3378 = vadd.f32 %v3375, 1.0
    %v3379 = vadd.f32 %v3377, 1.0
    %v3380 = vrcp.pop %v3378
    %v3381 = vmul.f32 %v3378, %v3380
    %v3382 = vsub.f32 1.0, %v3381
    %v3383 = vmul.f32 %v3380, %v3382
    %v3384 = vadd.f32 %v3380, %v3383
    %vm3385 = vweird.f32 %v3378
    %vm3386 = vweird.f32 %v3380
    %vm3387 = vmor %vm3385, %vm3386
    %v3388 = vsel %vm3387, %v3380, %v3384
    %v3389 = vand.u32 2147483647, %v3378
    %vm3390 = vcmp.eq.f32.partialorder %v3389, 8.507059e+37
    %v3391 = vand.u32 %v3378, 2147483648
    %v3392 = vor.u32 1.1754944e-38, %v3391
    %v3393 = vsel %vm3390, %v3392, %v3388
    %v3394 = vmul.f32 1.0, %v3393
    %v3395 = vrcp.pop %v3379
    %v3396 = vmul.f32 %v3379, %v3395
    %v3397 = vsub.f32 1.0, %v3396
    %v3398 = vmul.f32 %v3395, %v3397
    %v3399 = vadd.f32 %v3395, %v3398
    %vm3400 = vweird.f32 %v3379
    %vm3401 = vweird.f32 %v3395
    %vm3402 = vmor %vm3400, %vm3401
    %v3403 = vsel %vm3402, %v3395, %v3399
    %v3404 = vand.u32 2147483647, %v3379
    %vm3405 = vcmp.eq.f32.partialorder %v3404, 8.507059e+37
    %v3406 = vand.u32 %v3379, 2147483648
    %v3407 = vor.u32 1.1754944e-38, %v3406
    %v3408 = vsel %vm3405, %v3407, %v3403
    %v3409 = vmul.f32 1.0, %v3408
    %v3410 = vxor.u32 %v3357, 2147483648
    %v3411 = vxor.u32 %v3361, 2147483648
    %v3412 = vmul.f32 %v3410, 1.442695
    %v3413 = vpow.pop %v3412
    %v3414 = vmul.f32 %v3411, 1.442695
    %v3415 = vpow.pop %v3414
    %v3416 = vadd.f32 %v3413, 1.0
    %v3417 = vadd.f32 %v3415, 1.0
    %v3418 = vrcp.pop %v3416
    %v3419 = vmul.f32 %v3416, %v3418
    %v3420 = vsub.f32 1.0, %v3419
    %v3421 = vmul.f32 %v3418, %v3420
    %v3422 = vadd.f32 %v3418, %v3421
    %vm3423 = vweird.f32 %v3416
    %vm3424 = vweird.f32 %v3418
    %vm3425 = vmor %vm3423, %vm3424
    %v3426 = vsel %vm3425, %v3418, %v3422
    %v3427 = vand.u32 2147483647, %v3416
    %vm3428 = vcmp.eq.f32.partialorder %v3427, 8.507059e+37
    %v3429 = vand.u32 %v3416, 2147483648
    %v3430 = vor.u32 1.1754944e-38, %v3429
    %v3431 = vsel %vm3428, %v3430, %v3426
    %v3432 = vmul.f32 1.0, %v3431
    %v3433 = vrcp.pop %v3417
    %v3434 = vmul.f32 %v3417, %v3433
    %v3435 = vsub.f32 1.0, %v3434
    %v3436 = vmul.f32 %v3433, %v3435
    %v3437 = vadd.f32 %v3433, %v3436
    %vm3438 = vweird.f32 %v3417
    %vm3439 = vweird.f32 %v3433
    %vm3440 = vmor %vm3438, %vm3439
    %v3441 = vsel %vm3440, %v3433, %v3437
    %v3442 = vand.u32 2147483647, %v3417
    %vm3443 = vcmp.eq.f32.partialorder %v3442, 8.507059e+37
    %v3444 = vand.u32 %v3417, 2147483648
    %v3445 = vor.u32 1.1754944e-38, %v3444
    %v3446 = vsel %vm3443, %v3445, %v3441
    %v3447 = vmul.f32 1.0, %v3446
    %v3448 = vtanh.pop %v3358
    %v3449 = vtanh.pop %v3362
    %v3450 = vxor.u32 %v3359, 2147483648
    %v3451 = vxor.u32 %v3363, 2147483648
    %v3452 = vmul.f32 %v3450, 1.442695
    %v3453 = vpow.pop %v3452
    %v3454 = vmul.f32 %v3451, 1.442695
    %v3455 = vpow.pop %v3454
    %v3456 = vadd.f32 %v3453, 1.0
    %v3457 = vadd.f32 %v3455, 1.0
    %v3458 = vrcp.pop %v3456
    %v3459 = vmul.f32 %v3456, %v3458
    %v3460 = vsub.f32 1.0, %v3459
    %v3461 = vmul.f32 %v3458, %v3460
    %v3462 = vadd.f32 %v3458, %v3461
    %vm3463 = vweird.f32 %v3456
    %vm3464 = vweird.f32 %v3458
    %vm3465 = vmor %vm3463, %vm3464
    %v3466 = vsel %vm3465, %v3458, %v3462
    %v3467 = vand.u32 2147483647, %v3456
    %vm3468 = vcmp.eq.f32.partialorder %v3467, 8.507059e+37
    %v3469 = vand.u32 %v3456, 2147483648
    %v3470 = vor.u32 1.1754944e-38, %v3469
    %v3471 = vsel %vm3468, %v3470, %v3466
    %v3472 = vmul.f32 1.0, %v3471
    %v3473 = vrcp.pop %v3457
    %v3474 = vmul.f32 %v3457, %v3473
    %v3475 = vsub.f32 1.0, %v3474
    %v3476 = vmul.f32 %v3473, %v3475
    %v3477 = vadd.f32 %v3473, %v3476
    %vm3478 = vweird.f32 %v3457
    %vm3479 = vweird.f32 %v3473
    %vm3480 = vmor %vm3478, %vm3479
    %v3481 = vsel %vm3480, %v3473, %v3477
    %v3482 = vand.u32 2147483647, %v3457
    %vm3483 = vcmp.eq.f32.partialorder %v3482, 8.507059e+37
    %v3484 = vand.u32 %v3457, 2147483648
    %v3485 = vor.u32 1.1754944e-38, %v3484
    %v3486 = vsel %vm3483, %v3485, %v3481
    %v3487 = vmul.f32 1.0, %v3486
    %v3488 = vmul.f32 %v3432, %v2973
    %v3489 = vmul.f32 %v3447, %v2974
    %v3490 = vmul.f32 %v3394, %v3448
    %v3491 = vmul.f32 %v3409, %v3449
    %v3492 = vadd.f32 %v3488, %v3490
    %v3493 = vadd.f32 %v3489, %v3491
    %v3494 = vtanh.pop %v3492
    %v3495 = vtanh.pop %v3493
    %v3496 = vmul.f32 %v3472, %v3494
    %v3497 = vmul.f32 %v3487, %v3495
    %v3498 = vxor.u32 %v3364, 2147483648
    %v3499 = vxor.u32 %v3368, 2147483648
    %v3500 = vmul.f32 %v3498, 1.442695
    %v3501 = vpow.pop %v3500
    %v3502 = vmul.f32 %v3499, 1.442695
    %v3503 = vpow.pop %v3502
    %v3504 = vadd.f32 %v3501, 1.0
    %v3505 = vadd.f32 %v3503, 1.0
    %v3506 = vrcp.pop %v3504
    %v3507 = vmul.f32 %v3504, %v3506
    %v3508 = vsub.f32 1.0, %v3507
    %v3509 = vmul.f32 %v3506, %v3508
    %v3510 = vadd.f32 %v3506, %v3509
    %vm3511 = vweird.f32 %v3504
    %vm3512 = vweird.f32 %v3506
    %vm3513 = vmor %vm3511, %vm3512
    %v3514 = vsel %vm3513, %v3506, %v3510
    %v3515 = vand.u32 2147483647, %v3504
    %vm3516 = vcmp.eq.f32.partialorder %v3515, 8.507059e+37
    %v3517 = vand.u32 %v3504, 2147483648
    %v3518 = vor.u32 1.1754944e-38, %v3517
    %v3519 = vsel %vm3516, %v3518, %v3514
    %v3520 = vmul.f32 1.0, %v3519
    %v3521 = vrcp.pop %v3505
    %v3522 = vmul.f32 %v3505, %v3521
    %v3523 = vsub.f32 1.0, %v3522
    %v3524 = vmul.f32 %v3521, %v3523
    %v3525 = vadd.f32 %v3521, %v3524
    %vm3526 = vweird.f32 %v3505
    %vm3527 = vweird.f32 %v3521
    %vm3528 = vmor %vm3526, %vm3527
    %v3529 = vsel %vm3528, %v3521, %v3525
    %v3530 = vand.u32 2147483647, %v3505
    %vm3531 = vcmp.eq.f32.partialorder %v3530, 8.507059e+37
    %v3532 = vand.u32 %v3505, 2147483648
    %v3533 = vor.u32 1.1754944e-38, %v3532
    %v3534 = vsel %vm3531, %v3533, %v3529
    %v3535 = vmul.f32 1.0, %v3534
    %v3536 = vxor.u32 %v3365, 2147483648
    %v3537 = vxor.u32 %v3369, 2147483648
    %v3538 = vmul.f32 %v3536, 1.442695
    %v3539 = vpow.pop %v3538
    %v3540 = vmul.f32 %v3537, 1.442695
    %v3541 = vpow.pop %v3540
    %v3542 = vadd.f32 %v3539, 1.0
    %v3543 = vadd.f32 %v3541, 1.0
    %v3544 = vrcp.pop %v3542
    %v3545 = vmul.f32 %v3542, %v3544
    %v3546 = vsub.f32 1.0, %v3545
    %v3547 = vmul.f32 %v3544, %v3546
    %v3548 = vadd.f32 %v3544, %v3547
    %vm3549 = vweird.f32 %v3542
    %vm3550 = vweird.f32 %v3544
    %vm3551 = vmor %vm3549, %vm3550
    %v3552 = vsel %vm3551, %v3544, %v3548
    %v3553 = vand.u32 2147483647, %v3542
    %vm3554 = vcmp.eq.f32.partialorder %v3553, 8.507059e+37
    %v3555 = vand.u32 %v3542, 2147483648
    %v3556 = vor.u32 1.1754944e-38, %v3555
    %v3557 = vsel %vm3554, %v3556, %v3552
    %v3558 = vmul.f32 1.0, %v3557
    %v3559 = vrcp.pop %v3543
    %v3560 = vmul.f32 %v3543, %v3559
    %v3561 = vsub.f32 1.0, %v3560
    %v3562 = vmul.f32 %v3559, %v3561
    %v3563 = vadd.f32 %v3559, %v3562
    %vm3564 = vweird.f32 %v3543
    %vm3565 = vweird.f32 %v3559
    %vm3566 = vmor %vm3564, %vm3565
    %v3567 = vsel %vm3566, %v3559, %v3563
    %v3568 = vand.u32 2147483647, %v3543
    %vm3569 = vcmp.eq.f32.partialorder %v3568, 8.507059e+37
    %v3570 = vand.u32 %v3543, 2147483648
    %v3571 = vor.u32 1.1754944e-38, %v3570
    %v3572 = vsel %vm3569, %v3571, %v3567
    %v3573 = vmul.f32 1.0, %v3572
    %v3574 = vtanh.pop %v3366
    %v3575 = vtanh.pop %v3370
    %v3576 = vxor.u32 %v3367, 2147483648
    %v3577 = vxor.u32 %v3371, 2147483648
    %v3578 = vmul.f32 %v3576, 1.442695
    %v3579 = vpow.pop %v3578
    %v3580 = vmul.f32 %v3577, 1.442695
    %v3581 = vpow.pop %v3580
    %v3582 = vadd.f32 %v3579, 1.0
    %v3583 = vadd.f32 %v3581, 1.0
    %v3584 = vrcp.pop %v3582
    %v3585 = vmul.f32 %v3582, %v3584
    %v3586 = vsub.f32 1.0, %v3585
    %v3587 = vmul.f32 %v3584, %v3586
    %v3588 = vadd.f32 %v3584, %v3587
    %vm3589 = vweird.f32 %v3582
    %vm3590 = vweird.f32 %v3584
    %vm3591 = vmor %vm3589, %vm3590
    %v3592 = vsel %vm3591, %v3584, %v3588
    %v3593 = vand.u32 2147483647, %v3582
    %vm3594 = vcmp.eq.f32.partialorder %v3593, 8.507059e+37
    %v3595 = vand.u32 %v3582, 2147483648
    %v3596 = vor.u32 1.1754944e-38, %v3595
    %v3597 = vsel %vm3594, %v3596, %v3592
    %v3598 = vmul.f32 1.0, %v3597
    %v3599 = vrcp.pop %v3583
    %v3600 = vmul.f32 %v3583, %v3599
    %v3601 = vsub.f32 1.0, %v3600
    %v3602 = vmul.f32 %v3599, %v3601
    %v3603 = vadd.f32 %v3599, %v3602
    %vm3604 = vweird.f32 %v3583
    %vm3605 = vweird.f32 %v3599
    %vm3606 = vmor %vm3604, %vm3605
    %v3607 = vsel %vm3606, %v3599, %v3603
    %v3608 = vand.u32 2147483647, %v3583
    %vm3609 = vcmp.eq.f32.partialorder %v3608, 8.507059e+37
    %v3610 = vand.u32 %v3583, 2147483648
    %v3611 = vor.u32 1.1754944e-38, %v3610
    %v3612 = vsel %vm3609, %v3611, %v3607
    %v3613 = vmul.f32 1.0, %v3612
    %v3614 = vmul.f32 %v3558, %v3099
    %v3615 = vmul.f32 %v3573, %v3100
    %v3616 = vmul.f32 %v3520, %v3574
    %v3617 = vmul.f32 %v3535, %v3575
    %v3618 = vadd.f32 %v3614, %v3616
    %v3619 = vadd.f32 %v3615, %v3617
    %v3620 = vtanh.pop %v3618
    %v3621 = vtanh.pop %v3619
    %v3622 = vmul.f32 %v3598, %v3620
    %v3623 = vmul.f32 %v3613, %v3621
    %v3624 = vpack.c.bf16 %v3496, %v3496
    %v3625 = vpack.c.bf16 %v3497, %v3497
    %v3626 = vpack.c.bf16 %v3622, %v3622
    %v3627 = vpack.c.bf16 %v3623, %v3623
    %v3630 = vunpack.c.l.b16 %v3624
    %v3631 = vunpack.c.l.b16 %v3625
    %v3632 = vpack.c.b16 %v3631, %v3630
    %v3636 = vunpack.c.l.b16 %v3626
    %v3637 = vunpack.c.l.b16 %v3627
    %v3638 = vpack.c.b16 %v3637, %v3636
    %3640 = vmatpush.bf16.msra.mxu0 %v1364
    %3641 = vmatpush.bf16.msra.mxu0 %v1356
    %3642 = vmatpush.bf16.msra.mxu0 %v1348
    %3643 = vmatpush.bf16.msra.mxu0 %v1340
    %3644 = vmatpush.bf16.msra.mxu0 %v1332
    %3645 = vmatpush.bf16.msra.mxu0 %v1324
    %3646 = vmatpush.bf16.msra.mxu0 %v1316
    %3647 = vmatpush.bf16.msra.mxu0 %v1308
    %3648 = vmatmul.bf16.gmra.mxu0 %v3632
    %v3649 = vpop.f32.mrf.mxu0
    %v3650 = vadd.f32 0.0, %v3649
    %v3651 = vpop.f32.mrf.mxu0
    %v3652 = vadd.f32 0.0, %v3651
    %3653 = vdwg.mxu0
    %3654 = vmatpush.bf16.msra.mxu0 %v1428
    %3655 = vmatpush.bf16.msra.mxu0 %v1420
    %3656 = vmatpush.bf16.msra.mxu0 %v1412
    %3657 = vmatpush.bf16.msra.mxu0 %v1404
    %3658 = vmatpush.bf16.msra.mxu0 %v1396
    %3659 = vmatpush.bf16.msra.mxu0 %v1388
    %3660 = vmatpush.bf16.msra.mxu0 %v1380
    %3661 = vmatpush.bf16.msra.mxu0 %v1372
    %3662 = vmatmul.bf16.gmra.mxu0 %v3638
    %v3663 = vpop.f32.mrf.mxu0
    %v3664 = vadd.f32 %v3650, %v3663
    %v3665 = vpop.f32.mrf.mxu0
    %v3666 = vadd.f32 %v3652, %v3665
    %3667 = vdwg.mxu0
    %3668 = vmatpush.bf16.msra.mxu0 %v1365
    %3669 = vmatpush.bf16.msra.mxu0 %v1357
    %3670 = vmatpush.bf16.msra.mxu0 %v1349
    %3671 = vmatpush.bf16.msra.mxu0 %v1341
    %3672 = vmatpush.bf16.msra.mxu0 %v1333
    %3673 = vmatpush.bf16.msra.mxu0 %v1325
    %3674 = vmatpush.bf16.msra.mxu0 %v1317
    %3675 = vmatpush.bf16.msra.mxu0 %v1309
    %3676 = vmatmul.bf16.gmra.mxu0 %v3632
    %v3677 = vpop.f32.mrf.mxu0
    %v3678 = vadd.f32 0.0, %v3677
    %v3679 = vpop.f32.mrf.mxu0
    %v3680 = vadd.f32 0.0, %v3679
    %3681 = vdwg.mxu0
    %3682 = vmatpush.bf16.msra.mxu0 %v1429
    %3683 = vmatpush.bf16.msra.mxu0 %v1421
    %3684 = vmatpush.bf16.msra.mxu0 %v1413
    %3685 = vmatpush.bf16.msra.mxu0 %v1405
    %3686 = vmatpush.bf16.msra.mxu0 %v1397
    %3687 = vmatpush.bf16.msra.mxu0 %v1389
    %3688 = vmatpush.bf16.msra.mxu0 %v1381
    %3689 = vmatpush.bf16.msra.mxu0 %v1373
    %3690 = vmatmul.bf16.gmra.mxu0 %v3638
    %v3691 = vpop.f32.mrf.mxu0
    %v3692 = vadd.f32 %v3678, %v3691
    %v3693 = vpop.f32.mrf.mxu0
    %v3694 = vadd.f32 %v3680, %v3693
    %3695 = vdwg.mxu0
    %3696 = vmatpush.bf16.msra.mxu0 %v1366
    %3697 = vmatpush.bf16.msra.mxu0 %v1358
    %3698 = vmatpush.bf16.msra.mxu0 %v1350
    %3699 = vmatpush.bf16.msra.mxu0 %v1342
    %3700 = vmatpush.bf16.msra.mxu0 %v1334
    %3701 = vmatpush.bf16.msra.mxu0 %v1326
    %3702 = vmatpush.bf16.msra.mxu0 %v1318
    %3703 = vmatpush.bf16.msra.mxu0 %v1310
    %3704 = vmatmul.bf16.gmra.mxu0 %v3632
    %v3705 = vpop.f32.mrf.mxu0
    %v3706 = vadd.f32 0.0, %v3705
    %v3707 = vpop.f32.mrf.mxu0
    %v3708 = vadd.f32 0.0, %v3707
    %3709 = vdwg.mxu0
    %3710 = vmatpush.bf16.msra.mxu0 %v1430
    %3711 = vmatpush.bf16.msra.mxu0 %v1422
    %3712 = vmatpush.bf16.msra.mxu0 %v1414
    %3713 = vmatpush.bf16.msra.mxu0 %v1406
    %3714 = vmatpush.bf16.msra.mxu0 %v1398
    %3715 = vmatpush.bf16.msra.mxu0 %v1390
    %3716 = vmatpush.bf16.msra.mxu0 %v1382
    %3717 = vmatpush.bf16.msra.mxu0 %v1374
    %3718 = vmatmul.bf16.gmra.mxu0 %v3638
    %v3719 = vpop.f32.mrf.mxu0
    %v3720 = vadd.f32 %v3706, %v3719
    %v3721 = vpop.f32.mrf.mxu0
    %v3722 = vadd.f32 %v3708, %v3721
    %3723 = vdwg.mxu0
    %3724 = vmatpush.bf16.msra.mxu0 %v1367
    %3725 = vmatpush.bf16.msra.mxu0 %v1359
    %3726 = vmatpush.bf16.msra.mxu0 %v1351
    %3727 = vmatpush.bf16.msra.mxu0 %v1343
    %3728 = vmatpush.bf16.msra.mxu0 %v1335
    %3729 = vmatpush.bf16.msra.mxu0 %v1327
    %3730 = vmatpush.bf16.msra.mxu0 %v1319
    %3731 = vmatpush.bf16.msra.mxu0 %v1311
    %3732 = vmatmul.bf16.gmra.mxu0 %v3632
    %v3733 = vpop.f32.mrf.mxu0
    %v3734 = vadd.f32 0.0, %v3733
    %v3735 = vpop.f32.mrf.mxu0
    %v3736 = vadd.f32 0.0, %v3735
    %3737 = vdwg.mxu0
    %3738 = vmatpush.bf16.msra.mxu0 %v1431
    %3739 = vmatpush.bf16.msra.mxu0 %v1423
    %3740 = vmatpush.bf16.msra.mxu0 %v1415
    %3741 = vmatpush.bf16.msra.mxu0 %v1407
    %3742 = vmatpush.bf16.msra.mxu0 %v1399
    %3743 = vmatpush.bf16.msra.mxu0 %v1391
    %3744 = vmatpush.bf16.msra.mxu0 %v1383
    %3745 = vmatpush.bf16.msra.mxu0 %v1375
    %3746 = vmatmul.bf16.gmra.mxu0 %v3638
    %v3747 = vpop.f32.mrf.mxu0
    %v3748 = vadd.f32 %v3734, %v3747
    %v3749 = vpop.f32.mrf.mxu0
    %v3750 = vadd.f32 %v3736, %v3749
    %3751 = vdwg.mxu0
    %3752 = vmatpush.bf16.msra.mxu0 %v1368
    %3753 = vmatpush.bf16.msra.mxu0 %v1360
    %3754 = vmatpush.bf16.msra.mxu0 %v1352
    %3755 = vmatpush.bf16.msra.mxu0 %v1344
    %3756 = vmatpush.bf16.msra.mxu0 %v1336
    %3757 = vmatpush.bf16.msra.mxu0 %v1328
    %3758 = vmatpush.bf16.msra.mxu0 %v1320
    %3759 = vmatpush.bf16.msra.mxu0 %v1312
    %3760 = vmatmul.bf16.gmra.mxu0 %v3632
    %v3761 = vpop.f32.mrf.mxu0
    %v3762 = vadd.f32 0.0, %v3761
    %v3763 = vpop.f32.mrf.mxu0
    %v3764 = vadd.f32 0.0, %v3763
    %3765 = vdwg.mxu0
    %3766 = vmatpush.bf16.msra.mxu0 %v1432
    %3767 = vmatpush.bf16.msra.mxu0 %v1424
    %3768 = vmatpush.bf16.msra.mxu0 %v1416
    %3769 = vmatpush.bf16.msra.mxu0 %v1408
    %3770 = vmatpush.bf16.msra.mxu0 %v1400
    %3771 = vmatpush.bf16.msra.mxu0 %v1392
    %3772 = vmatpush.bf16.msra.mxu0 %v1384
    %3773 = vmatpush.bf16.msra.mxu0 %v1376
    %3774 = vmatmul.bf16.gmra.mxu0 %v3638
    %v3775 = vpop.f32.mrf.mxu0
    %v3776 = vadd.f32 %v3762, %v3775
    %v3777 = vpop.f32.mrf.mxu0
    %v3778 = vadd.f32 %v3764, %v3777
    %3779 = vdwg.mxu0
    %3780 = vmatpush.bf16.msra.mxu0 %v1369
    %3781 = vmatpush.bf16.msra.mxu0 %v1361
    %3782 = vmatpush.bf16.msra.mxu0 %v1353
    %3783 = vmatpush.bf16.msra.mxu0 %v1345
    %3784 = vmatpush.bf16.msra.mxu0 %v1337
    %3785 = vmatpush.bf16.msra.mxu0 %v1329
    %3786 = vmatpush.bf16.msra.mxu0 %v1321
    %3787 = vmatpush.bf16.msra.mxu0 %v1313
    %3788 = vmatmul.bf16.gmra.mxu0 %v3632
    %v3789 = vpop.f32.mrf.mxu0
    %v3790 = vadd.f32 0.0, %v3789
    %v3791 = vpop.f32.mrf.mxu0
    %v3792 = vadd.f32 0.0, %v3791
    %3793 = vdwg.mxu0
    %3794 = vmatpush.bf16.msra.mxu0 %v1433
    %3795 = vmatpush.bf16.msra.mxu0 %v1425
    %3796 = vmatpush.bf16.msra.mxu0 %v1417
    %3797 = vmatpush.bf16.msra.mxu0 %v1409
    %3798 = vmatpush.bf16.msra.mxu0 %v1401
    %3799 = vmatpush.bf16.msra.mxu0 %v1393
    %3800 = vmatpush.bf16.msra.mxu0 %v1385
    %3801 = vmatpush.bf16.msra.mxu0 %v1377
    %3802 = vmatmul.bf16.gmra.mxu0 %v3638
    %v3803 = vpop.f32.mrf.mxu0
    %v3804 = vadd.f32 %v3790, %v3803
    %v3805 = vpop.f32.mrf.mxu0
    %v3806 = vadd.f32 %v3792, %v3805
    %3807 = vdwg.mxu0
    %3808 = vmatpush.bf16.msra.mxu0 %v1370
    %3809 = vmatpush.bf16.msra.mxu0 %v1362
    %3810 = vmatpush.bf16.msra.mxu0 %v1354
    %3811 = vmatpush.bf16.msra.mxu0 %v1346
    %3812 = vmatpush.bf16.msra.mxu0 %v1338
    %3813 = vmatpush.bf16.msra.mxu0 %v1330
    %3814 = vmatpush.bf16.msra.mxu0 %v1322
    %3815 = vmatpush.bf16.msra.mxu0 %v1314
    %3816 = vmatmul.bf16.gmra.mxu0 %v3632
    %v3817 = vpop.f32.mrf.mxu0
    %v3818 = vadd.f32 0.0, %v3817
    %v3819 = vpop.f32.mrf.mxu0
    %v3820 = vadd.f32 0.0, %v3819
    %3821 = vdwg.mxu0
    %3822 = vmatpush.bf16.msra.mxu0 %v1434
    %3823 = vmatpush.bf16.msra.mxu0 %v1426
    %3824 = vmatpush.bf16.msra.mxu0 %v1418
    %3825 = vmatpush.bf16.msra.mxu0 %v1410
    %3826 = vmatpush.bf16.msra.mxu0 %v1402
    %3827 = vmatpush.bf16.msra.mxu0 %v1394
    %3828 = vmatpush.bf16.msra.mxu0 %v1386
    %3829 = vmatpush.bf16.msra.mxu0 %v1378
    %3830 = vmatmul.bf16.gmra.mxu0 %v3638
    %v3831 = vpop.f32.mrf.mxu0
    %v3832 = vadd.f32 %v3818, %v3831
    %v3833 = vpop.f32.mrf.mxu0
    %v3834 = vadd.f32 %v3820, %v3833
    %3835 = vdwg.mxu0
    %3836 = vmatpush.bf16.msra.mxu0 %v1371
    %3837 = vmatpush.bf16.msra.mxu0 %v1363
    %3838 = vmatpush.bf16.msra.mxu0 %v1355
    %3839 = vmatpush.bf16.msra.mxu0 %v1347
    %3840 = vmatpush.bf16.msra.mxu0 %v1339
    %3841 = vmatpush.bf16.msra.mxu0 %v1331
    %3842 = vmatpush.bf16.msra.mxu0 %v1323
    %3843 = vmatpush.bf16.msra.mxu0 %v1315
    %3844 = vmatmul.bf16.gmra.mxu0 %v3632
    %v3845 = vpop.f32.mrf.mxu0
    %v3846 = vadd.f32 0.0, %v3845
    %v3847 = vpop.f32.mrf.mxu0
    %v3848 = vadd.f32 0.0, %v3847
    %3849 = vdwg.mxu0
    %3850 = vmatpush.bf16.msra.mxu0 %v1435
    %3851 = vmatpush.bf16.msra.mxu0 %v1427
    %3852 = vmatpush.bf16.msra.mxu0 %v1419
    %3853 = vmatpush.bf16.msra.mxu0 %v1411
    %3854 = vmatpush.bf16.msra.mxu0 %v1403
    %3855 = vmatpush.bf16.msra.mxu0 %v1395
    %3856 = vmatpush.bf16.msra.mxu0 %v1387
    %3857 = vmatpush.bf16.msra.mxu0 %v1379
    %3858 = vmatmul.bf16.gmra.mxu0 %v3638
    %v3859 = vpop.f32.mrf.mxu0
    %v3860 = vadd.f32 %v3846, %v3859
    %v3861 = vpop.f32.mrf.mxu0
    %v3862 = vadd.f32 %v3848, %v3861
    %3863 = vdwg.mxu0
    %s3864 = smul.u32 10, 4
    %s3865 = smul.addr %s3864, 8
    %s3866 = scalar_lea.vmem [#allocation2], %s3865
    %v3867 = vld [vmem:[%s3866] sm:$0xff]
    %v3868 = vld [vmem:[%s3866 + $0x8] sm:$0xff]
    %v3869 = vld [vmem:[%s3866 + $0x10] sm:$0xff]
    %v3870 = vld [vmem:[%s3866 + $0x18] sm:$0xff]
    %v3871 = vld [vmem:[%s3866 + $0x20] sm:$0xff]
    %v3872 = vld [vmem:[%s3866 + $0x28] sm:$0xff]
    %v3873 = vld [vmem:[%s3866 + $0x30] sm:$0xff]
    %v3874 = vld [vmem:[%s3866 + $0x38] sm:$0xff]
    %v3875 = vadd.f32 %v3867, %v3664
    %v3876 = vadd.f32 %v3868, %v3692
    %v3877 = vadd.f32 %v3869, %v3720
    %v3878 = vadd.f32 %v3870, %v3748
    %v3879 = vadd.f32 %v3871, %v3666
    %v3880 = vadd.f32 %v3872, %v3694
    %v3881 = vadd.f32 %v3873, %v3722
    %v3882 = vadd.f32 %v3874, %v3750
    %v3883 = vadd.f32 %v774, %v3776
    %v3884 = vadd.f32 %v775, %v3804
    %v3885 = vadd.f32 %v776, %v3832
    %v3886 = vadd.f32 %v777, %v3860
    %v3887 = vadd.f32 %v774, %v3778
    %v3888 = vadd.f32 %v775, %v3806
    %v3889 = vadd.f32 %v776, %v3834
    %v3890 = vadd.f32 %v777, %v3862
    %v3891 = vxor.u32 %v3875, 2147483648
    %v3892 = vxor.u32 %v3879, 2147483648
    %v3893 = vmul.f32 %v3891, 1.442695
    %v3894 = vpow.pop %v3893
    %v3895 = vmul.f32 %v3892, 1.442695
    %v3896 = vpow.pop %v3895
    %v3897 = vadd.f32 %v3894, 1.0
    %v3898 = vadd.f32 %v3896, 1.0
    %v3899 = vrcp.pop %v3897
    %v3900 = vmul.f32 %v3897, %v3899
    %v3901 = vsub.f32 1.0, %v3900
    %v3902 = vmul.f32 %v3899, %v3901
    %v3903 = vadd.f32 %v3899, %v3902
    %vm3904 = vweird.f32 %v3897
    %vm3905 = vweird.f32 %v3899
    %vm3906 = vmor %vm3904, %vm3905
    %v3907 = vsel %vm3906, %v3899, %v3903
    %v3908 = vand.u32 2147483647, %v3897
    %vm3909 = vcmp.eq.f32.partialorder %v3908, 8.507059e+37
    %v3910 = vand.u32 %v3897, 2147483648
    %v3911 = vor.u32 1.1754944e-38, %v3910
    %v3912 = vsel %vm3909, %v3911, %v3907
    %v3913 = vmul.f32 1.0, %v3912
    %v3914 = vrcp.pop %v3898
    %v3915 = vmul.f32 %v3898, %v3914
    %v3916 = vsub.f32 1.0, %v3915
    %v3917 = vmul.f32 %v3914, %v3916
    %v3918 = vadd.f32 %v3914, %v3917
    %vm3919 = vweird.f32 %v3898
    %vm3920 = vweird.f32 %v3914
    %vm3921 = vmor %vm3919, %vm3920
    %v3922 = vsel %vm3921, %v3914, %v3918
    %v3923 = vand.u32 2147483647, %v3898
    %vm3924 = vcmp.eq.f32.partialorder %v3923, 8.507059e+37
    %v3925 = vand.u32 %v3898, 2147483648
    %v3926 = vor.u32 1.1754944e-38, %v3925
    %v3927 = vsel %vm3924, %v3926, %v3922
    %v3928 = vmul.f32 1.0, %v3927
    %v3929 = vxor.u32 %v3876, 2147483648
    %v3930 = vxor.u32 %v3880, 2147483648
    %v3931 = vmul.f32 %v3929, 1.442695
    %v3932 = vpow.pop %v3931
    %v3933 = vmul.f32 %v3930, 1.442695
    %v3934 = vpow.pop %v3933
    %v3935 = vadd.f32 %v3932, 1.0
    %v3936 = vadd.f32 %v3934, 1.0
    %v3937 = vrcp.pop %v3935
    %v3938 = vmul.f32 %v3935, %v3937
    %v3939 = vsub.f32 1.0, %v3938
    %v3940 = vmul.f32 %v3937, %v3939
    %v3941 = vadd.f32 %v3937, %v3940
    %vm3942 = vweird.f32 %v3935
    %vm3943 = vweird.f32 %v3937
    %vm3944 = vmor %vm3942, %vm3943
    %v3945 = vsel %vm3944, %v3937, %v3941
    %v3946 = vand.u32 2147483647, %v3935
    %vm3947 = vcmp.eq.f32.partialorder %v3946, 8.507059e+37
    %v3948 = vand.u32 %v3935, 2147483648
    %v3949 = vor.u32 1.1754944e-38, %v3948
    %v3950 = vsel %vm3947, %v3949, %v3945
    %v3951 = vmul.f32 1.0, %v3950
    %v3952 = vrcp.pop %v3936
    %v3953 = vmul.f32 %v3936, %v3952
    %v3954 = vsub.f32 1.0, %v3953
    %v3955 = vmul.f32 %v3952, %v3954
    %v3956 = vadd.f32 %v3952, %v3955
    %vm3957 = vweird.f32 %v3936
    %vm3958 = vweird.f32 %v3952
    %vm3959 = vmor %vm3957, %vm3958
    %v3960 = vsel %vm3959, %v3952, %v3956
    %v3961 = vand.u32 2147483647, %v3936
    %vm3962 = vcmp.eq.f32.partialorder %v3961, 8.507059e+37
    %v3963 = vand.u32 %v3936, 2147483648
    %v3964 = vor.u32 1.1754944e-38, %v3963
    %v3965 = vsel %vm3962, %v3964, %v3960
    %v3966 = vmul.f32 1.0, %v3965
    %v3967 = vtanh.pop %v3877
    %v3968 = vtanh.pop %v3881
    %v3969 = vxor.u32 %v3878, 2147483648
    %v3970 = vxor.u32 %v3882, 2147483648
    %v3971 = vmul.f32 %v3969, 1.442695
    %v3972 = vpow.pop %v3971
    %v3973 = vmul.f32 %v3970, 1.442695
    %v3974 = vpow.pop %v3973
    %v3975 = vadd.f32 %v3972, 1.0
    %v3976 = vadd.f32 %v3974, 1.0
    %v3977 = vrcp.pop %v3975
    %v3978 = vmul.f32 %v3975, %v3977
    %v3979 = vsub.f32 1.0, %v3978
    %v3980 = vmul.f32 %v3977, %v3979
    %v3981 = vadd.f32 %v3977, %v3980
    %vm3982 = vweird.f32 %v3975
    %vm3983 = vweird.f32 %v3977
    %vm3984 = vmor %vm3982, %vm3983
    %v3985 = vsel %vm3984, %v3977, %v3981
    %v3986 = vand.u32 2147483647, %v3975
    %vm3987 = vcmp.eq.f32.partialorder %v3986, 8.507059e+37
    %v3988 = vand.u32 %v3975, 2147483648
    %v3989 = vor.u32 1.1754944e-38, %v3988
    %v3990 = vsel %vm3987, %v3989, %v3985
    %v3991 = vmul.f32 1.0, %v3990
    %v3992 = vrcp.pop %v3976
    %v3993 = vmul.f32 %v3976, %v3992
    %v3994 = vsub.f32 1.0, %v3993
    %v3995 = vmul.f32 %v3992, %v3994
    %v3996 = vadd.f32 %v3992, %v3995
    %vm3997 = vweird.f32 %v3976
    %vm3998 = vweird.f32 %v3992
    %vm3999 = vmor %vm3997, %vm3998
    %v4000 = vsel %vm3999, %v3992, %v3996
    %v4001 = vand.u32 2147483647, %v3976
    %vm4002 = vcmp.eq.f32.partialorder %v4001, 8.507059e+37
    %v4003 = vand.u32 %v3976, 2147483648
    %v4004 = vor.u32 1.1754944e-38, %v4003
    %v4005 = vsel %vm4002, %v4004, %v4000
    %v4006 = vmul.f32 1.0, %v4005
    %v4007 = vmul.f32 %v3951, %v3492
    %v4008 = vmul.f32 %v3966, %v3493
    %v4009 = vmul.f32 %v3913, %v3967
    %v4010 = vmul.f32 %v3928, %v3968
    %v4011 = vadd.f32 %v4007, %v4009
    %v4012 = vadd.f32 %v4008, %v4010
    %v4013 = vtanh.pop %v4011
    %v4014 = vtanh.pop %v4012
    %v4015 = vmul.f32 %v3991, %v4013
    %v4016 = vmul.f32 %v4006, %v4014
    %v4017 = vxor.u32 %v3883, 2147483648
    %v4018 = vxor.u32 %v3887, 2147483648
    %v4019 = vmul.f32 %v4017, 1.442695
    %v4020 = vpow.pop %v4019
    %v4021 = vmul.f32 %v4018, 1.442695
    %v4022 = vpow.pop %v4021
    %v4023 = vadd.f32 %v4020, 1.0
    %v4024 = vadd.f32 %v4022, 1.0
    %v4025 = vrcp.pop %v4023
    %v4026 = vmul.f32 %v4023, %v4025
    %v4027 = vsub.f32 1.0, %v4026
    %v4028 = vmul.f32 %v4025, %v4027
    %v4029 = vadd.f32 %v4025, %v4028
    %vm4030 = vweird.f32 %v4023
    %vm4031 = vweird.f32 %v4025
    %vm4032 = vmor %vm4030, %vm4031
    %v4033 = vsel %vm4032, %v4025, %v4029
    %v4034 = vand.u32 2147483647, %v4023
    %vm4035 = vcmp.eq.f32.partialorder %v4034, 8.507059e+37
    %v4036 = vand.u32 %v4023, 2147483648
    %v4037 = vor.u32 1.1754944e-38, %v4036
    %v4038 = vsel %vm4035, %v4037, %v4033
    %v4039 = vmul.f32 1.0, %v4038
    %v4040 = vrcp.pop %v4024
    %v4041 = vmul.f32 %v4024, %v4040
    %v4042 = vsub.f32 1.0, %v4041
    %v4043 = vmul.f32 %v4040, %v4042
    %v4044 = vadd.f32 %v4040, %v4043
    %vm4045 = vweird.f32 %v4024
    %vm4046 = vweird.f32 %v4040
    %vm4047 = vmor %vm4045, %vm4046
    %v4048 = vsel %vm4047, %v4040, %v4044
    %v4049 = vand.u32 2147483647, %v4024
    %vm4050 = vcmp.eq.f32.partialorder %v4049, 8.507059e+37
    %v4051 = vand.u32 %v4024, 2147483648
    %v4052 = vor.u32 1.1754944e-38, %v4051
    %v4053 = vsel %vm4050, %v4052, %v4048
    %v4054 = vmul.f32 1.0, %v4053
    %v4055 = vxor.u32 %v3884, 2147483648
    %v4056 = vxor.u32 %v3888, 2147483648
    %v4057 = vmul.f32 %v4055, 1.442695
    %v4058 = vpow.pop %v4057
    %v4059 = vmul.f32 %v4056, 1.442695
    %v4060 = vpow.pop %v4059
    %v4061 = vadd.f32 %v4058, 1.0
    %v4062 = vadd.f32 %v4060, 1.0
    %v4063 = vrcp.pop %v4061
    %v4064 = vmul.f32 %v4061, %v4063
    %v4065 = vsub.f32 1.0, %v4064
    %v4066 = vmul.f32 %v4063, %v4065
    %v4067 = vadd.f32 %v4063, %v4066
    %vm4068 = vweird.f32 %v4061
    %vm4069 = vweird.f32 %v4063
    %vm4070 = vmor %vm4068, %vm4069
    %v4071 = vsel %vm4070, %v4063, %v4067
    %v4072 = vand.u32 2147483647, %v4061
    %vm4073 = vcmp.eq.f32.partialorder %v4072, 8.507059e+37
    %v4074 = vand.u32 %v4061, 2147483648
    %v4075 = vor.u32 1.1754944e-38, %v4074
    %v4076 = vsel %vm4073, %v4075, %v4071
    %v4077 = vmul.f32 1.0, %v4076
    %v4078 = vrcp.pop %v4062
    %v4079 = vmul.f32 %v4062, %v4078
    %v4080 = vsub.f32 1.0, %v4079
    %v4081 = vmul.f32 %v4078, %v4080
    %v4082 = vadd.f32 %v4078, %v4081
    %vm4083 = vweird.f32 %v4062
    %vm4084 = vweird.f32 %v4078
    %vm4085 = vmor %vm4083, %vm4084
    %v4086 = vsel %vm4085, %v4078, %v4082
    %v4087 = vand.u32 2147483647, %v4062
    %vm4088 = vcmp.eq.f32.partialorder %v4087, 8.507059e+37
    %v4089 = vand.u32 %v4062, 2147483648
    %v4090 = vor.u32 1.1754944e-38, %v4089
    %v4091 = vsel %vm4088, %v4090, %v4086
    %v4092 = vmul.f32 1.0, %v4091
    %v4093 = vtanh.pop %v3885
    %v4094 = vtanh.pop %v3889
    %v4095 = vxor.u32 %v3886, 2147483648
    %v4096 = vxor.u32 %v3890, 2147483648
    %v4097 = vmul.f32 %v4095, 1.442695
    %v4098 = vpow.pop %v4097
    %v4099 = vmul.f32 %v4096, 1.442695
    %v4100 = vpow.pop %v4099
    %v4101 = vadd.f32 %v4098, 1.0
    %v4102 = vadd.f32 %v4100, 1.0
    %v4103 = vrcp.pop %v4101
    %v4104 = vmul.f32 %v4101, %v4103
    %v4105 = vsub.f32 1.0, %v4104
    %v4106 = vmul.f32 %v4103, %v4105
    %v4107 = vadd.f32 %v4103, %v4106
    %vm4108 = vweird.f32 %v4101
    %vm4109 = vweird.f32 %v4103
    %vm4110 = vmor %vm4108, %vm4109
    %v4111 = vsel %vm4110, %v4103, %v4107
    %v4112 = vand.u32 2147483647, %v4101
    %vm4113 = vcmp.eq.f32.partialorder %v4112, 8.507059e+37
    %v4114 = vand.u32 %v4101, 2147483648
    %v4115 = vor.u32 1.1754944e-38, %v4114
    %v4116 = vsel %vm4113, %v4115, %v4111
    %v4117 = vmul.f32 1.0, %v4116
    %v4118 = vrcp.pop %v4102
    %v4119 = vmul.f32 %v4102, %v4118
    %v4120 = vsub.f32 1.0, %v4119
    %v4121 = vmul.f32 %v4118, %v4120
    %v4122 = vadd.f32 %v4118, %v4121
    %vm4123 = vweird.f32 %v4102
    %vm4124 = vweird.f32 %v4118
    %vm4125 = vmor %vm4123, %vm4124
    %v4126 = vsel %vm4125, %v4118, %v4122
    %v4127 = vand.u32 2147483647, %v4102
    %vm4128 = vcmp.eq.f32.partialorder %v4127, 8.507059e+37
    %v4129 = vand.u32 %v4102, 2147483648
    %v4130 = vor.u32 1.1754944e-38, %v4129
    %v4131 = vsel %vm4128, %v4130, %v4126
    %v4132 = vmul.f32 1.0, %v4131
    %v4133 = vmul.f32 %v4077, %v3618
    %v4134 = vmul.f32 %v4092, %v3619
    %v4135 = vmul.f32 %v4039, %v4093
    %v4136 = vmul.f32 %v4054, %v4094
    %v4137 = vadd.f32 %v4133, %v4135
    %v4138 = vadd.f32 %v4134, %v4136
    %v4139 = vtanh.pop %v4137
    %v4140 = vtanh.pop %v4138
    %v4141 = vmul.f32 %v4117, %v4139
    %v4142 = vmul.f32 %v4132, %v4140
    %v4143 = vpack.c.bf16 %v4015, %v4015
    %v4144 = vpack.c.bf16 %v4016, %v4016
    %v4145 = vpack.c.bf16 %v4141, %v4141
    %v4146 = vpack.c.bf16 %v4142, %v4142
    %v4149 = vunpack.c.l.b16 %v4143
    %v4150 = vunpack.c.l.b16 %v4144
    %v4151 = vpack.c.b16 %v4150, %v4149
    %v4155 = vunpack.c.l.b16 %v4145
    %v4156 = vunpack.c.l.b16 %v4146
    %v4157 = vpack.c.b16 %v4156, %v4155
    %4159 = vmatpush.bf16.msra.mxu0 %v1364
    %4160 = vmatpush.bf16.msra.mxu0 %v1356
    %4161 = vmatpush.bf16.msra.mxu0 %v1348
    %4162 = vmatpush.bf16.msra.mxu0 %v1340
    %4163 = vmatpush.bf16.msra.mxu0 %v1332
    %4164 = vmatpush.bf16.msra.mxu0 %v1324
    %4165 = vmatpush.bf16.msra.mxu0 %v1316
    %4166 = vmatpush.bf16.msra.mxu0 %v1308
    %4167 = vmatmul.bf16.gmra.mxu0 %v4151
    %v4168 = vpop.f32.mrf.mxu0
    %v4169 = vadd.f32 0.0, %v4168
    %v4170 = vpop.f32.mrf.mxu0
    %v4171 = vadd.f32 0.0, %v4170
    %4172 = vdwg.mxu0
    %4173 = vmatpush.bf16.msra.mxu0 %v1428
    %4174 = vmatpush.bf16.msra.mxu0 %v1420
    %4175 = vmatpush.bf16.msra.mxu0 %v1412
    %4176 = vmatpush.bf16.msra.mxu0 %v1404
    %4177 = vmatpush.bf16.msra.mxu0 %v1396
    %4178 = vmatpush.bf16.msra.mxu0 %v1388
    %4179 = vmatpush.bf16.msra.mxu0 %v1380
    %4180 = vmatpush.bf16.msra.mxu0 %v1372
    %4181 = vmatmul.bf16.gmra.mxu0 %v4157
    %v4182 = vpop.f32.mrf.mxu0
    %v4183 = vadd.f32 %v4169, %v4182
    %v4184 = vpop.f32.mrf.mxu0
    %v4185 = vadd.f32 %v4171, %v4184
    %4186 = vdwg.mxu0
    %4187 = vmatpush.bf16.msra.mxu0 %v1365
    %4188 = vmatpush.bf16.msra.mxu0 %v1357
    %4189 = vmatpush.bf16.msra.mxu0 %v1349
    %4190 = vmatpush.bf16.msra.mxu0 %v1341
    %4191 = vmatpush.bf16.msra.mxu0 %v1333
    %4192 = vmatpush.bf16.msra.mxu0 %v1325
    %4193 = vmatpush.bf16.msra.mxu0 %v1317
    %4194 = vmatpush.bf16.msra.mxu0 %v1309
    %4195 = vmatmul.bf16.gmra.mxu0 %v4151
    %v4196 = vpop.f32.mrf.mxu0
    %v4197 = vadd.f32 0.0, %v4196
    %v4198 = vpop.f32.mrf.mxu0
    %v4199 = vadd.f32 0.0, %v4198
    %4200 = vdwg.mxu0
    %4201 = vmatpush.bf16.msra.mxu0 %v1429
    %4202 = vmatpush.bf16.msra.mxu0 %v1421
    %4203 = vmatpush.bf16.msra.mxu0 %v1413
    %4204 = vmatpush.bf16.msra.mxu0 %v1405
    %4205 = vmatpush.bf16.msra.mxu0 %v1397
    %4206 = vmatpush.bf16.msra.mxu0 %v1389
    %4207 = vmatpush.bf16.msra.mxu0 %v1381
    %4208 = vmatpush.bf16.msra.mxu0 %v1373
    %4209 = vmatmul.bf16.gmra.mxu0 %v4157
    %v4210 = vpop.f32.mrf.mxu0
    %v4211 = vadd.f32 %v4197, %v4210
    %v4212 = vpop.f32.mrf.mxu0
    %v4213 = vadd.f32 %v4199, %v4212
    %4214 = vdwg.mxu0
    %4215 = vmatpush.bf16.msra.mxu0 %v1366
    %4216 = vmatpush.bf16.msra.mxu0 %v1358
    %4217 = vmatpush.bf16.msra.mxu0 %v1350
    %4218 = vmatpush.bf16.msra.mxu0 %v1342
    %4219 = vmatpush.bf16.msra.mxu0 %v1334
    %4220 = vmatpush.bf16.msra.mxu0 %v1326
    %4221 = vmatpush.bf16.msra.mxu0 %v1318
    %4222 = vmatpush.bf16.msra.mxu0 %v1310
    %4223 = vmatmul.bf16.gmra.mxu0 %v4151
    %v4224 = vpop.f32.mrf.mxu0
    %v4225 = vadd.f32 0.0, %v4224
    %v4226 = vpop.f32.mrf.mxu0
    %v4227 = vadd.f32 0.0, %v4226
    %4228 = vdwg.mxu0
    %4229 = vmatpush.bf16.msra.mxu0 %v1430
    %4230 = vmatpush.bf16.msra.mxu0 %v1422
    %4231 = vmatpush.bf16.msra.mxu0 %v1414
    %4232 = vmatpush.bf16.msra.mxu0 %v1406
    %4233 = vmatpush.bf16.msra.mxu0 %v1398
    %4234 = vmatpush.bf16.msra.mxu0 %v1390
    %4235 = vmatpush.bf16.msra.mxu0 %v1382
    %4236 = vmatpush.bf16.msra.mxu0 %v1374
    %4237 = vmatmul.bf16.gmra.mxu0 %v4157
    %v4238 = vpop.f32.mrf.mxu0
    %v4239 = vadd.f32 %v4225, %v4238
    %v4240 = vpop.f32.mrf.mxu0
    %v4241 = vadd.f32 %v4227, %v4240
    %4242 = vdwg.mxu0
    %4243 = vmatpush.bf16.msra.mxu0 %v1367
    %4244 = vmatpush.bf16.msra.mxu0 %v1359
    %4245 = vmatpush.bf16.msra.mxu0 %v1351
    %4246 = vmatpush.bf16.msra.mxu0 %v1343
    %4247 = vmatpush.bf16.msra.mxu0 %v1335
    %4248 = vmatpush.bf16.msra.mxu0 %v1327
    %4249 = vmatpush.bf16.msra.mxu0 %v1319
    %4250 = vmatpush.bf16.msra.mxu0 %v1311
    %4251 = vmatmul.bf16.gmra.mxu0 %v4151
    %v4252 = vpop.f32.mrf.mxu0
    %v4253 = vadd.f32 0.0, %v4252
    %v4254 = vpop.f32.mrf.mxu0
    %v4255 = vadd.f32 0.0, %v4254
    %4256 = vdwg.mxu0
    %4257 = vmatpush.bf16.msra.mxu0 %v1431
    %4258 = vmatpush.bf16.msra.mxu0 %v1423
    %4259 = vmatpush.bf16.msra.mxu0 %v1415
    %4260 = vmatpush.bf16.msra.mxu0 %v1407
    %4261 = vmatpush.bf16.msra.mxu0 %v1399
    %4262 = vmatpush.bf16.msra.mxu0 %v1391
    %4263 = vmatpush.bf16.msra.mxu0 %v1383
    %4264 = vmatpush.bf16.msra.mxu0 %v1375
    %4265 = vmatmul.bf16.gmra.mxu0 %v4157
    %v4266 = vpop.f32.mrf.mxu0
    %v4267 = vadd.f32 %v4253, %v4266
    %v4268 = vpop.f32.mrf.mxu0
    %v4269 = vadd.f32 %v4255, %v4268
    %4270 = vdwg.mxu0
    %4271 = vmatpush.bf16.msra.mxu0 %v1368
    %4272 = vmatpush.bf16.msra.mxu0 %v1360
    %4273 = vmatpush.bf16.msra.mxu0 %v1352
    %4274 = vmatpush.bf16.msra.mxu0 %v1344
    %4275 = vmatpush.bf16.msra.mxu0 %v1336
    %4276 = vmatpush.bf16.msra.mxu0 %v1328
    %4277 = vmatpush.bf16.msra.mxu0 %v1320
    %4278 = vmatpush.bf16.msra.mxu0 %v1312
    %4279 = vmatmul.bf16.gmra.mxu0 %v4151
    %v4280 = vpop.f32.mrf.mxu0
    %v4281 = vadd.f32 0.0, %v4280
    %v4282 = vpop.f32.mrf.mxu0
    %v4283 = vadd.f32 0.0, %v4282
    %4284 = vdwg.mxu0
    %4285 = vmatpush.bf16.msra.mxu0 %v1432
    %4286 = vmatpush.bf16.msra.mxu0 %v1424
    %4287 = vmatpush.bf16.msra.mxu0 %v1416
    %4288 = vmatpush.bf16.msra.mxu0 %v1408
    %4289 = vmatpush.bf16.msra.mxu0 %v1400
    %4290 = vmatpush.bf16.msra.mxu0 %v1392
    %4291 = vmatpush.bf16.msra.mxu0 %v1384
    %4292 = vmatpush.bf16.msra.mxu0 %v1376
    %4293 = vmatmul.bf16.gmra.mxu0 %v4157
    %v4294 = vpop.f32.mrf.mxu0
    %v4295 = vadd.f32 %v4281, %v4294
    %v4296 = vpop.f32.mrf.mxu0
    %v4297 = vadd.f32 %v4283, %v4296
    %4298 = vdwg.mxu0
    %4299 = vmatpush.bf16.msra.mxu0 %v1369
    %4300 = vmatpush.bf16.msra.mxu0 %v1361
    %4301 = vmatpush.bf16.msra.mxu0 %v1353
    %4302 = vmatpush.bf16.msra.mxu0 %v1345
    %4303 = vmatpush.bf16.msra.mxu0 %v1337
    %4304 = vmatpush.bf16.msra.mxu0 %v1329
    %4305 = vmatpush.bf16.msra.mxu0 %v1321
    %4306 = vmatpush.bf16.msra.mxu0 %v1313
    %4307 = vmatmul.bf16.gmra.mxu0 %v4151
    %v4308 = vpop.f32.mrf.mxu0
    %v4309 = vadd.f32 0.0, %v4308
    %v4310 = vpop.f32.mrf.mxu0
    %v4311 = vadd.f32 0.0, %v4310
    %4312 = vdwg.mxu0
    %4313 = vmatpush.bf16.msra.mxu0 %v1433
    %4314 = vmatpush.bf16.msra.mxu0 %v1425
    %4315 = vmatpush.bf16.msra.mxu0 %v1417
    %4316 = vmatpush.bf16.msra.mxu0 %v1409
    %4317 = vmatpush.bf16.msra.mxu0 %v1401
    %4318 = vmatpush.bf16.msra.mxu0 %v1393
    %4319 = vmatpush.bf16.msra.mxu0 %v1385
    %4320 = vmatpush.bf16.msra.mxu0 %v1377
    %4321 = vmatmul.bf16.gmra.mxu0 %v4157
    %v4322 = vpop.f32.mrf.mxu0
    %v4323 = vadd.f32 %v4309, %v4322
    %v4324 = vpop.f32.mrf.mxu0
    %v4325 = vadd.f32 %v4311, %v4324
    %4326 = vdwg.mxu0
    %4327 = vmatpush.bf16.msra.mxu0 %v1370
    %4328 = vmatpush.bf16.msra.mxu0 %v1362
    %4329 = vmatpush.bf16.msra.mxu0 %v1354
    %4330 = vmatpush.bf16.msra.mxu0 %v1346
    %4331 = vmatpush.bf16.msra.mxu0 %v1338
    %4332 = vmatpush.bf16.msra.mxu0 %v1330
    %4333 = vmatpush.bf16.msra.mxu0 %v1322
    %4334 = vmatpush.bf16.msra.mxu0 %v1314
    %4335 = vmatmul.bf16.gmra.mxu0 %v4151
    %v4336 = vpop.f32.mrf.mxu0
    %v4337 = vadd.f32 0.0, %v4336
    %v4338 = vpop.f32.mrf.mxu0
    %v4339 = vadd.f32 0.0, %v4338
    %4340 = vdwg.mxu0
    %4341 = vmatpush.bf16.msra.mxu0 %v1434
    %4342 = vmatpush.bf16.msra.mxu0 %v1426
    %4343 = vmatpush.bf16.msra.mxu0 %v1418
    %4344 = vmatpush.bf16.msra.mxu0 %v1410
    %4345 = vmatpush.bf16.msra.mxu0 %v1402
    %4346 = vmatpush.bf16.msra.mxu0 %v1394
    %4347 = vmatpush.bf16.msra.mxu0 %v1386
    %4348 = vmatpush.bf16.msra.mxu0 %v1378
    %4349 = vmatmul.bf16.gmra.mxu0 %v4157
    %v4350 = vpop.f32.mrf.mxu0
    %v4351 = vadd.f32 %v4337, %v4350
    %v4352 = vpop.f32.mrf.mxu0
    %v4353 = vadd.f32 %v4339, %v4352
    %4354 = vdwg.mxu0
    %4355 = vmatpush.bf16.msra.mxu0 %v1371
    %4356 = vmatpush.bf16.msra.mxu0 %v1363
    %4357 = vmatpush.bf16.msra.mxu0 %v1355
    %4358 = vmatpush.bf16.msra.mxu0 %v1347
    %4359 = vmatpush.bf16.msra.mxu0 %v1339
    %4360 = vmatpush.bf16.msra.mxu0 %v1331
    %4361 = vmatpush.bf16.msra.mxu0 %v1323
    %4362 = vmatpush.bf16.msra.mxu0 %v1315
    %4363 = vmatmul.bf16.gmra.mxu0 %v4151
    %v4364 = vpop.f32.mrf.mxu0
    %v4365 = vadd.f32 0.0, %v4364
    %v4366 = vpop.f32.mrf.mxu0
    %v4367 = vadd.f32 0.0, %v4366
    %4368 = vdwg.mxu0
    %4369 = vmatpush.bf16.msra.mxu0 %v1435
    %4370 = vmatpush.bf16.msra.mxu0 %v1427
    %4371 = vmatpush.bf16.msra.mxu0 %v1419
    %4372 = vmatpush.bf16.msra.mxu0 %v1411
    %4373 = vmatpush.bf16.msra.mxu0 %v1403
    %4374 = vmatpush.bf16.msra.mxu0 %v1395
    %4375 = vmatpush.bf16.msra.mxu0 %v1387
    %4376 = vmatpush.bf16.msra.mxu0 %v1379
    %4377 = vmatmul.bf16.gmra.mxu0 %v4157
    %v4378 = vpop.f32.mrf.mxu0
    %v4379 = vadd.f32 %v4365, %v4378
    %v4380 = vpop.f32.mrf.mxu0
    %v4381 = vadd.f32 %v4367, %v4380
    %4382 = vdwg.mxu0
    %s4383 = smul.u32 12, 4
    %s4384 = smul.addr %s4383, 8
    %s4385 = scalar_lea.vmem [#allocation2], %s4384
    %v4386 = vld [vmem:[%s4385] sm:$0xff]
    %v4387 = vld [vmem:[%s4385 + $0x8] sm:$0xff]
    %v4388 = vld [vmem:[%s4385 + $0x10] sm:$0xff]
    %v4389 = vld [vmem:[%s4385 + $0x18] sm:$0xff]
    %v4390 = vld [vmem:[%s4385 + $0x20] sm:$0xff]
    %v4391 = vld [vmem:[%s4385 + $0x28] sm:$0xff]
    %v4392 = vld [vmem:[%s4385 + $0x30] sm:$0xff]
    %v4393 = vld [vmem:[%s4385 + $0x38] sm:$0xff]
    %v4394 = vadd.f32 %v4386, %v4183
    %v4395 = vadd.f32 %v4387, %v4211
    %v4396 = vadd.f32 %v4388, %v4239
    %v4397 = vadd.f32 %v4389, %v4267
    %v4398 = vadd.f32 %v4390, %v4185
    %v4399 = vadd.f32 %v4391, %v4213
    %v4400 = vadd.f32 %v4392, %v4241
    %v4401 = vadd.f32 %v4393, %v4269
    %v4402 = vadd.f32 %v774, %v4295
    %v4403 = vadd.f32 %v775, %v4323
    %v4404 = vadd.f32 %v776, %v4351
    %v4405 = vadd.f32 %v777, %v4379
    %v4406 = vadd.f32 %v774, %v4297
    %v4407 = vadd.f32 %v775, %v4325
    %v4408 = vadd.f32 %v776, %v4353
    %v4409 = vadd.f32 %v777, %v4381
    %v4410 = vxor.u32 %v4394, 2147483648
    %v4411 = vxor.u32 %v4398, 2147483648
    %v4412 = vmul.f32 %v4410, 1.442695
    %v4413 = vpow.pop %v4412
    %v4414 = vmul.f32 %v4411, 1.442695
    %v4415 = vpow.pop %v4414
    %v4416 = vadd.f32 %v4413, 1.0
    %v4417 = vadd.f32 %v4415, 1.0
    %v4418 = vrcp.pop %v4416
    %v4419 = vmul.f32 %v4416, %v4418
    %v4420 = vsub.f32 1.0, %v4419
    %v4421 = vmul.f32 %v4418, %v4420
    %v4422 = vadd.f32 %v4418, %v4421
    %vm4423 = vweird.f32 %v4416
    %vm4424 = vweird.f32 %v4418
    %vm4425 = vmor %vm4423, %vm4424
    %v4426 = vsel %vm4425, %v4418, %v4422
    %v4427 = vand.u32 2147483647, %v4416
    %vm4428 = vcmp.eq.f32.partialorder %v4427, 8.507059e+37
    %v4429 = vand.u32 %v4416, 2147483648
    %v4430 = vor.u32 1.1754944e-38, %v4429
    %v4431 = vsel %vm4428, %v4430, %v4426
    %v4432 = vmul.f32 1.0, %v4431
    %v4433 = vrcp.pop %v4417
    %v4434 = vmul.f32 %v4417, %v4433
    %v4435 = vsub.f32 1.0, %v4434
    %v4436 = vmul.f32 %v4433, %v4435
    %v4437 = vadd.f32 %v4433, %v4436
    %vm4438 = vweird.f32 %v4417
    %vm4439 = vweird.f32 %v4433
    %vm4440 = vmor %vm4438, %vm4439
    %v4441 = vsel %vm4440, %v4433, %v4437
    %v4442 = vand.u32 2147483647, %v4417
    %vm4443 = vcmp.eq.f32.partialorder %v4442, 8.507059e+37
    %v4444 = vand.u32 %v4417, 2147483648
    %v4445 = vor.u32 1.1754944e-38, %v4444
    %v4446 = vsel %vm4443, %v4445, %v4441
    %v4447 = vmul.f32 1.0, %v4446
    %v4448 = vxor.u32 %v4395, 2147483648
    %v4449 = vxor.u32 %v4399, 2147483648
    %v4450 = vmul.f32 %v4448, 1.442695
    %v4451 = vpow.pop %v4450
    %v4452 = vmul.f32 %v4449, 1.442695
    %v4453 = vpow.pop %v4452
    %v4454 = vadd.f32 %v4451, 1.0
    %v4455 = vadd.f32 %v4453, 1.0
    %v4456 = vrcp.pop %v4454
    %v4457 = vmul.f32 %v4454, %v4456
    %v4458 = vsub.f32 1.0, %v4457
    %v4459 = vmul.f32 %v4456, %v4458
    %v4460 = vadd.f32 %v4456, %v4459
    %vm4461 = vweird.f32 %v4454
    %vm4462 = vweird.f32 %v4456
    %vm4463 = vmor %vm4461, %vm4462
    %v4464 = vsel %vm4463, %v4456, %v4460
    %v4465 = vand.u32 2147483647, %v4454
    %vm4466 = vcmp.eq.f32.partialorder %v4465, 8.507059e+37
    %v4467 = vand.u32 %v4454, 2147483648
    %v4468 = vor.u32 1.1754944e-38, %v4467
    %v4469 = vsel %vm4466, %v4468, %v4464
    %v4470 = vmul.f32 1.0, %v4469
    %v4471 = vrcp.pop %v4455
    %v4472 = vmul.f32 %v4455, %v4471
    %v4473 = vsub.f32 1.0, %v4472
    %v4474 = vmul.f32 %v4471, %v4473
    %v4475 = vadd.f32 %v4471, %v4474
    %vm4476 = vweird.f32 %v4455
    %vm4477 = vweird.f32 %v4471
    %vm4478 = vmor %vm4476, %vm4477
    %v4479 = vsel %vm4478, %v4471, %v4475
    %v4480 = vand.u32 2147483647, %v4455
    %vm4481 = vcmp.eq.f32.partialorder %v4480, 8.507059e+37
    %v4482 = vand.u32 %v4455, 2147483648
    %v4483 = vor.u32 1.1754944e-38, %v4482
    %v4484 = vsel %vm4481, %v4483, %v4479
    %v4485 = vmul.f32 1.0, %v4484
    %v4486 = vtanh.pop %v4396
    %v4487 = vtanh.pop %v4400
    %v4488 = vxor.u32 %v4397, 2147483648
    %v4489 = vxor.u32 %v4401, 2147483648
    %v4490 = vmul.f32 %v4488, 1.442695
    %v4491 = vpow.pop %v4490
    %v4492 = vmul.f32 %v4489, 1.442695
    %v4493 = vpow.pop %v4492
    %v4494 = vadd.f32 %v4491, 1.0
    %v4495 = vadd.f32 %v4493, 1.0
    %v4496 = vrcp.pop %v4494
    %v4497 = vmul.f32 %v4494, %v4496
    %v4498 = vsub.f32 1.0, %v4497
    %v4499 = vmul.f32 %v4496, %v4498
    %v4500 = vadd.f32 %v4496, %v4499
    %vm4501 = vweird.f32 %v4494
    %vm4502 = vweird.f32 %v4496
    %vm4503 = vmor %vm4501, %vm4502
    %v4504 = vsel %vm4503, %v4496, %v4500
    %v4505 = vand.u32 2147483647, %v4494
    %vm4506 = vcmp.eq.f32.partialorder %v4505, 8.507059e+37
    %v4507 = vand.u32 %v4494, 2147483648
    %v4508 = vor.u32 1.1754944e-38, %v4507
    %v4509 = vsel %vm4506, %v4508, %v4504
    %v4510 = vmul.f32 1.0, %v4509
    %v4511 = vrcp.pop %v4495
    %v4512 = vmul.f32 %v4495, %v4511
    %v4513 = vsub.f32 1.0, %v4512
    %v4514 = vmul.f32 %v4511, %v4513
    %v4515 = vadd.f32 %v4511, %v4514
    %vm4516 = vweird.f32 %v4495
    %vm4517 = vweird.f32 %v4511
    %vm4518 = vmor %vm4516, %vm4517
    %v4519 = vsel %vm4518, %v4511, %v4515
    %v4520 = vand.u32 2147483647, %v4495
    %vm4521 = vcmp.eq.f32.partialorder %v4520, 8.507059e+37
    %v4522 = vand.u32 %v4495, 2147483648
    %v4523 = vor.u32 1.1754944e-38, %v4522
    %v4524 = vsel %vm4521, %v4523, %v4519
    %v4525 = vmul.f32 1.0, %v4524
    %v4526 = vmul.f32 %v4470, %v4011
    %v4527 = vmul.f32 %v4485, %v4012
    %v4528 = vmul.f32 %v4432, %v4486
    %v4529 = vmul.f32 %v4447, %v4487
    %v4530 = vadd.f32 %v4526, %v4528
    %v4531 = vadd.f32 %v4527, %v4529
    %v4532 = vtanh.pop %v4530
    %v4533 = vtanh.pop %v4531
    %v4534 = vmul.f32 %v4510, %v4532
    %v4535 = vmul.f32 %v4525, %v4533
    %v4536 = vxor.u32 %v4402, 2147483648
    %v4537 = vxor.u32 %v4406, 2147483648
    %v4538 = vmul.f32 %v4536, 1.442695
    %v4539 = vpow.pop %v4538
    %v4540 = vmul.f32 %v4537, 1.442695
    %v4541 = vpow.pop %v4540
    %v4542 = vadd.f32 %v4539, 1.0
    %v4543 = vadd.f32 %v4541, 1.0
    %v4544 = vrcp.pop %v4542
    %v4545 = vmul.f32 %v4542, %v4544
    %v4546 = vsub.f32 1.0, %v4545
    %v4547 = vmul.f32 %v4544, %v4546
    %v4548 = vadd.f32 %v4544, %v4547
    %vm4549 = vweird.f32 %v4542
    %vm4550 = vweird.f32 %v4544
    %vm4551 = vmor %vm4549, %vm4550
    %v4552 = vsel %vm4551, %v4544, %v4548
    %v4553 = vand.u32 2147483647, %v4542
    %vm4554 = vcmp.eq.f32.partialorder %v4553, 8.507059e+37
    %v4555 = vand.u32 %v4542, 2147483648
    %v4556 = vor.u32 1.1754944e-38, %v4555
    %v4557 = vsel %vm4554, %v4556, %v4552
    %v4558 = vmul.f32 1.0, %v4557
    %v4559 = vrcp.pop %v4543
    %v4560 = vmul.f32 %v4543, %v4559
    %v4561 = vsub.f32 1.0, %v4560
    %v4562 = vmul.f32 %v4559, %v4561
    %v4563 = vadd.f32 %v4559, %v4562
    %vm4564 = vweird.f32 %v4543
    %vm4565 = vweird.f32 %v4559
    %vm4566 = vmor %vm4564, %vm4565
    %v4567 = vsel %vm4566, %v4559, %v4563
    %v4568 = vand.u32 2147483647, %v4543
    %vm4569 = vcmp.eq.f32.partialorder %v4568, 8.507059e+37
    %v4570 = vand.u32 %v4543, 2147483648
    %v4571 = vor.u32 1.1754944e-38, %v4570
    %v4572 = vsel %vm4569, %v4571, %v4567
    %v4573 = vmul.f32 1.0, %v4572
    %v4574 = vxor.u32 %v4403, 2147483648
    %v4575 = vxor.u32 %v4407, 2147483648
    %v4576 = vmul.f32 %v4574, 1.442695
    %v4577 = vpow.pop %v4576
    %v4578 = vmul.f32 %v4575, 1.442695
    %v4579 = vpow.pop %v4578
    %v4580 = vadd.f32 %v4577, 1.0
    %v4581 = vadd.f32 %v4579, 1.0
    %v4582 = vrcp.pop %v4580
    %v4583 = vmul.f32 %v4580, %v4582
    %v4584 = vsub.f32 1.0, %v4583
    %v4585 = vmul.f32 %v4582, %v4584
    %v4586 = vadd.f32 %v4582, %v4585
    %vm4587 = vweird.f32 %v4580
    %vm4588 = vweird.f32 %v4582
    %vm4589 = vmor %vm4587, %vm4588
    %v4590 = vsel %vm4589, %v4582, %v4586
    %v4591 = vand.u32 2147483647, %v4580
    %vm4592 = vcmp.eq.f32.partialorder %v4591, 8.507059e+37
    %v4593 = vand.u32 %v4580, 2147483648
    %v4594 = vor.u32 1.1754944e-38, %v4593
    %v4595 = vsel %vm4592, %v4594, %v4590
    %v4596 = vmul.f32 1.0, %v4595
    %v4597 = vrcp.pop %v4581
    %v4598 = vmul.f32 %v4581, %v4597
    %v4599 = vsub.f32 1.0, %v4598
    %v4600 = vmul.f32 %v4597, %v4599
    %v4601 = vadd.f32 %v4597, %v4600
    %vm4602 = vweird.f32 %v4581
    %vm4603 = vweird.f32 %v4597
    %vm4604 = vmor %vm4602, %vm4603
    %v4605 = vsel %vm4604, %v4597, %v4601
    %v4606 = vand.u32 2147483647, %v4581
    %vm4607 = vcmp.eq.f32.partialorder %v4606, 8.507059e+37
    %v4608 = vand.u32 %v4581, 2147483648
    %v4609 = vor.u32 1.1754944e-38, %v4608
    %v4610 = vsel %vm4607, %v4609, %v4605
    %v4611 = vmul.f32 1.0, %v4610
    %v4612 = vtanh.pop %v4404
    %v4613 = vtanh.pop %v4408
    %v4614 = vxor.u32 %v4405, 2147483648
    %v4615 = vxor.u32 %v4409, 2147483648
    %v4616 = vmul.f32 %v4614, 1.442695
    %v4617 = vpow.pop %v4616
    %v4618 = vmul.f32 %v4615, 1.442695
    %v4619 = vpow.pop %v4618
    %v4620 = vadd.f32 %v4617, 1.0
    %v4621 = vadd.f32 %v4619, 1.0
    %v4622 = vrcp.pop %v4620
    %v4623 = vmul.f32 %v4620, %v4622
    %v4624 = vsub.f32 1.0, %v4623
    %v4625 = vmul.f32 %v4622, %v4624
    %v4626 = vadd.f32 %v4622, %v4625
    %vm4627 = vweird.f32 %v4620
    %vm4628 = vweird.f32 %v4622
    %vm4629 = vmor %vm4627, %vm4628
    %v4630 = vsel %vm4629, %v4622, %v4626
    %v4631 = vand.u32 2147483647, %v4620
    %vm4632 = vcmp.eq.f32.partialorder %v4631, 8.507059e+37
    %v4633 = vand.u32 %v4620, 2147483648
    %v4634 = vor.u32 1.1754944e-38, %v4633
    %v4635 = vsel %vm4632, %v4634, %v4630
    %v4636 = vmul.f32 1.0, %v4635
    %v4637 = vrcp.pop %v4621
    %v4638 = vmul.f32 %v4621, %v4637
    %v4639 = vsub.f32 1.0, %v4638
    %v4640 = vmul.f32 %v4637, %v4639
    %v4641 = vadd.f32 %v4637, %v4640
    %vm4642 = vweird.f32 %v4621
    %vm4643 = vweird.f32 %v4637
    %vm4644 = vmor %vm4642, %vm4643
    %v4645 = vsel %vm4644, %v4637, %v4641
    %v4646 = vand.u32 2147483647, %v4621
    %vm4647 = vcmp.eq.f32.partialorder %v4646, 8.507059e+37
    %v4648 = vand.u32 %v4621, 2147483648
    %v4649 = vor.u32 1.1754944e-38, %v4648
    %v4650 = vsel %vm4647, %v4649, %v4645
    %v4651 = vmul.f32 1.0, %v4650
    %v4652 = vmul.f32 %v4596, %v4137
    %v4653 = vmul.f32 %v4611, %v4138
    %v4654 = vmul.f32 %v4558, %v4612
    %v4655 = vmul.f32 %v4573, %v4613
    %v4656 = vadd.f32 %v4652, %v4654
    %v4657 = vadd.f32 %v4653, %v4655
    %v4658 = vtanh.pop %v4656
    %v4659 = vtanh.pop %v4657
    %v4660 = vmul.f32 %v4636, %v4658
    %v4661 = vmul.f32 %v4651, %v4659
    %v4662 = vpack.c.bf16 %v4534, %v4534
    %v4663 = vpack.c.bf16 %v4535, %v4535
    %v4664 = vpack.c.bf16 %v4660, %v4660
    %v4665 = vpack.c.bf16 %v4661, %v4661
    %v4668 = vunpack.c.l.b16 %v4662
    %v4669 = vunpack.c.l.b16 %v4663
    %v4670 = vpack.c.b16 %v4669, %v4668
    %v4674 = vunpack.c.l.b16 %v4664
    %v4675 = vunpack.c.l.b16 %v4665
    %v4676 = vpack.c.b16 %v4675, %v4674
    %4678 = vmatpush.bf16.msra.mxu0 %v1364
    %4679 = vmatpush.bf16.msra.mxu0 %v1356
    %4680 = vmatpush.bf16.msra.mxu0 %v1348
    %4681 = vmatpush.bf16.msra.mxu0 %v1340
    %4682 = vmatpush.bf16.msra.mxu0 %v1332
    %4683 = vmatpush.bf16.msra.mxu0 %v1324
    %4684 = vmatpush.bf16.msra.mxu0 %v1316
    %4685 = vmatpush.bf16.msra.mxu0 %v1308
    %4686 = vmatmul.bf16.gmra.mxu0 %v4670
    %v4687 = vpop.f32.mrf.mxu0
    %v4688 = vadd.f32 0.0, %v4687
    %v4689 = vpop.f32.mrf.mxu0
    %v4690 = vadd.f32 0.0, %v4689
    %4691 = vdwg.mxu0
    %4692 = vmatpush.bf16.msra.mxu0 %v1428
    %4693 = vmatpush.bf16.msra.mxu0 %v1420
    %4694 = vmatpush.bf16.msra.mxu0 %v1412
    %4695 = vmatpush.bf16.msra.mxu0 %v1404
    %4696 = vmatpush.bf16.msra.mxu0 %v1396
    %4697 = vmatpush.bf16.msra.mxu0 %v1388
    %4698 = vmatpush.bf16.msra.mxu0 %v1380
    %4699 = vmatpush.bf16.msra.mxu0 %v1372
    %4700 = vmatmul.bf16.gmra.mxu0 %v4676
    %v4701 = vpop.f32.mrf.mxu0
    %v4702 = vadd.f32 %v4688, %v4701
    %v4703 = vpop.f32.mrf.mxu0
    %v4704 = vadd.f32 %v4690, %v4703
    %4705 = vdwg.mxu0
    %4706 = vmatpush.bf16.msra.mxu0 %v1365
    %4707 = vmatpush.bf16.msra.mxu0 %v1357
    %4708 = vmatpush.bf16.msra.mxu0 %v1349
    %4709 = vmatpush.bf16.msra.mxu0 %v1341
    %4710 = vmatpush.bf16.msra.mxu0 %v1333
    %4711 = vmatpush.bf16.msra.mxu0 %v1325
    %4712 = vmatpush.bf16.msra.mxu0 %v1317
    %4713 = vmatpush.bf16.msra.mxu0 %v1309
    %4714 = vmatmul.bf16.gmra.mxu0 %v4670
    %v4715 = vpop.f32.mrf.mxu0
    %v4716 = vadd.f32 0.0, %v4715
    %v4717 = vpop.f32.mrf.mxu0
    %v4718 = vadd.f32 0.0, %v4717
    %4719 = vdwg.mxu0
    %4720 = vmatpush.bf16.msra.mxu0 %v1429
    %4721 = vmatpush.bf16.msra.mxu0 %v1421
    %4722 = vmatpush.bf16.msra.mxu0 %v1413
    %4723 = vmatpush.bf16.msra.mxu0 %v1405
    %4724 = vmatpush.bf16.msra.mxu0 %v1397
    %4725 = vmatpush.bf16.msra.mxu0 %v1389
    %4726 = vmatpush.bf16.msra.mxu0 %v1381
    %4727 = vmatpush.bf16.msra.mxu0 %v1373
    %4728 = vmatmul.bf16.gmra.mxu0 %v4676
    %v4729 = vpop.f32.mrf.mxu0
    %v4730 = vadd.f32 %v4716, %v4729
    %v4731 = vpop.f32.mrf.mxu0
    %v4732 = vadd.f32 %v4718, %v4731
    %4733 = vdwg.mxu0
    %4734 = vmatpush.bf16.msra.mxu0 %v1366
    %4735 = vmatpush.bf16.msra.mxu0 %v1358
    %4736 = vmatpush.bf16.msra.mxu0 %v1350
    %4737 = vmatpush.bf16.msra.mxu0 %v1342
    %4738 = vmatpush.bf16.msra.mxu0 %v1334
    %4739 = vmatpush.bf16.msra.mxu0 %v1326
    %4740 = vmatpush.bf16.msra.mxu0 %v1318
    %4741 = vmatpush.bf16.msra.mxu0 %v1310
    %4742 = vmatmul.bf16.gmra.mxu0 %v4670
    %v4743 = vpop.f32.mrf.mxu0
    %v4744 = vadd.f32 0.0, %v4743
    %v4745 = vpop.f32.mrf.mxu0
    %v4746 = vadd.f32 0.0, %v4745
    %4747 = vdwg.mxu0
    %4748 = vmatpush.bf16.msra.mxu0 %v1430
    %4749 = vmatpush.bf16.msra.mxu0 %v1422
    %4750 = vmatpush.bf16.msra.mxu0 %v1414
    %4751 = vmatpush.bf16.msra.mxu0 %v1406
    %4752 = vmatpush.bf16.msra.mxu0 %v1398
    %4753 = vmatpush.bf16.msra.mxu0 %v1390
    %4754 = vmatpush.bf16.msra.mxu0 %v1382
    %4755 = vmatpush.bf16.msra.mxu0 %v1374
    %4756 = vmatmul.bf16.gmra.mxu0 %v4676
    %v4757 = vpop.f32.mrf.mxu0
    %v4758 = vadd.f32 %v4744, %v4757
    %v4759 = vpop.f32.mrf.mxu0
    %v4760 = vadd.f32 %v4746, %v4759
    %4761 = vdwg.mxu0
    %4762 = vmatpush.bf16.msra.mxu0 %v1367
    %4763 = vmatpush.bf16.msra.mxu0 %v1359
    %4764 = vmatpush.bf16.msra.mxu0 %v1351
    %4765 = vmatpush.bf16.msra.mxu0 %v1343
    %4766 = vmatpush.bf16.msra.mxu0 %v1335
    %4767 = vmatpush.bf16.msra.mxu0 %v1327
    %4768 = vmatpush.bf16.msra.mxu0 %v1319
    %4769 = vmatpush.bf16.msra.mxu0 %v1311
    %4770 = vmatmul.bf16.gmra.mxu0 %v4670
    %v4771 = vpop.f32.mrf.mxu0
    %v4772 = vadd.f32 0.0, %v4771
    %v4773 = vpop.f32.mrf.mxu0
    %v4774 = vadd.f32 0.0, %v4773
    %4775 = vdwg.mxu0
    %4776 = vmatpush.bf16.msra.mxu0 %v1431
    %4777 = vmatpush.bf16.msra.mxu0 %v1423
    %4778 = vmatpush.bf16.msra.mxu0 %v1415
    %4779 = vmatpush.bf16.msra.mxu0 %v1407
    %4780 = vmatpush.bf16.msra.mxu0 %v1399
    %4781 = vmatpush.bf16.msra.mxu0 %v1391
    %4782 = vmatpush.bf16.msra.mxu0 %v1383
    %4783 = vmatpush.bf16.msra.mxu0 %v1375
    %4784 = vmatmul.bf16.gmra.mxu0 %v4676
    %v4785 = vpop.f32.mrf.mxu0
    %v4786 = vadd.f32 %v4772, %v4785
    %v4787 = vpop.f32.mrf.mxu0
    %v4788 = vadd.f32 %v4774, %v4787
    %4789 = vdwg.mxu0
    %4790 = vmatpush.bf16.msra.mxu0 %v1368
    %4791 = vmatpush.bf16.msra.mxu0 %v1360
    %4792 = vmatpush.bf16.msra.mxu0 %v1352
    %4793 = vmatpush.bf16.msra.mxu0 %v1344
    %4794 = vmatpush.bf16.msra.mxu0 %v1336
    %4795 = vmatpush.bf16.msra.mxu0 %v1328
    %4796 = vmatpush.bf16.msra.mxu0 %v1320
    %4797 = vmatpush.bf16.msra.mxu0 %v1312
    %4798 = vmatmul.bf16.gmra.mxu0 %v4670
    %v4799 = vpop.f32.mrf.mxu0
    %v4800 = vadd.f32 0.0, %v4799
    %v4801 = vpop.f32.mrf.mxu0
    %v4802 = vadd.f32 0.0, %v4801
    %4803 = vdwg.mxu0
    %4804 = vmatpush.bf16.msra.mxu0 %v1432
    %4805 = vmatpush.bf16.msra.mxu0 %v1424
    %4806 = vmatpush.bf16.msra.mxu0 %v1416
    %4807 = vmatpush.bf16.msra.mxu0 %v1408
    %4808 = vmatpush.bf16.msra.mxu0 %v1400
    %4809 = vmatpush.bf16.msra.mxu0 %v1392
    %4810 = vmatpush.bf16.msra.mxu0 %v1384
    %4811 = vmatpush.bf16.msra.mxu0 %v1376
    %4812 = vmatmul.bf16.gmra.mxu0 %v4676
    %v4813 = vpop.f32.mrf.mxu0
    %v4814 = vadd.f32 %v4800, %v4813
    %v4815 = vpop.f32.mrf.mxu0
    %v4816 = vadd.f32 %v4802, %v4815
    %4817 = vdwg.mxu0
    %4818 = vmatpush.bf16.msra.mxu0 %v1369
    %4819 = vmatpush.bf16.msra.mxu0 %v1361
    %4820 = vmatpush.bf16.msra.mxu0 %v1353
    %4821 = vmatpush.bf16.msra.mxu0 %v1345
    %4822 = vmatpush.bf16.msra.mxu0 %v1337
    %4823 = vmatpush.bf16.msra.mxu0 %v1329
    %4824 = vmatpush.bf16.msra.mxu0 %v1321
    %4825 = vmatpush.bf16.msra.mxu0 %v1313
    %4826 = vmatmul.bf16.gmra.mxu0 %v4670
    %v4827 = vpop.f32.mrf.mxu0
    %v4828 = vadd.f32 0.0, %v4827
    %v4829 = vpop.f32.mrf.mxu0
    %v4830 = vadd.f32 0.0, %v4829
    %4831 = vdwg.mxu0
    %4832 = vmatpush.bf16.msra.mxu0 %v1433
    %4833 = vmatpush.bf16.msra.mxu0 %v1425
    %4834 = vmatpush.bf16.msra.mxu0 %v1417
    %4835 = vmatpush.bf16.msra.mxu0 %v1409
    %4836 = vmatpush.bf16.msra.mxu0 %v1401
    %4837 = vmatpush.bf16.msra.mxu0 %v1393
    %4838 = vmatpush.bf16.msra.mxu0 %v1385
    %4839 = vmatpush.bf16.msra.mxu0 %v1377
    %4840 = vmatmul.bf16.gmra.mxu0 %v4676
    %v4841 = vpop.f32.mrf.mxu0
    %v4842 = vadd.f32 %v4828, %v4841
    %v4843 = vpop.f32.mrf.mxu0
    %v4844 = vadd.f32 %v4830, %v4843
    %4845 = vdwg.mxu0
    %4846 = vmatpush.bf16.msra.mxu0 %v1370
    %4847 = vmatpush.bf16.msra.mxu0 %v1362
    %4848 = vmatpush.bf16.msra.mxu0 %v1354
    %4849 = vmatpush.bf16.msra.mxu0 %v1346
    %4850 = vmatpush.bf16.msra.mxu0 %v1338
    %4851 = vmatpush.bf16.msra.mxu0 %v1330
    %4852 = vmatpush.bf16.msra.mxu0 %v1322
    %4853 = vmatpush.bf16.msra.mxu0 %v1314
    %4854 = vmatmul.bf16.gmra.mxu0 %v4670
    %v4855 = vpop.f32.mrf.mxu0
    %v4856 = vadd.f32 0.0, %v4855
    %v4857 = vpop.f32.mrf.mxu0
    %v4858 = vadd.f32 0.0, %v4857
    %4859 = vdwg.mxu0
    %4860 = vmatpush.bf16.msra.mxu0 %v1434
    %4861 = vmatpush.bf16.msra.mxu0 %v1426
    %4862 = vmatpush.bf16.msra.mxu0 %v1418
    %4863 = vmatpush.bf16.msra.mxu0 %v1410
    %4864 = vmatpush.bf16.msra.mxu0 %v1402
    %4865 = vmatpush.bf16.msra.mxu0 %v1394
    %4866 = vmatpush.bf16.msra.mxu0 %v1386
    %4867 = vmatpush.bf16.msra.mxu0 %v1378
    %4868 = vmatmul.bf16.gmra.mxu0 %v4676
    %v4869 = vpop.f32.mrf.mxu0
    %v4870 = vadd.f32 %v4856, %v4869
    %v4871 = vpop.f32.mrf.mxu0
    %v4872 = vadd.f32 %v4858, %v4871
    %4873 = vdwg.mxu0
    %4874 = vmatpush.bf16.msra.mxu0 %v1371
    %4875 = vmatpush.bf16.msra.mxu0 %v1363
    %4876 = vmatpush.bf16.msra.mxu0 %v1355
    %4877 = vmatpush.bf16.msra.mxu0 %v1347
    %4878 = vmatpush.bf16.msra.mxu0 %v1339
    %4879 = vmatpush.bf16.msra.mxu0 %v1331
    %4880 = vmatpush.bf16.msra.mxu0 %v1323
    %4881 = vmatpush.bf16.msra.mxu0 %v1315
    %4882 = vmatmul.bf16.gmra.mxu0 %v4670
    %v4883 = vpop.f32.mrf.mxu0
    %v4884 = vadd.f32 0.0, %v4883
    %v4885 = vpop.f32.mrf.mxu0
    %v4886 = vadd.f32 0.0, %v4885
    %4887 = vdwg.mxu0
    %4888 = vmatpush.bf16.msra.mxu0 %v1435
    %4889 = vmatpush.bf16.msra.mxu0 %v1427
    %4890 = vmatpush.bf16.msra.mxu0 %v1419
    %4891 = vmatpush.bf16.msra.mxu0 %v1411
    %4892 = vmatpush.bf16.msra.mxu0 %v1403
    %4893 = vmatpush.bf16.msra.mxu0 %v1395
    %4894 = vmatpush.bf16.msra.mxu0 %v1387
    %4895 = vmatpush.bf16.msra.mxu0 %v1379
    %4896 = vmatmul.bf16.gmra.mxu0 %v4676
    %v4897 = vpop.f32.mrf.mxu0
    %v4898 = vadd.f32 %v4884, %v4897
    %v4899 = vpop.f32.mrf.mxu0
    %v4900 = vadd.f32 %v4886, %v4899
    %4901 = vdwg.mxu0
    %s4902 = smul.u32 14, 4
    %s4903 = smul.addr %s4902, 8
    %s4904 = scalar_lea.vmem [#allocation2], %s4903
    %v4905 = vld [vmem:[%s4904] sm:$0xff]
    %v4906 = vld [vmem:[%s4904 + $0x8] sm:$0xff]
    %v4907 = vld [vmem:[%s4904 + $0x10] sm:$0xff]
    %v4908 = vld [vmem:[%s4904 + $0x18] sm:$0xff]
    %v4909 = vld [vmem:[%s4904 + $0x20] sm:$0xff]
    %v4910 = vld [vmem:[%s4904 + $0x28] sm:$0xff]
    %v4911 = vld [vmem:[%s4904 + $0x30] sm:$0xff]
    %v4912 = vld [vmem:[%s4904 + $0x38] sm:$0xff]
    %v4913 = vadd.f32 %v4905, %v4702
    %v4914 = vadd.f32 %v4906, %v4730
    %v4915 = vadd.f32 %v4907, %v4758
    %v4916 = vadd.f32 %v4908, %v4786
    %v4917 = vadd.f32 %v4909, %v4704
    %v4918 = vadd.f32 %v4910, %v4732
    %v4919 = vadd.f32 %v4911, %v4760
    %v4920 = vadd.f32 %v4912, %v4788
    %v4921 = vadd.f32 %v774, %v4814
    %v4922 = vadd.f32 %v775, %v4842
    %v4923 = vadd.f32 %v776, %v4870
    %v4924 = vadd.f32 %v777, %v4898
    %v4925 = vadd.f32 %v774, %v4816
    %v4926 = vadd.f32 %v775, %v4844
    %v4927 = vadd.f32 %v776, %v4872
    %v4928 = vadd.f32 %v777, %v4900
    %v4929 = vxor.u32 %v4913, 2147483648
    %v4930 = vxor.u32 %v4917, 2147483648
    %v4931 = vmul.f32 %v4929, 1.442695
    %v4932 = vpow.pop %v4931
    %v4933 = vmul.f32 %v4930, 1.442695
    %v4934 = vpow.pop %v4933
    %v4935 = vadd.f32 %v4932, 1.0
    %v4936 = vadd.f32 %v4934, 1.0
    %v4937 = vrcp.pop %v4935
    %v4938 = vmul.f32 %v4935, %v4937
    %v4939 = vsub.f32 1.0, %v4938
    %v4940 = vmul.f32 %v4937, %v4939
    %v4941 = vadd.f32 %v4937, %v4940
    %vm4942 = vweird.f32 %v4935
    %vm4943 = vweird.f32 %v4937
    %vm4944 = vmor %vm4942, %vm4943
    %v4945 = vsel %vm4944, %v4937, %v4941
    %v4946 = vand.u32 2147483647, %v4935
    %vm4947 = vcmp.eq.f32.partialorder %v4946, 8.507059e+37
    %v4948 = vand.u32 %v4935, 2147483648
    %v4949 = vor.u32 1.1754944e-38, %v4948
    %v4950 = vsel %vm4947, %v4949, %v4945
    %v4951 = vmul.f32 1.0, %v4950
    %v4952 = vrcp.pop %v4936
    %v4953 = vmul.f32 %v4936, %v4952
    %v4954 = vsub.f32 1.0, %v4953
    %v4955 = vmul.f32 %v4952, %v4954
    %v4956 = vadd.f32 %v4952, %v4955
    %vm4957 = vweird.f32 %v4936
    %vm4958 = vweird.f32 %v4952
    %vm4959 = vmor %vm4957, %vm4958
    %v4960 = vsel %vm4959, %v4952, %v4956
    %v4961 = vand.u32 2147483647, %v4936
    %vm4962 = vcmp.eq.f32.partialorder %v4961, 8.507059e+37
    %v4963 = vand.u32 %v4936, 2147483648
    %v4964 = vor.u32 1.1754944e-38, %v4963
    %v4965 = vsel %vm4962, %v4964, %v4960
    %v4966 = vmul.f32 1.0, %v4965
    %v4967 = vxor.u32 %v4914, 2147483648
    %v4968 = vxor.u32 %v4918, 2147483648
    %v4969 = vmul.f32 %v4967, 1.442695
    %v4970 = vpow.pop %v4969
    %v4971 = vmul.f32 %v4968, 1.442695
    %v4972 = vpow.pop %v4971
    %v4973 = vadd.f32 %v4970, 1.0
    %v4974 = vadd.f32 %v4972, 1.0
    %v4975 = vrcp.pop %v4973
    %v4976 = vmul.f32 %v4973, %v4975
    %v4977 = vsub.f32 1.0, %v4976
    %v4978 = vmul.f32 %v4975, %v4977
    %v4979 = vadd.f32 %v4975, %v4978
    %vm4980 = vweird.f32 %v4973
    %vm4981 = vweird.f32 %v4975
    %vm4982 = vmor %vm4980, %vm4981
    %v4983 = vsel %vm4982, %v4975, %v4979
    %v4984 = vand.u32 2147483647, %v4973
    %vm4985 = vcmp.eq.f32.partialorder %v4984, 8.507059e+37
    %v4986 = vand.u32 %v4973, 2147483648
    %v4987 = vor.u32 1.1754944e-38, %v4986
    %v4988 = vsel %vm4985, %v4987, %v4983
    %v4989 = vmul.f32 1.0, %v4988
    %v4990 = vrcp.pop %v4974
    %v4991 = vmul.f32 %v4974, %v4990
    %v4992 = vsub.f32 1.0, %v4991
    %v4993 = vmul.f32 %v4990, %v4992
    %v4994 = vadd.f32 %v4990, %v4993
    %vm4995 = vweird.f32 %v4974
    %vm4996 = vweird.f32 %v4990
    %vm4997 = vmor %vm4995, %vm4996
    %v4998 = vsel %vm4997, %v4990, %v4994
    %v4999 = vand.u32 2147483647, %v4974
    %vm5000 = vcmp.eq.f32.partialorder %v4999, 8.507059e+37
    %v5001 = vand.u32 %v4974, 2147483648
    %v5002 = vor.u32 1.1754944e-38, %v5001
    %v5003 = vsel %vm5000, %v5002, %v4998
    %v5004 = vmul.f32 1.0, %v5003
    %v5005 = vtanh.pop %v4915
    %v5006 = vtanh.pop %v4919
    %v5007 = vxor.u32 %v4916, 2147483648
    %v5008 = vxor.u32 %v4920, 2147483648
    %v5009 = vmul.f32 %v5007, 1.442695
    %v5010 = vpow.pop %v5009
    %v5011 = vmul.f32 %v5008, 1.442695
    %v5012 = vpow.pop %v5011
    %v5013 = vadd.f32 %v5010, 1.0
    %v5014 = vadd.f32 %v5012, 1.0
    %v5015 = vrcp.pop %v5013
    %v5016 = vmul.f32 %v5013, %v5015
    %v5017 = vsub.f32 1.0, %v5016
    %v5018 = vmul.f32 %v5015, %v5017
    %v5019 = vadd.f32 %v5015, %v5018
    %vm5020 = vweird.f32 %v5013
    %vm5021 = vweird.f32 %v5015
    %vm5022 = vmor %vm5020, %vm5021
    %v5023 = vsel %vm5022, %v5015, %v5019
    %v5024 = vand.u32 2147483647, %v5013
    %vm5025 = vcmp.eq.f32.partialorder %v5024, 8.507059e+37
    %v5026 = vand.u32 %v5013, 2147483648
    %v5027 = vor.u32 1.1754944e-38, %v5026
    %v5028 = vsel %vm5025, %v5027, %v5023
    %v5029 = vmul.f32 1.0, %v5028
    %v5030 = vrcp.pop %v5014
    %v5031 = vmul.f32 %v5014, %v5030
    %v5032 = vsub.f32 1.0, %v5031
    %v5033 = vmul.f32 %v5030, %v5032
    %v5034 = vadd.f32 %v5030, %v5033
    %vm5035 = vweird.f32 %v5014
    %vm5036 = vweird.f32 %v5030
    %vm5037 = vmor %vm5035, %vm5036
    %v5038 = vsel %vm5037, %v5030, %v5034
    %v5039 = vand.u32 2147483647, %v5014
    %vm5040 = vcmp.eq.f32.partialorder %v5039, 8.507059e+37
    %v5041 = vand.u32 %v5014, 2147483648
    %v5042 = vor.u32 1.1754944e-38, %v5041
    %v5043 = vsel %vm5040, %v5042, %v5038
    %v5044 = vmul.f32 1.0, %v5043
    %v5045 = vmul.f32 %v4989, %v4530
    %v5046 = vmul.f32 %v5004, %v4531
    %v5047 = vmul.f32 %v4951, %v5005
    %v5048 = vmul.f32 %v4966, %v5006
    %v5049 = vadd.f32 %v5045, %v5047
    %v5050 = vadd.f32 %v5046, %v5048
    %v5051 = vtanh.pop %v5049
    %v5052 = vtanh.pop %v5050
    %v5053 = vmul.f32 %v5029, %v5051
    %v5054 = vmul.f32 %v5044, %v5052
    %v5055 = vxor.u32 %v4921, 2147483648
    %v5056 = vxor.u32 %v4925, 2147483648
    %v5057 = vmul.f32 %v5055, 1.442695
    %v5058 = vpow.pop %v5057
    %v5059 = vmul.f32 %v5056, 1.442695
    %v5060 = vpow.pop %v5059
    %v5061 = vadd.f32 %v5058, 1.0
    %v5062 = vadd.f32 %v5060, 1.0
    %v5063 = vrcp.pop %v5061
    %v5064 = vmul.f32 %v5061, %v5063
    %v5065 = vsub.f32 1.0, %v5064
    %v5066 = vmul.f32 %v5063, %v5065
    %v5067 = vadd.f32 %v5063, %v5066
    %vm5068 = vweird.f32 %v5061
    %vm5069 = vweird.f32 %v5063
    %vm5070 = vmor %vm5068, %vm5069
    %v5071 = vsel %vm5070, %v5063, %v5067
    %v5072 = vand.u32 2147483647, %v5061
    %vm5073 = vcmp.eq.f32.partialorder %v5072, 8.507059e+37
    %v5074 = vand.u32 %v5061, 2147483648
    %v5075 = vor.u32 1.1754944e-38, %v5074
    %v5076 = vsel %vm5073, %v5075, %v5071
    %v5077 = vmul.f32 1.0, %v5076
    %v5078 = vrcp.pop %v5062
    %v5079 = vmul.f32 %v5062, %v5078
    %v5080 = vsub.f32 1.0, %v5079
    %v5081 = vmul.f32 %v5078, %v5080
    %v5082 = vadd.f32 %v5078, %v5081
    %vm5083 = vweird.f32 %v5062
    %vm5084 = vweird.f32 %v5078
    %vm5085 = vmor %vm5083, %vm5084
    %v5086 = vsel %vm5085, %v5078, %v5082
    %v5087 = vand.u32 2147483647, %v5062
    %vm5088 = vcmp.eq.f32.partialorder %v5087, 8.507059e+37
    %v5089 = vand.u32 %v5062, 2147483648
    %v5090 = vor.u32 1.1754944e-38, %v5089
    %v5091 = vsel %vm5088, %v5090, %v5086
    %v5092 = vmul.f32 1.0, %v5091
    %v5093 = vxor.u32 %v4922, 2147483648
    %v5094 = vxor.u32 %v4926, 2147483648
    %v5095 = vmul.f32 %v5093, 1.442695
    %v5096 = vpow.pop %v5095
    %v5097 = vmul.f32 %v5094, 1.442695
    %v5098 = vpow.pop %v5097
    %v5099 = vadd.f32 %v5096, 1.0
    %v5100 = vadd.f32 %v5098, 1.0
    %v5101 = vrcp.pop %v5099
    %v5102 = vmul.f32 %v5099, %v5101
    %v5103 = vsub.f32 1.0, %v5102
    %v5104 = vmul.f32 %v5101, %v5103
    %v5105 = vadd.f32 %v5101, %v5104
    %vm5106 = vweird.f32 %v5099
    %vm5107 = vweird.f32 %v5101
    %vm5108 = vmor %vm5106, %vm5107
    %v5109 = vsel %vm5108, %v5101, %v5105
    %v5110 = vand.u32 2147483647, %v5099
    %vm5111 = vcmp.eq.f32.partialorder %v5110, 8.507059e+37
    %v5112 = vand.u32 %v5099, 2147483648
    %v5113 = vor.u32 1.1754944e-38, %v5112
    %v5114 = vsel %vm5111, %v5113, %v5109
    %v5115 = vmul.f32 1.0, %v5114
    %v5116 = vrcp.pop %v5100
    %v5117 = vmul.f32 %v5100, %v5116
    %v5118 = vsub.f32 1.0, %v5117
    %v5119 = vmul.f32 %v5116, %v5118
    %v5120 = vadd.f32 %v5116, %v5119
    %vm5121 = vweird.f32 %v5100
    %vm5122 = vweird.f32 %v5116
    %vm5123 = vmor %vm5121, %vm5122
    %v5124 = vsel %vm5123, %v5116, %v5120
    %v5125 = vand.u32 2147483647, %v5100
    %vm5126 = vcmp.eq.f32.partialorder %v5125, 8.507059e+37
    %v5127 = vand.u32 %v5100, 2147483648
    %v5128 = vor.u32 1.1754944e-38, %v5127
    %v5129 = vsel %vm5126, %v5128, %v5124
    %v5130 = vmul.f32 1.0, %v5129
    %v5131 = vtanh.pop %v4923
    %v5132 = vtanh.pop %v4927
    %v5133 = vxor.u32 %v4924, 2147483648
    %v5134 = vxor.u32 %v4928, 2147483648
    %v5135 = vmul.f32 %v5133, 1.442695
    %v5136 = vpow.pop %v5135
    %v5137 = vmul.f32 %v5134, 1.442695
    %v5138 = vpow.pop %v5137
    %v5139 = vadd.f32 %v5136, 1.0
    %v5140 = vadd.f32 %v5138, 1.0
    %v5141 = vrcp.pop %v5139
    %v5142 = vmul.f32 %v5139, %v5141
    %v5143 = vsub.f32 1.0, %v5142
    %v5144 = vmul.f32 %v5141, %v5143
    %v5145 = vadd.f32 %v5141, %v5144
    %vm5146 = vweird.f32 %v5139
    %vm5147 = vweird.f32 %v5141
    %vm5148 = vmor %vm5146, %vm5147
    %v5149 = vsel %vm5148, %v5141, %v5145
    %v5150 = vand.u32 2147483647, %v5139
    %vm5151 = vcmp.eq.f32.partialorder %v5150, 8.507059e+37
    %v5152 = vand.u32 %v5139, 2147483648
    %v5153 = vor.u32 1.1754944e-38, %v5152
    %v5154 = vsel %vm5151, %v5153, %v5149
    %v5155 = vmul.f32 1.0, %v5154
    %v5156 = vrcp.pop %v5140
    %v5157 = vmul.f32 %v5140, %v5156
    %v5158 = vsub.f32 1.0, %v5157
    %v5159 = vmul.f32 %v5156, %v5158
    %v5160 = vadd.f32 %v5156, %v5159
    %vm5161 = vweird.f32 %v5140
    %vm5162 = vweird.f32 %v5156
    %vm5163 = vmor %vm5161, %vm5162
    %v5164 = vsel %vm5163, %v5156, %v5160
    %v5165 = vand.u32 2147483647, %v5140
    %vm5166 = vcmp.eq.f32.partialorder %v5165, 8.507059e+37
    %v5167 = vand.u32 %v5140, 2147483648
    %v5168 = vor.u32 1.1754944e-38, %v5167
    %v5169 = vsel %vm5166, %v5168, %v5164
    %v5170 = vmul.f32 1.0, %v5169
    %v5171 = vmul.f32 %v5115, %v4656
    %v5172 = vmul.f32 %v5130, %v4657
    %v5173 = vmul.f32 %v5077, %v5131
    %v5174 = vmul.f32 %v5092, %v5132
    %v5175 = vadd.f32 %v5171, %v5173
    %v5176 = vadd.f32 %v5172, %v5174
    %v5177 = vtanh.pop %v5175
    %v5178 = vtanh.pop %v5176
    %v5179 = vmul.f32 %v5155, %v5177
    %v5180 = vmul.f32 %v5170, %v5178
    %v5181 = vpack.c.bf16 %v5053, %v5053
    %v5182 = vpack.c.bf16 %v5054, %v5054
    %v5183 = vpack.c.bf16 %v5179, %v5179
    %v5184 = vpack.c.bf16 %v5180, %v5180
    %v5187 = vunpack.c.l.b16 %v5181
    %v5188 = vunpack.c.l.b16 %v5182
    %v5189 = vpack.c.b16 %v5188, %v5187
    %v5193 = vunpack.c.l.b16 %v5183
    %v5194 = vunpack.c.l.b16 %v5184
    %v5195 = vpack.c.b16 %v5194, %v5193
    %5197 = vmatpush.bf16.msra.mxu0 %v1368
    %5198 = vmatpush.bf16.msra.mxu0 %v1360
    %5199 = vmatpush.bf16.msra.mxu0 %v1352
    %5200 = vmatpush.bf16.msra.mxu0 %v1344
    %5201 = vmatpush.bf16.msra.mxu0 %v1336
    %5202 = vmatpush.bf16.msra.mxu0 %v1328
    %5203 = vmatpush.bf16.msra.mxu0 %v1320
    %5204 = vmatpush.bf16.msra.mxu0 %v1312
    %5205 = vmatmul.bf16.gmra.mxu0 %v5189
    %v5206 = vpop.f32.mrf.mxu0
    %v5207 = vadd.f32 0.0, %v5206
    %v5208 = vpop.f32.mrf.mxu0
    %v5209 = vadd.f32 0.0, %v5208
    %5210 = vdwg.mxu0
    %5211 = vmatpush.bf16.msra.mxu0 %v1432
    %5212 = vmatpush.bf16.msra.mxu0 %v1424
    %5213 = vmatpush.bf16.msra.mxu0 %v1416
    %5214 = vmatpush.bf16.msra.mxu0 %v1408
    %5215 = vmatpush.bf16.msra.mxu0 %v1400
    %5216 = vmatpush.bf16.msra.mxu0 %v1392
    %5217 = vmatpush.bf16.msra.mxu0 %v1384
    %5218 = vmatpush.bf16.msra.mxu0 %v1376
    %5219 = vmatmul.bf16.gmra.mxu0 %v5195
    %v5220 = vpop.f32.mrf.mxu0
    %v5221 = vadd.f32 %v5207, %v5220
    %v5222 = vpop.f32.mrf.mxu0
    %v5223 = vadd.f32 %v5209, %v5222
    %5224 = vdwg.mxu0
    %5225 = vmatpush.bf16.msra.mxu0 %v1369
    %5226 = vmatpush.bf16.msra.mxu0 %v1361
    %5227 = vmatpush.bf16.msra.mxu0 %v1353
    %5228 = vmatpush.bf16.msra.mxu0 %v1345
    %5229 = vmatpush.bf16.msra.mxu0 %v1337
    %5230 = vmatpush.bf16.msra.mxu0 %v1329
    %5231 = vmatpush.bf16.msra.mxu0 %v1321
    %5232 = vmatpush.bf16.msra.mxu0 %v1313
    %5233 = vmatmul.bf16.gmra.mxu0 %v5189
    %v5234 = vpop.f32.mrf.mxu0
    %v5235 = vadd.f32 0.0, %v5234
    %v5236 = vpop.f32.mrf.mxu0
    %v5237 = vadd.f32 0.0, %v5236
    %5238 = vdwg.mxu0
    %5239 = vmatpush.bf16.msra.mxu0 %v1433
    %5240 = vmatpush.bf16.msra.mxu0 %v1425
    %5241 = vmatpush.bf16.msra.mxu0 %v1417
    %5242 = vmatpush.bf16.msra.mxu0 %v1409
    %5243 = vmatpush.bf16.msra.mxu0 %v1401
    %5244 = vmatpush.bf16.msra.mxu0 %v1393
    %5245 = vmatpush.bf16.msra.mxu0 %v1385
    %5246 = vmatpush.bf16.msra.mxu0 %v1377
    %5247 = vmatmul.bf16.gmra.mxu0 %v5195
    %v5248 = vpop.f32.mrf.mxu0
    %v5249 = vadd.f32 %v5235, %v5248
    %v5250 = vpop.f32.mrf.mxu0
    %v5251 = vadd.f32 %v5237, %v5250
    %5252 = vdwg.mxu0
    %5253 = vmatpush.bf16.msra.mxu0 %v1370
    %5254 = vmatpush.bf16.msra.mxu0 %v1362
    %5255 = vmatpush.bf16.msra.mxu0 %v1354
    %5256 = vmatpush.bf16.msra.mxu0 %v1346
    %5257 = vmatpush.bf16.msra.mxu0 %v1338
    %5258 = vmatpush.bf16.msra.mxu0 %v1330
    %5259 = vmatpush.bf16.msra.mxu0 %v1322
    %5260 = vmatpush.bf16.msra.mxu0 %v1314
    %5261 = vmatmul.bf16.gmra.mxu0 %v5189
    %v5262 = vpop.f32.mrf.mxu0
    %v5263 = vadd.f32 0.0, %v5262
    %v5264 = vpop.f32.mrf.mxu0
    %v5265 = vadd.f32 0.0, %v5264
    %5266 = vdwg.mxu0
    %5267 = vmatpush.bf16.msra.mxu0 %v1434
    %5268 = vmatpush.bf16.msra.mxu0 %v1426
    %5269 = vmatpush.bf16.msra.mxu0 %v1418
    %5270 = vmatpush.bf16.msra.mxu0 %v1410
    %5271 = vmatpush.bf16.msra.mxu0 %v1402
    %5272 = vmatpush.bf16.msra.mxu0 %v1394
    %5273 = vmatpush.bf16.msra.mxu0 %v1386
    %5274 = vmatpush.bf16.msra.mxu0 %v1378
    %5275 = vmatmul.bf16.gmra.mxu0 %v5195
    %v5276 = vpop.f32.mrf.mxu0
    %v5277 = vadd.f32 %v5263, %v5276
    %v5278 = vpop.f32.mrf.mxu0
    %v5279 = vadd.f32 %v5265, %v5278
    %5280 = vdwg.mxu0
    %5281 = vmatpush.bf16.msra.mxu0 %v1371
    %5282 = vmatpush.bf16.msra.mxu0 %v1363
    %5283 = vmatpush.bf16.msra.mxu0 %v1355
    %5284 = vmatpush.bf16.msra.mxu0 %v1347
    %5285 = vmatpush.bf16.msra.mxu0 %v1339
    %5286 = vmatpush.bf16.msra.mxu0 %v1331
    %5287 = vmatpush.bf16.msra.mxu0 %v1323
    %5288 = vmatpush.bf16.msra.mxu0 %v1315
    %5289 = vmatmul.bf16.gmra.mxu0 %v5189
    %v5290 = vpop.f32.mrf.mxu0
    %v5291 = vadd.f32 0.0, %v5290
    %v5292 = vpop.f32.mrf.mxu0
    %v5293 = vadd.f32 0.0, %v5292
    %5294 = vdwg.mxu0
    %5295 = vmatpush.bf16.msra.mxu0 %v1435
    %5296 = vmatpush.bf16.msra.mxu0 %v1427
    %5297 = vmatpush.bf16.msra.mxu0 %v1419
    %5298 = vmatpush.bf16.msra.mxu0 %v1411
    %5299 = vmatpush.bf16.msra.mxu0 %v1403
    %5300 = vmatpush.bf16.msra.mxu0 %v1395
    %5301 = vmatpush.bf16.msra.mxu0 %v1387
    %5302 = vmatpush.bf16.msra.mxu0 %v1379
    %5303 = vmatmul.bf16.gmra.mxu0 %v5195
    %v5304 = vpop.f32.mrf.mxu0
    %v5305 = vadd.f32 %v5291, %v5304
    %v5306 = vpop.f32.mrf.mxu0
    %v5307 = vadd.f32 %v5293, %v5306
    %5308 = vdwg.mxu0
    %v5309 = vadd.f32 %v774, %v5221
    %v5310 = vadd.f32 %v775, %v5249
    %v5311 = vadd.f32 %v776, %v5277
    %v5312 = vadd.f32 %v777, %v5305
    %v5313 = vadd.f32 %v774, %v5223
    %v5314 = vadd.f32 %v775, %v5251
    %v5315 = vadd.f32 %v776, %v5279
    %v5316 = vadd.f32 %v777, %v5307
    %v5317 = vxor.u32 %v5309, 2147483648
    %v5318 = vxor.u32 %v5313, 2147483648
    %v5319 = vmul.f32 %v5317, 1.442695
    %v5320 = vpow.pop %v5319
    %v5321 = vmul.f32 %v5318, 1.442695
    %v5322 = vpow.pop %v5321
    %v5323 = vadd.f32 %v5320, 1.0
    %v5324 = vadd.f32 %v5322, 1.0
    %v5325 = vrcp.pop %v5323
    %v5326 = vmul.f32 %v5323, %v5325
    %v5327 = vsub.f32 1.0, %v5326
    %v5328 = vmul.f32 %v5325, %v5327
    %v5329 = vadd.f32 %v5325, %v5328
    %vm5330 = vweird.f32 %v5323
    %vm5331 = vweird.f32 %v5325
    %vm5332 = vmor %vm5330, %vm5331
    %v5333 = vsel %vm5332, %v5325, %v5329
    %v5334 = vand.u32 2147483647, %v5323
    %vm5335 = vcmp.eq.f32.partialorder %v5334, 8.507059e+37
    %v5336 = vand.u32 %v5323, 2147483648
    %v5337 = vor.u32 1.1754944e-38, %v5336
    %v5338 = vsel %vm5335, %v5337, %v5333
    %v5339 = vmul.f32 1.0, %v5338
    %v5340 = vrcp.pop %v5324
    %v5341 = vmul.f32 %v5324, %v5340
    %v5342 = vsub.f32 1.0, %v5341
    %v5343 = vmul.f32 %v5340, %v5342
    %v5344 = vadd.f32 %v5340, %v5343
    %vm5345 = vweird.f32 %v5324
    %vm5346 = vweird.f32 %v5340
    %vm5347 = vmor %vm5345, %vm5346
    %v5348 = vsel %vm5347, %v5340, %v5344
    %v5349 = vand.u32 2147483647, %v5324
    %vm5350 = vcmp.eq.f32.partialorder %v5349, 8.507059e+37
    %v5351 = vand.u32 %v5324, 2147483648
    %v5352 = vor.u32 1.1754944e-38, %v5351
    %v5353 = vsel %vm5350, %v5352, %v5348
    %v5354 = vmul.f32 1.0, %v5353
    %v5355 = vxor.u32 %v5310, 2147483648
    %v5356 = vxor.u32 %v5314, 2147483648
    %v5357 = vmul.f32 %v5355, 1.442695
    %v5358 = vpow.pop %v5357
    %v5359 = vmul.f32 %v5356, 1.442695
    %v5360 = vpow.pop %v5359
    %v5361 = vadd.f32 %v5358, 1.0
    %v5362 = vadd.f32 %v5360, 1.0
    %v5363 = vrcp.pop %v5361
    %v5364 = vmul.f32 %v5361, %v5363
    %v5365 = vsub.f32 1.0, %v5364
    %v5366 = vmul.f32 %v5363, %v5365
    %v5367 = vadd.f32 %v5363, %v5366
    %vm5368 = vweird.f32 %v5361
    %vm5369 = vweird.f32 %v5363
    %vm5370 = vmor %vm5368, %vm5369
    %v5371 = vsel %vm5370, %v5363, %v5367
    %v5372 = vand.u32 2147483647, %v5361
    %vm5373 = vcmp.eq.f32.partialorder %v5372, 8.507059e+37
    %v5374 = vand.u32 %v5361, 2147483648
    %v5375 = vor.u32 1.1754944e-38, %v5374
    %v5376 = vsel %vm5373, %v5375, %v5371
    %v5377 = vmul.f32 1.0, %v5376
    %v5378 = vrcp.pop %v5362
    %v5379 = vmul.f32 %v5362, %v5378
    %v5380 = vsub.f32 1.0, %v5379
    %v5381 = vmul.f32 %v5378, %v5380
    %v5382 = vadd.f32 %v5378, %v5381
    %vm5383 = vweird.f32 %v5362
    %vm5384 = vweird.f32 %v5378
    %vm5385 = vmor %vm5383, %vm5384
    %v5386 = vsel %vm5385, %v5378, %v5382
    %v5387 = vand.u32 2147483647, %v5362
    %vm5388 = vcmp.eq.f32.partialorder %v5387, 8.507059e+37
    %v5389 = vand.u32 %v5362, 2147483648
    %v5390 = vor.u32 1.1754944e-38, %v5389
    %v5391 = vsel %vm5388, %v5390, %v5386
    %v5392 = vmul.f32 1.0, %v5391
    %v5393 = vtanh.pop %v5311
    %v5394 = vtanh.pop %v5315
    %v5395 = vxor.u32 %v5312, 2147483648
    %v5396 = vxor.u32 %v5316, 2147483648
    %v5397 = vmul.f32 %v5395, 1.442695
    %v5398 = vpow.pop %v5397
    %v5399 = vmul.f32 %v5396, 1.442695
    %v5400 = vpow.pop %v5399
    %v5401 = vadd.f32 %v5398, 1.0
    %v5402 = vadd.f32 %v5400, 1.0
    %v5403 = vrcp.pop %v5401
    %v5404 = vmul.f32 %v5401, %v5403
    %v5405 = vsub.f32 1.0, %v5404
    %v5406 = vmul.f32 %v5403, %v5405
    %v5407 = vadd.f32 %v5403, %v5406
    %vm5408 = vweird.f32 %v5401
    %vm5409 = vweird.f32 %v5403
    %vm5410 = vmor %vm5408, %vm5409
    %v5411 = vsel %vm5410, %v5403, %v5407
    %v5412 = vand.u32 2147483647, %v5401
    %vm5413 = vcmp.eq.f32.partialorder %v5412, 8.507059e+37
    %v5414 = vand.u32 %v5401, 2147483648
    %v5415 = vor.u32 1.1754944e-38, %v5414
    %v5416 = vsel %vm5413, %v5415, %v5411
    %v5417 = vmul.f32 1.0, %v5416
    %v5418 = vrcp.pop %v5402
    %v5419 = vmul.f32 %v5402, %v5418
    %v5420 = vsub.f32 1.0, %v5419
    %v5421 = vmul.f32 %v5418, %v5420
    %v5422 = vadd.f32 %v5418, %v5421
    %vm5423 = vweird.f32 %v5402
    %vm5424 = vweird.f32 %v5418
    %vm5425 = vmor %vm5423, %vm5424
    %v5426 = vsel %vm5425, %v5418, %v5422
    %v5427 = vand.u32 2147483647, %v5402
    %vm5428 = vcmp.eq.f32.partialorder %v5427, 8.507059e+37
    %v5429 = vand.u32 %v5402, 2147483648
    %v5430 = vor.u32 1.1754944e-38, %v5429
    %v5431 = vsel %vm5428, %v5430, %v5426
    %v5432 = vmul.f32 1.0, %v5431
    %v5433 = vmul.f32 %v5377, %v5175
    %v5434 = vmul.f32 %v5392, %v5176
    %v5435 = vmul.f32 %v5339, %v5393
    %v5436 = vmul.f32 %v5354, %v5394
    %v5437 = vadd.f32 %v5433, %v5435
    %v5438 = vadd.f32 %v5434, %v5436
    %v5439 = vtanh.pop %v5437
    %v5440 = vtanh.pop %v5438
    %v5441 = vmul.f32 %v5417, %v5439
    %v5442 = vmul.f32 %v5432, %v5440
    %v5443 = vpack.c.bf16 %v5442, %v5441
    %v5444 = vld [vmem:[#allocation12] sm:$0xf]
    %v5445 = vld [vmem:[#allocation12 + $0x4] sm:$0xf]
    %v5446 = vld [vmem:[#allocation12 + $0x8] sm:$0xf]
    %v5447 = vld [vmem:[#allocation12 + $0xc] sm:$0xf]
    %v5448 = vld [vmem:[#allocation12 + $0x10] sm:$0xf]
    %v5449 = vld [vmem:[#allocation12 + $0x14] sm:$0xf]
    %v5450 = vld [vmem:[#allocation12 + $0x18] sm:$0xf]
    %v5451 = vld [vmem:[#allocation12 + $0x1c] sm:$0xf]
    %v5452 = vld [vmem:[#allocation12 + $0x20] sm:$0xf]
    %v5453 = vld [vmem:[#allocation12 + $0x24] sm:$0xf]
    %v5454 = vld [vmem:[#allocation12 + $0x28] sm:$0xf]
    %v5455 = vld [vmem:[#allocation12 + $0x2c] sm:$0xf]
    %v5456 = vld [vmem:[#allocation12 + $0x30] sm:$0xf]
    %v5457 = vld [vmem:[#allocation12 + $0x34] sm:$0xf]
    %v5458 = vld [vmem:[#allocation12 + $0x38] sm:$0xf]
    %v5459 = vld [vmem:[#allocation12 + $0x3c] sm:$0xf]
    %v5460 = vld [vmem:[%s6] sm:$0x1]
    %v5462 = vperm.slane %v5460, 0
    %v5480 = vunpack.c.l.b16 %v5444
    %v5481 = vunpack.c.l.b16 %v5445
    %v5482 = vunpack.c.l.b16 %v5446
    %v5483 = vunpack.c.l.b16 %v5447
    %v5484 = vunpack.c.l.b16 %v5448
    %v5485 = vunpack.c.l.b16 %v5449
    %v5486 = vunpack.c.l.b16 %v5450
    %v5487 = vunpack.c.l.b16 %v5451
    %v5488 = vunpack.c.l.b16 %v5452
    %v5489 = vunpack.c.l.b16 %v5453
    %v5490 = vunpack.c.l.b16 %v5454
    %v5491 = vunpack.c.l.b16 %v5455
    %v5492 = vunpack.c.l.b16 %v5456
    %v5493 = vunpack.c.l.b16 %v5457
    %v5494 = vunpack.c.l.b16 %v5458
    %v5495 = vunpack.c.l.b16 %v5459
    %v5496 = vpack.c.b16 %v5481, %v5480
    %v5497 = vpack.c.b16 %v5483, %v5482
    %v5498 = vpack.c.b16 %v5485, %v5484
    %v5499 = vpack.c.b16 %v5487, %v5486
    %v5500 = vpack.c.b16 %v5489, %v5488
    %v5501 = vpack.c.b16 %v5491, %v5490
    %v5502 = vpack.c.b16 %v5493, %v5492
    %v5503 = vpack.c.b16 %v5495, %v5494
    %5512 = vmatpush.bf16.msra.mxu0 %v5503
    %5513 = vmatpush.bf16.msra.mxu0 %v5502
    %5514 = vmatpush.bf16.msra.mxu0 %v5501
    %5515 = vmatpush.bf16.msra.mxu0 %v5500
    %5516 = vmatpush.bf16.msra.mxu0 %v5499
    %5517 = vmatpush.bf16.msra.mxu0 %v5498
    %5518 = vmatpush.bf16.msra.mxu0 %v5497
    %5519 = vmatpush.bf16.msra.mxu0 %v5496
    %5520 = vmatmul.bf16.gmra.mxu0 %v5443
    %v5521 = vpop.f32.mrf.mxu0
    %v5522 = vadd.f32 %v5462, %v5521
    %v5523 = vpop.f32.mrf.mxu0
    %v5524 = vadd.f32 %v5462, %v5523
    %5525 = vdwg.mxu0
    %5526 = vst [vmem:[#allocation14] sm:$0xff] %v5522
    %5527 = vst [vmem:[#allocation14 + $0x8] sm:$0xff] %v5524
    // Predicated region
    $region54: #{tpu_custom_call.1} parent=1 // pred_check
      _
    $region55: #{tpu_custom_call.1} parent=1 // pred_check_branch
      %5529 = sbr.rel (0) target = $region57
    $region56: #{tpu_custom_call.1} parent=1 // pred_region
      %5531 = vsyncadd [#allocation5], 0
      %s5532 = sshll.u32 [#allocation14], 4
      %s5533 = int_to_ptr.vmem [resolvable:$true] %s5532
      %s5534 = sshll.u32 %s7, 4
      %s5535 = int_to_ptr.hbm [resolvable:$true] %s5534
      %5540 = dma.vmem_to_hbm [thread:$0]  %s5533, 256, %s5535, [#allocation5], 128, 128, 8
    $region57: #{tpu_custom_call.1} parent=1 // pred_fallthru
      _
    // Predicated region
    $region58: #{tpu_custom_call.1} parent=1 // pred_check
      _
    $region59: #{tpu_custom_call.1} parent=1 // pred_check_branch
      %5542 = sbr.rel (0) target = $region61
    $region60: #{tpu_custom_call.1} parent=1 // pred_region
      %5544 = dma.done [#allocation5], 256
    $region61: #{tpu_custom_call.1} parent=1 // pred_fallthru
      _
    %5545 = vsyncpa [#allocation4], 1
    %5546 = vsyncpa [#allocation7], 1
    %5547 = vsyncpa [#allocation10], 1
    %5548 = vsyncpa [#allocation13], 1
    %5549 = vsyncpa [#allocation5], 1

</llo_original>
